<compile_context>
chip_gen: v6e
topology: v6e:2x2x1
jax: 0.10.0
libtpu: 0.0.40
codegen_flags: <defaults>
</compile_context>

<pallas_src>
import functools
import warnings

import jax
import jax.numpy as jnp
from jax.experimental import pallas as pl
from jax.experimental.pallas import tpu as pltpu


ROWS_PER_STEP = 32                     # gather group size (multiple of 8)
SMALL_TABLE_BYTES = 4 * 1024 * 1024    # below this, plain bulk gather wins


# ---------------------------------------------------------------------------
# Gather kernel: out[g*R + r, :] = emb[ids[g*R + r], :]
# HBM-resident table, SMEM-prefetched ids, double-buffered row DMAs.
# ---------------------------------------------------------------------------
def _gather_rows_kernel(ids_ref, emb_hbm, out_ref, row_buf, sems, *,
                        rows_per_step, num_rows):
    # ids_ref : SMEM (P,) int32            gather indices (overrides folded in)
    # emb_hbm : HBM  (V, D)                embedding table, never staged wholesale
    # out_ref : VMEM (rows_per_step, D)    pipelined output block
    # row_buf : VMEM (2, rows_per_step, D) double-buffered gather target
    # sems    : DMA semaphores (2, rows_per_step)
    g = pl.program_id(0)
    n = pl.num_programs(0)
    slot = g & 1

    def row_copy(group, buf_slot, r):
        # Tail rows of the last group clamp to the last valid id: a handful of
        # redundant row DMAs, but start/wait descriptors stay identical and no
        # per-row branches are needed.
        i = jnp.minimum(group * rows_per_step + r, num_rows - 1)
        tok = ids_ref[i]
        return pltpu.make_async_copy(
            emb_hbm.at[pl.ds(tok, 1), :],
            row_buf.at[buf_slot, pl.ds(r, 1), :],
            sems.at[buf_slot, r],
        )

    # Prime the pipeline: the first grid step issues its own group's DMAs.
    @pl.when(g == 0)
    def _():
        for r in range(rows_per_step):
            row_copy(0, 0, r).start()

    # Prefetch the NEXT group into the other slot before waiting on this one,
    # so its HBM round trip is hidden behind this group's wait + store.
    @pl.when(g + 1 < n)
    def _():
        for r in range(rows_per_step):
            row_copy(g + 1, 1 - slot, r).start()

    # Wait for this group's rows.  All SMEM id reads for the wait descriptors
    # are issued before the first .wait() (wait breaks SMEM sst->sld
    # forwarding), and each descriptor matches its .start() exactly.
    waits = [row_copy(g, slot, r) for r in range(rows_per_step)]
    for cp in waits:
        cp.wait()

    # One sublane-dense (rows_per_step, D) store; the output writeback DMA is
    # pipelined by the BlockSpec while the next group's gathers are in flight.
    out_ref[...] = row_buf[slot]


def gather_prompt_rows(embedding_table, row_ids, *,
                       rows_per_step=ROWS_PER_STEP, force_kernel=False):
    """out[i, :] = embedding_table[row_ids[i], :] with the table kept in HBM."""
    V, D = embedding_table.shape
    P = int(row_ids.shape[0])
    itemsize = jnp.dtype(embedding_table.dtype).itemsize

    # TPU DMA has no runtime OOB check: out-of-range ids are clamped, i.e.
    # silently redirected to valid rows rather than raising (documented).
    ids = jnp.clip(row_ids.astype(jnp.int32), 0, V - 1)

    # Small-table fast path: one bulk gather beats per-row DMAs + per-step grid
    # overhead when the whole table is only a few MiB.
    if not force_kernel and V * D * itemsize <= SMALL_TABLE_BYTES:
        return jnp.take(embedding_table, ids, axis=0)

    # Effective group size: sublane-dense, capped so the ~4 live (R, D) buffers
    # (double-buffered output block + double-buffered row scratch) stay well
    # under the v7x scoped-VMEM budget (32 MiB default of 64 MiB physical).
    max_rows = max(8, (8 * 1024 * 1024) // (4 * D * itemsize))
    R = max(8, (min(rows_per_step, max_rows) // 8) * 8)
    if P <= R:
        R = P  # single block equal to the full first dim (always layout-legal)
    num_groups = pl.cdiv(P, R)

    kernel = functools.partial(_gather_rows_kernel, rows_per_step=R, num_rows=P)

    return pl.pallas_call(
        kernel,
        out_shape=jax.ShapeDtypeStruct((P, D), embedding_table.dtype),
        grid_spec=pltpu.PrefetchScalarGridSpec(
            num_scalar_prefetch=1,                         # ids -> SMEM
            grid=(num_groups,),
            in_specs=[pl.BlockSpec(memory_space=pl.ANY)],  # table stays in HBM
            out_specs=pl.BlockSpec((R, D), lambda g, ids: (g, 0)),
            scratch_shapes=[
                pltpu.VMEM((2, R, D), embedding_table.dtype),
                pltpu.SemaphoreType.DMA((2, R)),
            ],
        ),
        compiler_params=pltpu.CompilerParams(
            # Cross-step double buffering carries scratch state between grid
            # steps, so this axis must stay sequential.
            # TODO(synk): a v7x two-TensorCore split would need a leading core
            # axis via core_map with per-core pipeline priming.
            dimension_semantics=("arbitrary",),
            vmem_limit_bytes=32 * 1024 * 1024,
        ),
    )(ids, embedding_table)


# ---------------------------------------------------------------------------
# Python-side "module": parameter setup glue; hot path is the gather kernel.
# ---------------------------------------------------------------------------
class TensorPromptProviderPallas:
    def __init__(self, init="vocab"):
        if init not in ("random", "vocab"):
            raise ValueError("init must be 'random' or 'vocab'")
        self.init = init
        self.weights = None

    @property
    def is_initialized(self):
        return self.weights is not None

    def initialize(self, prompt_length, embedding_dim, embedding_table,
                   init_tokens, key):
        if self.is_initialized:
            return
        if prompt_length < 1:
            raise ValueError("prompt_length should be >= 1")
        V, D = embedding_table.shape
        assert D == embedding_dim
        if prompt_length > V:
            warnings.warn(
                f"prompt_length ({prompt_length}) cannot be greater than "
                f"vocab size ({V})")

        if init_tokens:
            idx = jnp.array(list(init_tokens.keys()), dtype=jnp.int32)
            tok = jnp.array(list(init_tokens.values()), dtype=jnp.int32)
        else:
            idx = tok = None

        if self.init == "random":
            # TODO(synk): random init is pure parameter setup; kept in plain
            # JAX (could also be a pltpu.stateful_normal kernel).
            weights = jax.random.normal(key, (prompt_length, embedding_dim),
                                        dtype=embedding_table.dtype)
            if idx is not None:
                weights = weights.at[idx].set(embedding_table[tok])
        else:  # "vocab"
            perm = jax.random.permutation(key, V)[:prompt_length].astype(jnp.int32)
            if idx is not None:
                # Fold the override scatter into the gather indices: no extra
                # kernel pass, no write-after-write on the output.
                perm = perm.at[idx].set(tok)
            weights = gather_prompt_rows(embedding_table, perm)

        self.weights = weights

    def __call__(self):
        # forward() returns the stored (P, D) prompt tensor; an identity Pallas
        # copy here would only add an HBM round trip and block fusion.
        return self.weights


# ---------------------------------------------------------------------------
if __name__ == "__main__":
    key = jax.random.PRNGKey(0)
    k_emb, k_init, k_big, k_ids = jax.random.split(key, 4)

    # --- 1) Module semantics at small shapes (fast-path dispatch) -----------
    vocab_size, embedding_dim, prompt_length = 64, 128, 10
    init_tokens = {0: 5, 3: 7}   # prompt row -> vocab token id
    embedding_table = jax.random.normal(
        k_emb, (vocab_size, embedding_dim), dtype=jnp.float32)

    provider = TensorPromptProviderPallas(init="vocab")
    provider.initialize(prompt_length, embedding_dim, embedding_table,
                        init_tokens, k_init)
    out = jax.block_until_ready(provider())

    perm = jax.random.permutation(k_init, vocab_size)[:prompt_length].astype(jnp.int32)
    idx = jnp.array(list(init_tokens.keys()), dtype=jnp.int32)
    tok = jnp.array(list(init_tokens.values()), dtype=jnp.int32)
    ref = embedding_table[perm.at[idx].set(tok)]
    assert out.shape == (prompt_length, embedding_dim)
    assert out.dtype == jnp.float32
    assert jnp.array_equal(out, ref)

    # --- 2) Pallas gather kernel: partial trailing block (P=40 > R=32) ------
    big_table = jax.random.normal(k_big, (512, 256), dtype=jnp.float32)
    ids40 = jax.random.randint(k_ids, (40,), 0, 512, dtype=jnp.int32)
    got40 = jax.block_until_ready(
        gather_prompt_rows(big_table, ids40, force_kernel=True))
    assert got40.shape == (40, 256)
    assert jnp.array_equal(got40, big_table[ids40])

    # --- 3) Pallas gather kernel: single short block (P=10 < R) -------------
    ids10 = ids40[:10]
    got10 = jax.block_until_ready(
        gather_prompt_rows(big_table, ids10, force_kernel=True))
    assert got10.shape == (10, 256)
    assert jnp.array_equal(got10, big_table[ids10])

    print("KERNEL_OK")
</pallas_src>

<mosaic_0001>
module attributes {stable_mosaic.version = 11 : i64} {
  func.func @_gather_rows_kernel(%arg0: i32, %arg1: memref<40xi32, #tpu.memory_space<smem>>, %arg2: memref<512x256xf32, #tpu.memory_space<any>>, %arg3: memref<32x256xf32, #tpu.memory_space<vmem>>, %arg4: memref<2x32x256xf32, #tpu.memory_space<vmem>>, %arg5: memref<2x32x!tpu.dma_semaphore, #tpu.memory_space<semaphore_mem>>) attributes {dimension_semantics = [#tpu.dimension_semantics<arbitrary>], iteration_bounds = array<i64: 2>, scalar_prefetch = 1 : i64, scratch_operands = 2 : i64, tpu.core_type = #tpu.core_type<tc>, window_params = [{}, {transform_indices = @transform_1, window_bounds = array<i64: 32, 256>}]} {
    %c1_i32 = arith.constant 1 : i32
    %0 = arith.andi %arg0, %c1_i32 : i32
    %c0_i32 = arith.constant 0 : i32
    %1 = arith.cmpi eq, %arg0, %c0_i32 : i32
    %2 = arith.extui %1 : i1 to i32
    %c0_i32_0 = arith.constant 0 : i32
    %3 = arith.cmpi ne, %2, %c0_i32_0 : i32
    scf.if %3 {
      %c0_i32_199 = arith.constant 0 : i32
      %c39_i32_200 = arith.constant 39 : i32
      %332 = arith.minsi %c0_i32_199, %c39_i32_200 : i32
      %333 = arith.index_cast %332 : i32 to index
      %334 = memref.load %arg1[%333] : memref<40xi32, #tpu.memory_space<smem>>
      %c0_i32_201 = arith.constant 0 : i32
      %c0_i32_202 = arith.constant 0 : i32
      %c0_i32_203 = arith.constant 0 : i32
      %c0_i32_204 = arith.constant 0 : i32
      %335 = tpu.memref_slice %arg2[%334, %c0_i32_204] : memref<512x256xf32, #tpu.memory_space<any>> -> memref<1x256xf32, #tpu.memory_space<any>>
      %c0_i32_205 = arith.constant 0 : i32
      %c0_i32_206 = arith.constant 0 : i32
      %336 = tpu.memref_slice %arg4[%c0_i32_201, %c0_i32_205, %c0_i32_206] : memref<2x32x256xf32, #tpu.memory_space<vmem>> -> memref<1x1x256xf32, #tpu.memory_space<vmem>>
      %337 = tpu.memref_squeeze %336 : memref<1x1x256xf32, #tpu.memory_space<vmem>> -> memref<1x256xf32, #tpu.memory_space<vmem>>
      %338 = tpu.memref_slice %arg5[%c0_i32_202, %c0_i32_203] : memref<2x32x!tpu.dma_semaphore, #tpu.memory_space<semaphore_mem>> -> memref<1x1x!tpu.dma_semaphore, #tpu.memory_space<semaphore_mem>>
      %339 = tpu.memref_squeeze %338 : memref<1x1x!tpu.dma_semaphore, #tpu.memory_space<semaphore_mem>> -> memref<!tpu.dma_semaphore, #tpu.memory_space<semaphore_mem>>
      tpu.enqueue_dma source(%335 : memref<1x256xf32, #tpu.memory_space<any>>) target(%337 : memref<1x256xf32, #tpu.memory_space<vmem>>) target_semaphore(%339 : memref<!tpu.dma_semaphore, #tpu.memory_space<semaphore_mem>>)
      %c1_i32_207 = arith.constant 1 : i32
      %c39_i32_208 = arith.constant 39 : i32
      %340 = arith.minsi %c1_i32_207, %c39_i32_208 : i32
      %341 = arith.index_cast %340 : i32 to index
      %342 = memref.load %arg1[%341] : memref<40xi32, #tpu.memory_space<smem>>
      %c0_i32_209 = arith.constant 0 : i32
      %c0_i32_210 = arith.constant 0 : i32
      %c1_i32_211 = arith.constant 1 : i32
      %c0_i32_212 = arith.constant 0 : i32
      %343 = tpu.memref_slice %arg2[%342, %c0_i32_212] : memref<512x256xf32, #tpu.memory_space<any>> -> memref<1x256xf32, #tpu.memory_space<any>>
      %c1_i32_213 = arith.constant 1 : i32
      %c0_i32_214 = arith.constant 0 : i32
      %344 = tpu.memref_slice %arg4[%c0_i32_209, %c1_i32_213, %c0_i32_214] : memref<2x32x256xf32, #tpu.memory_space<vmem>> -> memref<1x1x256xf32, #tpu.memory_space<vmem>>
      %345 = tpu.memref_squeeze %344 : memref<1x1x256xf32, #tpu.memory_space<vmem>> -> memref<1x256xf32, #tpu.memory_space<vmem>>
      %346 = tpu.memref_slice %arg5[%c0_i32_210, %c1_i32_211] : memref<2x32x!tpu.dma_semaphore, #tpu.memory_space<semaphore_mem>> -> memref<1x1x!tpu.dma_semaphore, #tpu.memory_space<semaphore_mem>>
      %347 = tpu.memref_squeeze %346 : memref<1x1x!tpu.dma_semaphore, #tpu.memory_space<semaphore_mem>> -> memref<!tpu.dma_semaphore, #tpu.memory_space<semaphore_mem>>
      tpu.enqueue_dma source(%343 : memref<1x256xf32, #tpu.memory_space<any>>) target(%345 : memref<1x256xf32, #tpu.memory_space<vmem>>) target_semaphore(%347 : memref<!tpu.dma_semaphore, #tpu.memory_space<semaphore_mem>>)
      %c2_i32_215 = arith.constant 2 : i32
      %c39_i32_216 = arith.constant 39 : i32
      %348 = arith.minsi %c2_i32_215, %c39_i32_216 : i32
      %349 = arith.index_cast %348 : i32 to index
      %350 = memref.load %arg1[%349] : memref<40xi32, #tpu.memory_space<smem>>
      %c0_i32_217 = arith.constant 0 : i32
      %c0_i32_218 = arith.constant 0 : i32
      %c2_i32_219 = arith.constant 2 : i32
      %c0_i32_220 = arith.constant 0 : i32
      %351 = tpu.memref_slice %arg2[%350, %c0_i32_220] : memref<512x256xf32, #tpu.memory_space<any>> -> memref<1x256xf32, #tpu.memory_space<any>>
      %c2_i32_221 = arith.constant 2 : i32
      %c0_i32_222 = arith.constant 0 : i32
      %352 = tpu.memref_slice %arg4[%c0_i32_217, %c2_i32_221, %c0_i32_222] : memref<2x32x256xf32, #tpu.memory_space<vmem>> -> memref<1x1x256xf32, #tpu.memory_space<vmem>>
      %353 = tpu.memref_squeeze %352 : memref<1x1x256xf32, #tpu.memory_space<vmem>> -> memref<1x256xf32, #tpu.memory_space<vmem>>
      %354 = tpu.memref_slice %arg5[%c0_i32_218, %c2_i32_219] : memref<2x32x!tpu.dma_semaphore, #tpu.memory_space<semaphore_mem>> -> memref<1x1x!tpu.dma_semaphore, #tpu.memory_space<semaphore_mem>>
      %355 = tpu.memref_squeeze %354 : memref<1x1x!tpu.dma_semaphore, #tpu.memory_space<semaphore_mem>> -> memref<!tpu.dma_semaphore, #tpu.memory_space<semaphore_mem>>
      tpu.enqueue_dma source(%351 : memref<1x256xf32, #tpu.memory_space<any>>) target(%353 : memref<1x256xf32, #tpu.memory_space<vmem>>) target_semaphore(%355 : memref<!tpu.dma_semaphore, #tpu.memory_space<semaphore_mem>>)
      %c3_i32_223 = arith.constant 3 : i32
      %c39_i32_224 = arith.constant 39 : i32
      %356 = arith.minsi %c3_i32_223, %c39_i32_224 : i32
      %357 = arith.index_cast %356 : i32 to index
      %358 = memref.load %arg1[%357] : memref<40xi32, #tpu.memory_space<smem>>
      %c0_i32_225 = arith.constant 0 : i32
      %c0_i32_226 = arith.constant 0 : i32
      %c3_i32_227 = arith.constant 3 : i32
      %c0_i32_228 = arith.constant 0 : i32
      %359 = tpu.memref_slice %arg2[%358, %c0_i32_228] : memref<512x256xf32, #tpu.memory_space<any>> -> memref<1x256xf32, #tpu.memory_space<any>>
      %c3_i32_229 = arith.constant 3 : i32
      %c0_i32_230 = arith.constant 0 : i32
      %360 = tpu.memref_slice %arg4[%c0_i32_225, %c3_i32_229, %c0_i32_230] : memref<2x32x256xf32, #tpu.memory_space<vmem>> -> memref<1x1x256xf32, #tpu.memory_space<vmem>>
      %361 = tpu.memref_squeeze %360 : memref<1x1x256xf32, #tpu.memory_space<vmem>> -> memref<1x256xf32, #tpu.memory_space<vmem>>
      %362 = tpu.memref_slice %arg5[%c0_i32_226, %c3_i32_227] : memref<2x32x!tpu.dma_semaphore, #tpu.memory_space<semaphore_mem>> -> memref<1x1x!tpu.dma_semaphore, #tpu.memory_space<semaphore_mem>>
      %363 = tpu.memref_squeeze %362 : memref<1x1x!tpu.dma_semaphore, #tpu.memory_space<semaphore_mem>> -> memref<!tpu.dma_semaphore, #tpu.memory_space<semaphore_mem>>
      tpu.enqueue_dma source(%359 : memref<1x256xf32, #tpu.memory_space<any>>) target(%361 : memref<1x256xf32, #tpu.memory_space<vmem>>) target_semaphore(%363 : memref<!tpu.dma_semaphore, #tpu.memory_space<semaphore_mem>>)
      %c4_i32_231 = arith.constant 4 : i32
      %c39_i32_232 = arith.constant 39 : i32
      %364 = arith.minsi %c4_i32_231, %c39_i32_232 : i32
      %365 = arith.index_cast %364 : i32 to index
      %366 = memref.load %arg1[%365] : memref<40xi32, #tpu.memory_space<smem>>
      %c0_i32_233 = arith.constant 0 : i32
      %c0_i32_234 = arith.constant 0 : i32
      %c4_i32_235 = arith.constant 4 : i32
      %c0_i32_236 = arith.constant 0 : i32
      %367 = tpu.memref_slice %arg2[%366, %c0_i32_236] : memref<512x256xf32, #tpu.memory_space<any>> -> memref<1x256xf32, #tpu.memory_space<any>>
      %c4_i32_237 = arith.constant 4 : i32
      %c0_i32_238 = arith.constant 0 : i32
      %368 = tpu.memref_slice %arg4[%c0_i32_233, %c4_i32_237, %c0_i32_238] : memref<2x32x256xf32, #tpu.memory_space<vmem>> -> memref<1x1x256xf32, #tpu.memory_space<vmem>>
      %369 = tpu.memref_squeeze %368 : memref<1x1x256xf32, #tpu.memory_space<vmem>> -> memref<1x256xf32, #tpu.memory_space<vmem>>
      %370 = tpu.memref_slice %arg5[%c0_i32_234, %c4_i32_235] : memref<2x32x!tpu.dma_semaphore, #tpu.memory_space<semaphore_mem>> -> memref<1x1x!tpu.dma_semaphore, #tpu.memory_space<semaphore_mem>>
      %371 = tpu.memref_squeeze %370 : memref<1x1x!tpu.dma_semaphore, #tpu.memory_space<semaphore_mem>> -> memref<!tpu.dma_semaphore, #tpu.memory_space<semaphore_mem>>
      tpu.enqueue_dma source(%367 : memref<1x256xf32, #tpu.memory_space<any>>) target(%369 : memref<1x256xf32, #tpu.memory_space<vmem>>) target_semaphore(%371 : memref<!tpu.dma_semaphore, #tpu.memory_space<semaphore_mem>>)
      %c5_i32_239 = arith.constant 5 : i32
      %c39_i32_240 = arith.constant 39 : i32
      %372 = arith.minsi %c5_i32_239, %c39_i32_240 : i32
      %373 = arith.index_cast %372 : i32 to index
      %374 = memref.load %arg1[%373] : memref<40xi32, #tpu.memory_space<smem>>
      %c0_i32_241 = arith.constant 0 : i32
      %c0_i32_242 = arith.constant 0 : i32
      %c5_i32_243 = arith.constant 5 : i32
      %c0_i32_244 = arith.constant 0 : i32
      %375 = tpu.memref_slice %arg2[%374, %c0_i32_244] : memref<512x256xf32, #tpu.memory_space<any>> -> memref<1x256xf32, #tpu.memory_space<any>>
      %c5_i32_245 = arith.constant 5 : i32
      %c0_i32_246 = arith.constant 0 : i32
      %376 = tpu.memref_slice %arg4[%c0_i32_241, %c5_i32_245, %c0_i32_246] : memref<2x32x256xf32, #tpu.memory_space<vmem>> -> memref<1x1x256xf32, #tpu.memory_space<vmem>>
      %377 = tpu.memref_squeeze %376 : memref<1x1x256xf32, #tpu.memory_space<vmem>> -> memref<1x256xf32, #tpu.memory_space<vmem>>
      %378 = tpu.memref_slice %arg5[%c0_i32_242, %c5_i32_243] : memref<2x32x!tpu.dma_semaphore, #tpu.memory_space<semaphore_mem>> -> memref<1x1x!tpu.dma_semaphore, #tpu.memory_space<semaphore_mem>>
      %379 = tpu.memref_squeeze %378 : memref<1x1x!tpu.dma_semaphore, #tpu.memory_space<semaphore_mem>> -> memref<!tpu.dma_semaphore, #tpu.memory_space<semaphore_mem>>
      tpu.enqueue_dma source(%375 : memref<1x256xf32, #tpu.memory_space<any>>) target(%377 : memref<1x256xf32, #tpu.memory_space<vmem>>) target_semaphore(%379 : memref<!tpu.dma_semaphore, #tpu.memory_space<semaphore_mem>>)
      %c6_i32_247 = arith.constant 6 : i32
      %c39_i32_248 = arith.constant 39 : i32
      %380 = arith.minsi %c6_i32_247, %c39_i32_248 : i32
      %381 = arith.index_cast %380 : i32 to index
      %382 = memref.load %arg1[%381] : memref<40xi32, #tpu.memory_space<smem>>
      %c0_i32_249 = arith.constant 0 : i32
      %c0_i32_250 = arith.constant 0 : i32
      %c6_i32_251 = arith.constant 6 : i32
      %c0_i32_252 = arith.constant 0 : i32
      %383 = tpu.memref_slice %arg2[%382, %c0_i32_252] : memref<512x256xf32, #tpu.memory_space<any>> -> memref<1x256xf32, #tpu.memory_space<any>>
      %c6_i32_253 = arith.constant 6 : i32
      %c0_i32_254 = arith.constant 0 : i32
      %384 = tpu.memref_slice %arg4[%c0_i32_249, %c6_i32_253, %c0_i32_254] : memref<2x32x256xf32, #tpu.memory_space<vmem>> -> memref<1x1x256xf32, #tpu.memory_space<vmem>>
      %385 = tpu.memref_squeeze %384 : memref<1x1x256xf32, #tpu.memory_space<vmem>> -> memref<1x256xf32, #tpu.memory_space<vmem>>
      %386 = tpu.memref_slice %arg5[%c0_i32_250, %c6_i32_251] : memref<2x32x!tpu.dma_semaphore, #tpu.memory_space<semaphore_mem>> -> memref<1x1x!tpu.dma_semaphore, #tpu.memory_space<semaphore_mem>>
      %387 = tpu.memref_squeeze %386 : memref<1x1x!tpu.dma_semaphore, #tpu.memory_space<semaphore_mem>> -> memref<!tpu.dma_semaphore, #tpu.memory_space<semaphore_mem>>
      tpu.enqueue_dma source(%383 : memref<1x256xf32, #tpu.memory_space<any>>) target(%385 : memref<1x256xf32, #tpu.memory_space<vmem>>) target_semaphore(%387 : memref<!tpu.dma_semaphore, #tpu.memory_space<semaphore_mem>>)
      %c7_i32_255 = arith.constant 7 : i32
      %c39_i32_256 = arith.constant 39 : i32
      %388 = arith.minsi %c7_i32_255, %c39_i32_256 : i32
      %389 = arith.index_cast %388 : i32 to index
      %390 = memref.load %arg1[%389] : memref<40xi32, #tpu.memory_space<smem>>
      %c0_i32_257 = arith.constant 0 : i32
      %c0_i32_258 = arith.constant 0 : i32
      %c7_i32_259 = arith.constant 7 : i32
      %c0_i32_260 = arith.constant 0 : i32
      %391 = tpu.memref_slice %arg2[%390, %c0_i32_260] : memref<512x256xf32, #tpu.memory_space<any>> -> memref<1x256xf32, #tpu.memory_space<any>>
      %c7_i32_261 = arith.constant 7 : i32
      %c0_i32_262 = arith.constant 0 : i32
      %392 = tpu.memref_slice %arg4[%c0_i32_257, %c7_i32_261, %c0_i32_262] : memref<2x32x256xf32, #tpu.memory_space<vmem>> -> memref<1x1x256xf32, #tpu.memory_space<vmem>>
      %393 = tpu.memref_squeeze %392 : memref<1x1x256xf32, #tpu.memory_space<vmem>> -> memref<1x256xf32, #tpu.memory_space<vmem>>
      %394 = tpu.memref_slice %arg5[%c0_i32_258, %c7_i32_259] : memref<2x32x!tpu.dma_semaphore, #tpu.memory_space<semaphore_mem>> -> memref<1x1x!tpu.dma_semaphore, #tpu.memory_space<semaphore_mem>>
      %395 = tpu.memref_squeeze %394 : memref<1x1x!tpu.dma_semaphore, #tpu.memory_space<semaphore_mem>> -> memref<!tpu.dma_semaphore, #tpu.memory_space<semaphore_mem>>
      tpu.enqueue_dma source(%391 : memref<1x256xf32, #tpu.memory_space<any>>) target(%393 : memref<1x256xf32, #tpu.memory_space<vmem>>) target_semaphore(%395 : memref<!tpu.dma_semaphore, #tpu.memory_space<semaphore_mem>>)
      %c8_i32_263 = arith.constant 8 : i32
      %c39_i32_264 = arith.constant 39 : i32
      %396 = arith.minsi %c8_i32_263, %c39_i32_264 : i32
      %397 = arith.index_cast %396 : i32 to index
      %398 = memref.load %arg1[%397] : memref<40xi32, #tpu.memory_space<smem>>
      %c0_i32_265 = arith.constant 0 : i32
      %c0_i32_266 = arith.constant 0 : i32
      %c8_i32_267 = arith.constant 8 : i32
      %c0_i32_268 = arith.constant 0 : i32
      %399 = tpu.memref_slice %arg2[%398, %c0_i32_268] : memref<512x256xf32, #tpu.memory_space<any>> -> memref<1x256xf32, #tpu.memory_space<any>>
      %c8_i32_269 = arith.constant 8 : i32
      %c0_i32_270 = arith.constant 0 : i32
      %400 = tpu.memref_slice %arg4[%c0_i32_265, %c8_i32_269, %c0_i32_270] : memref<2x32x256xf32, #tpu.memory_space<vmem>> -> memref<1x1x256xf32, #tpu.memory_space<vmem>>
      %401 = tpu.memref_squeeze %400 : memref<1x1x256xf32, #tpu.memory_space<vmem>> -> memref<1x256xf32, #tpu.memory_space<vmem>>
      %402 = tpu.memref_slice %arg5[%c0_i32_266, %c8_i32_267] : memref<2x32x!tpu.dma_semaphore, #tpu.memory_space<semaphore_mem>> -> memref<1x1x!tpu.dma_semaphore, #tpu.memory_space<semaphore_mem>>
      %403 = tpu.memref_squeeze %402 : memref<1x1x!tpu.dma_semaphore, #tpu.memory_space<semaphore_mem>> -> memref<!tpu.dma_semaphore, #tpu.memory_space<semaphore_mem>>
      tpu.enqueue_dma source(%399 : memref<1x256xf32, #tpu.memory_space<any>>) target(%401 : memref<1x256xf32, #tpu.memory_space<vmem>>) target_semaphore(%403 : memref<!tpu.dma_semaphore, #tpu.memory_space<semaphore_mem>>)
      %c9_i32_271 = arith.constant 9 : i32
      %c39_i32_272 = arith.constant 39 : i32
      %404 = arith.minsi %c9_i32_271, %c39_i32_272 : i32
      %405 = arith.index_cast %404 : i32 to index
      %406 = memref.load %arg1[%405] : memref<40xi32, #tpu.memory_space<smem>>
      %c0_i32_273 = arith.constant 0 : i32
      %c0_i32_274 = arith.constant 0 : i32
      %c9_i32_275 = arith.constant 9 : i32
      %c0_i32_276 = arith.constant 0 : i32
      %407 = tpu.memref_slice %arg2[%406, %c0_i32_276] : memref<512x256xf32, #tpu.memory_space<any>> -> memref<1x256xf32, #tpu.memory_space<any>>
      %c9_i32_277 = arith.constant 9 : i32
      %c0_i32_278 = arith.constant 0 : i32
      %408 = tpu.memref_slice %arg4[%c0_i32_273, %c9_i32_277, %c0_i32_278] : memref<2x32x256xf32, #tpu.memory_space<vmem>> -> memref<1x1x256xf32, #tpu.memory_space<vmem>>
      %409 = tpu.memref_squeeze %408 : memref<1x1x256xf32, #tpu.memory_space<vmem>> -> memref<1x256xf32, #tpu.memory_space<vmem>>
      %410 = tpu.memref_slice %arg5[%c0_i32_274, %c9_i32_275] : memref<2x32x!tpu.dma_semaphore, #tpu.memory_space<semaphore_mem>> -> memref<1x1x!tpu.dma_semaphore, #tpu.memory_space<semaphore_mem>>
      %411 = tpu.memref_squeeze %410 : memref<1x1x!tpu.dma_semaphore, #tpu.memory_space<semaphore_mem>> -> memref<!tpu.dma_semaphore, #tpu.memory_space<semaphore_mem>>
      tpu.enqueue_dma source(%407 : memref<1x256xf32, #tpu.memory_space<any>>) target(%409 : memref<1x256xf32, #tpu.memory_space<vmem>>) target_semaphore(%411 : memref<!tpu.dma_semaphore, #tpu.memory_space<semaphore_mem>>)
      %c10_i32_279 = arith.constant 10 : i32
      %c39_i32_280 = arith.constant 39 : i32
      %412 = arith.minsi %c10_i32_279, %c39_i32_280 : i32
      %413 = arith.index_cast %412 : i32 to index
      %414 = memref.load %arg1[%413] : memref<40xi32, #tpu.memory_space<smem>>
      %c0_i32_281 = arith.constant 0 : i32
      %c0_i32_282 = arith.constant 0 : i32
      %c10_i32_283 = arith.constant 10 : i32
      %c0_i32_284 = arith.constant 0 : i32
      %415 = tpu.memref_slice %arg2[%414, %c0_i32_284] : memref<512x256xf32, #tpu.memory_space<any>> -> memref<1x256xf32, #tpu.memory_space<any>>
      %c10_i32_285 = arith.constant 10 : i32
      %c0_i32_286 = arith.constant 0 : i32
      %416 = tpu.memref_slice %arg4[%c0_i32_281, %c10_i32_285, %c0_i32_286] : memref<2x32x256xf32, #tpu.memory_space<vmem>> -> memref<1x1x256xf32, #tpu.memory_space<vmem>>
      %417 = tpu.memref_squeeze %416 : memref<1x1x256xf32, #tpu.memory_space<vmem>> -> memref<1x256xf32, #tpu.memory_space<vmem>>
      %418 = tpu.memref_slice %arg5[%c0_i32_282, %c10_i32_283] : memref<2x32x!tpu.dma_semaphore, #tpu.memory_space<semaphore_mem>> -> memref<1x1x!tpu.dma_semaphore, #tpu.memory_space<semaphore_mem>>
      %419 = tpu.memref_squeeze %418 : memref<1x1x!tpu.dma_semaphore, #tpu.memory_space<semaphore_mem>> -> memref<!tpu.dma_semaphore, #tpu.memory_space<semaphore_mem>>
      tpu.enqueue_dma source(%415 : memref<1x256xf32, #tpu.memory_space<any>>) target(%417 : memref<1x256xf32, #tpu.memory_space<vmem>>) target_semaphore(%419 : memref<!tpu.dma_semaphore, #tpu.memory_space<semaphore_mem>>)
      %c11_i32_287 = arith.constant 11 : i32
      %c39_i32_288 = arith.constant 39 : i32
      %420 = arith.minsi %c11_i32_287, %c39_i32_288 : i32
      %421 = arith.index_cast %420 : i32 to index
      %422 = memref.load %arg1[%421] : memref<40xi32, #tpu.memory_space<smem>>
      %c0_i32_289 = arith.constant 0 : i32
      %c0_i32_290 = arith.constant 0 : i32
      %c11_i32_291 = arith.constant 11 : i32
      %c0_i32_292 = arith.constant 0 : i32
      %423 = tpu.memref_slice %arg2[%422, %c0_i32_292] : memref<512x256xf32, #tpu.memory_space<any>> -> memref<1x256xf32, #tpu.memory_space<any>>
      %c11_i32_293 = arith.constant 11 : i32
      %c0_i32_294 = arith.constant 0 : i32
      %424 = tpu.memref_slice %arg4[%c0_i32_289, %c11_i32_293, %c0_i32_294] : memref<2x32x256xf32, #tpu.memory_space<vmem>> -> memref<1x1x256xf32, #tpu.memory_space<vmem>>
      %425 = tpu.memref_squeeze %424 : memref<1x1x256xf32, #tpu.memory_space<vmem>> -> memref<1x256xf32, #tpu.memory_space<vmem>>
      %426 = tpu.memref_slice %arg5[%c0_i32_290, %c11_i32_291] : memref<2x32x!tpu.dma_semaphore, #tpu.memory_space<semaphore_mem>> -> memref<1x1x!tpu.dma_semaphore, #tpu.memory_space<semaphore_mem>>
      %427 = tpu.memref_squeeze %426 : memref<1x1x!tpu.dma_semaphore, #tpu.memory_space<semaphore_mem>> -> memref<!tpu.dma_semaphore, #tpu.memory_space<semaphore_mem>>
      tpu.enqueue_dma source(%423 : memref<1x256xf32, #tpu.memory_space<any>>) target(%425 : memref<1x256xf32, #tpu.memory_space<vmem>>) target_semaphore(%427 : memref<!tpu.dma_semaphore, #tpu.memory_space<semaphore_mem>>)
      %c12_i32_295 = arith.constant 12 : i32
      %c39_i32_296 = arith.constant 39 : i32
      %428 = arith.minsi %c12_i32_295, %c39_i32_296 : i32
      %429 = arith.index_cast %428 : i32 to index
      %430 = memref.load %arg1[%429] : memref<40xi32, #tpu.memory_space<smem>>
      %c0_i32_297 = arith.constant 0 : i32
      %c0_i32_298 = arith.constant 0 : i32
      %c12_i32_299 = arith.constant 12 : i32
      %c0_i32_300 = arith.constant 0 : i32
      %431 = tpu.memref_slice %arg2[%430, %c0_i32_300] : memref<512x256xf32, #tpu.memory_space<any>> -> memref<1x256xf32, #tpu.memory_space<any>>
      %c12_i32_301 = arith.constant 12 : i32
      %c0_i32_302 = arith.constant 0 : i32
      %432 = tpu.memref_slice %arg4[%c0_i32_297, %c12_i32_301, %c0_i32_302] : memref<2x32x256xf32, #tpu.memory_space<vmem>> -> memref<1x1x256xf32, #tpu.memory_space<vmem>>
      %433 = tpu.memref_squeeze %432 : memref<1x1x256xf32, #tpu.memory_space<vmem>> -> memref<1x256xf32, #tpu.memory_space<vmem>>
      %434 = tpu.memref_slice %arg5[%c0_i32_298, %c12_i32_299] : memref<2x32x!tpu.dma_semaphore, #tpu.memory_space<semaphore_mem>> -> memref<1x1x!tpu.dma_semaphore, #tpu.memory_space<semaphore_mem>>
      %435 = tpu.memref_squeeze %434 : memref<1x1x!tpu.dma_semaphore, #tpu.memory_space<semaphore_mem>> -> memref<!tpu.dma_semaphore, #tpu.memory_space<semaphore_mem>>
      tpu.enqueue_dma source(%431 : memref<1x256xf32, #tpu.memory_space<any>>) target(%433 : memref<1x256xf32, #tpu.memory_space<vmem>>) target_semaphore(%435 : memref<!tpu.dma_semaphore, #tpu.memory_space<semaphore_mem>>)
      %c13_i32_303 = arith.constant 13 : i32
      %c39_i32_304 = arith.constant 39 : i32
      %436 = arith.minsi %c13_i32_303, %c39_i32_304 : i32
      %437 = arith.index_cast %436 : i32 to index
      %438 = memref.load %arg1[%437] : memref<40xi32, #tpu.memory_space<smem>>
      %c0_i32_305 = arith.constant 0 : i32
      %c0_i32_306 = arith.constant 0 : i32
      %c13_i32_307 = arith.constant 13 : i32
      %c0_i32_308 = arith.constant 0 : i32
      %439 = tpu.memref_slice %arg2[%438, %c0_i32_308] : memref<512x256xf32, #tpu.memory_space<any>> -> memref<1x256xf32, #tpu.memory_space<any>>
      %c13_i32_309 = arith.constant 13 : i32
      %c0_i32_310 = arith.constant 0 : i32
      %440 = tpu.memref_slice %arg4[%c0_i32_305, %c13_i32_309, %c0_i32_310] : memref<2x32x256xf32, #tpu.memory_space<vmem>> -> memref<1x1x256xf32, #tpu.memory_space<vmem>>
      %441 = tpu.memref_squeeze %440 : memref<1x1x256xf32, #tpu.memory_space<vmem>> -> memref<1x256xf32, #tpu.memory_space<vmem>>
      %442 = tpu.memref_slice %arg5[%c0_i32_306, %c13_i32_307] : memref<2x32x!tpu.dma_semaphore, #tpu.memory_space<semaphore_mem>> -> memref<1x1x!tpu.dma_semaphore, #tpu.memory_space<semaphore_mem>>
      %443 = tpu.memref_squeeze %442 : memref<1x1x!tpu.dma_semaphore, #tpu.memory_space<semaphore_mem>> -> memref<!tpu.dma_semaphore, #tpu.memory_space<semaphore_mem>>
      tpu.enqueue_dma source(%439 : memref<1x256xf32, #tpu.memory_space<any>>) target(%441 : memref<1x256xf32, #tpu.memory_space<vmem>>) target_semaphore(%443 : memref<!tpu.dma_semaphore, #tpu.memory_space<semaphore_mem>>)
      %c14_i32_311 = arith.constant 14 : i32
      %c39_i32_312 = arith.constant 39 : i32
      %444 = arith.minsi %c14_i32_311, %c39_i32_312 : i32
      %445 = arith.index_cast %444 : i32 to index
      %446 = memref.load %arg1[%445] : memref<40xi32, #tpu.memory_space<smem>>
      %c0_i32_313 = arith.constant 0 : i32
      %c0_i32_314 = arith.constant 0 : i32
      %c14_i32_315 = arith.constant 14 : i32
      %c0_i32_316 = arith.constant 0 : i32
      %447 = tpu.memref_slice %arg2[%446, %c0_i32_316] : memref<512x256xf32, #tpu.memory_space<any>> -> memref<1x256xf32, #tpu.memory_space<any>>
      %c14_i32_317 = arith.constant 14 : i32
      %c0_i32_318 = arith.constant 0 : i32
      %448 = tpu.memref_slice %arg4[%c0_i32_313, %c14_i32_317, %c0_i32_318] : memref<2x32x256xf32, #tpu.memory_space<vmem>> -> memref<1x1x256xf32, #tpu.memory_space<vmem>>
      %449 = tpu.memref_squeeze %448 : memref<1x1x256xf32, #tpu.memory_space<vmem>> -> memref<1x256xf32, #tpu.memory_space<vmem>>
      %450 = tpu.memref_slice %arg5[%c0_i32_314, %c14_i32_315] : memref<2x32x!tpu.dma_semaphore, #tpu.memory_space<semaphore_mem>> -> memref<1x1x!tpu.dma_semaphore, #tpu.memory_space<semaphore_mem>>
      %451 = tpu.memref_squeeze %450 : memref<1x1x!tpu.dma_semaphore, #tpu.memory_space<semaphore_mem>> -> memref<!tpu.dma_semaphore, #tpu.memory_space<semaphore_mem>>
      tpu.enqueue_dma source(%447 : memref<1x256xf32, #tpu.memory_space<any>>) target(%449 : memref<1x256xf32, #tpu.memory_space<vmem>>) target_semaphore(%451 : memref<!tpu.dma_semaphore, #tpu.memory_space<semaphore_mem>>)
      %c15_i32_319 = arith.constant 15 : i32
      %c39_i32_320 = arith.constant 39 : i32
      %452 = arith.minsi %c15_i32_319, %c39_i32_320 : i32
      %453 = arith.index_cast %452 : i32 to index
      %454 = memref.load %arg1[%453] : memref<40xi32, #tpu.memory_space<smem>>
      %c0_i32_321 = arith.constant 0 : i32
      %c0_i32_322 = arith.constant 0 : i32
      %c15_i32_323 = arith.constant 15 : i32
      %c0_i32_324 = arith.constant 0 : i32
      %455 = tpu.memref_slice %arg2[%454, %c0_i32_324] : memref<512x256xf32, #tpu.memory_space<any>> -> memref<1x256xf32, #tpu.memory_space<any>>
      %c15_i32_325 = arith.constant 15 : i32
      %c0_i32_326 = arith.constant 0 : i32
      %456 = tpu.memref_slice %arg4[%c0_i32_321, %c15_i32_325, %c0_i32_326] : memref<2x32x256xf32, #tpu.memory_space<vmem>> -> memref<1x1x256xf32, #tpu.memory_space<vmem>>
      %457 = tpu.memref_squeeze %456 : memref<1x1x256xf32, #tpu.memory_space<vmem>> -> memref<1x256xf32, #tpu.memory_space<vmem>>
      %458 = tpu.memref_slice %arg5[%c0_i32_322, %c15_i32_323] : memref<2x32x!tpu.dma_semaphore, #tpu.memory_space<semaphore_mem>> -> memref<1x1x!tpu.dma_semaphore, #tpu.memory_space<semaphore_mem>>
      %459 = tpu.memref_squeeze %458 : memref<1x1x!tpu.dma_semaphore, #tpu.memory_space<semaphore_mem>> -> memref<!tpu.dma_semaphore, #tpu.memory_space<semaphore_mem>>
      tpu.enqueue_dma source(%455 : memref<1x256xf32, #tpu.memory_space<any>>) target(%457 : memref<1x256xf32, #tpu.memory_space<vmem>>) target_semaphore(%459 : memref<!tpu.dma_semaphore, #tpu.memory_space<semaphore_mem>>)
      %c16_i32_327 = arith.constant 16 : i32
      %c39_i32_328 = arith.constant 39 : i32
      %460 = arith.minsi %c16_i32_327, %c39_i32_328 : i32
      %461 = arith.index_cast %460 : i32 to index
      %462 = memref.load %arg1[%461] : memref<40xi32, #tpu.memory_space<smem>>
      %c0_i32_329 = arith.constant 0 : i32
      %c0_i32_330 = arith.constant 0 : i32
      %c16_i32_331 = arith.constant 16 : i32
      %c0_i32_332 = arith.constant 0 : i32
      %463 = tpu.memref_slice %arg2[%462, %c0_i32_332] : memref<512x256xf32, #tpu.memory_space<any>> -> memref<1x256xf32, #tpu.memory_space<any>>
      %c16_i32_333 = arith.constant 16 : i32
      %c0_i32_334 = arith.constant 0 : i32
      %464 = tpu.memref_slice %arg4[%c0_i32_329, %c16_i32_333, %c0_i32_334] : memref<2x32x256xf32, #tpu.memory_space<vmem>> -> memref<1x1x256xf32, #tpu.memory_space<vmem>>
      %465 = tpu.memref_squeeze %464 : memref<1x1x256xf32, #tpu.memory_space<vmem>> -> memref<1x256xf32, #tpu.memory_space<vmem>>
      %466 = tpu.memref_slice %arg5[%c0_i32_330, %c16_i32_331] : memref<2x32x!tpu.dma_semaphore, #tpu.memory_space<semaphore_mem>> -> memref<1x1x!tpu.dma_semaphore, #tpu.memory_space<semaphore_mem>>
      %467 = tpu.memref_squeeze %466 : memref<1x1x!tpu.dma_semaphore, #tpu.memory_space<semaphore_mem>> -> memref<!tpu.dma_semaphore, #tpu.memory_space<semaphore_mem>>
      tpu.enqueue_dma source(%463 : memref<1x256xf32, #tpu.memory_space<any>>) target(%465 : memref<1x256xf32, #tpu.memory_space<vmem>>) target_semaphore(%467 : memref<!tpu.dma_semaphore, #tpu.memory_space<semaphore_mem>>)
      %c17_i32_335 = arith.constant 17 : i32
      %c39_i32_336 = arith.constant 39 : i32
      %468 = arith.minsi %c17_i32_335, %c39_i32_336 : i32
      %469 = arith.index_cast %468 : i32 to index
      %470 = memref.load %arg1[%469] : memref<40xi32, #tpu.memory_space<smem>>
      %c0_i32_337 = arith.constant 0 : i32
      %c0_i32_338 = arith.constant 0 : i32
      %c17_i32_339 = arith.constant 17 : i32
      %c0_i32_340 = arith.constant 0 : i32
      %471 = tpu.memref_slice %arg2[%470, %c0_i32_340] : memref<512x256xf32, #tpu.memory_space<any>> -> memref<1x256xf32, #tpu.memory_space<any>>
      %c17_i32_341 = arith.constant 17 : i32
      %c0_i32_342 = arith.constant 0 : i32
      %472 = tpu.memref_slice %arg4[%c0_i32_337, %c17_i32_341, %c0_i32_342] : memref<2x32x256xf32, #tpu.memory_space<vmem>> -> memref<1x1x256xf32, #tpu.memory_space<vmem>>
      %473 = tpu.memref_squeeze %472 : memref<1x1x256xf32, #tpu.memory_space<vmem>> -> memref<1x256xf32, #tpu.memory_space<vmem>>
      %474 = tpu.memref_slice %arg5[%c0_i32_338, %c17_i32_339] : memref<2x32x!tpu.dma_semaphore, #tpu.memory_space<semaphore_mem>> -> memref<1x1x!tpu.dma_semaphore, #tpu.memory_space<semaphore_mem>>
      %475 = tpu.memref_squeeze %474 : memref<1x1x!tpu.dma_semaphore, #tpu.memory_space<semaphore_mem>> -> memref<!tpu.dma_semaphore, #tpu.memory_space<semaphore_mem>>
      tpu.enqueue_dma source(%471 : memref<1x256xf32, #tpu.memory_space<any>>) target(%473 : memref<1x256xf32, #tpu.memory_space<vmem>>) target_semaphore(%475 : memref<!tpu.dma_semaphore, #tpu.memory_space<semaphore_mem>>)
      %c18_i32_343 = arith.constant 18 : i32
      %c39_i32_344 = arith.constant 39 : i32
      %476 = arith.minsi %c18_i32_343, %c39_i32_344 : i32
      %477 = arith.index_cast %476 : i32 to index
      %478 = memref.load %arg1[%477] : memref<40xi32, #tpu.memory_space<smem>>
      %c0_i32_345 = arith.constant 0 : i32
      %c0_i32_346 = arith.constant 0 : i32
      %c18_i32_347 = arith.constant 18 : i32
      %c0_i32_348 = arith.constant 0 : i32
      %479 = tpu.memref_slice %arg2[%478, %c0_i32_348] : memref<512x256xf32, #tpu.memory_space<any>> -> memref<1x256xf32, #tpu.memory_space<any>>
      %c18_i32_349 = arith.constant 18 : i32
      %c0_i32_350 = arith.constant 0 : i32
      %480 = tpu.memref_slice %arg4[%c0_i32_345, %c18_i32_349, %c0_i32_350] : memref<2x32x256xf32, #tpu.memory_space<vmem>> -> memref<1x1x256xf32, #tpu.memory_space<vmem>>
      %481 = tpu.memref_squeeze %480 : memref<1x1x256xf32, #tpu.memory_space<vmem>> -> memref<1x256xf32, #tpu.memory_space<vmem>>
      %482 = tpu.memref_slice %arg5[%c0_i32_346, %c18_i32_347] : memref<2x32x!tpu.dma_semaphore, #tpu.memory_space<semaphore_mem>> -> memref<1x1x!tpu.dma_semaphore, #tpu.memory_space<semaphore_mem>>
      %483 = tpu.memref_squeeze %482 : memref<1x1x!tpu.dma_semaphore, #tpu.memory_space<semaphore_mem>> -> memref<!tpu.dma_semaphore, #tpu.memory_space<semaphore_mem>>
      tpu.enqueue_dma source(%479 : memref<1x256xf32, #tpu.memory_space<any>>) target(%481 : memref<1x256xf32, #tpu.memory_space<vmem>>) target_semaphore(%483 : memref<!tpu.dma_semaphore, #tpu.memory_space<semaphore_mem>>)
      %c19_i32_351 = arith.constant 19 : i32
      %c39_i32_352 = arith.constant 39 : i32
      %484 = arith.minsi %c19_i32_351, %c39_i32_352 : i32
      %485 = arith.index_cast %484 : i32 to index
      %486 = memref.load %arg1[%485] : memref<40xi32, #tpu.memory_space<smem>>
      %c0_i32_353 = arith.constant 0 : i32
      %c0_i32_354 = arith.constant 0 : i32
      %c19_i32_355 = arith.constant 19 : i32
      %c0_i32_356 = arith.constant 0 : i32
      %487 = tpu.memref_slice %arg2[%486, %c0_i32_356] : memref<512x256xf32, #tpu.memory_space<any>> -> memref<1x256xf32, #tpu.memory_space<any>>
      %c19_i32_357 = arith.constant 19 : i32
      %c0_i32_358 = arith.constant 0 : i32
      %488 = tpu.memref_slice %arg4[%c0_i32_353, %c19_i32_357, %c0_i32_358] : memref<2x32x256xf32, #tpu.memory_space<vmem>> -> memref<1x1x256xf32, #tpu.memory_space<vmem>>
      %489 = tpu.memref_squeeze %488 : memref<1x1x256xf32, #tpu.memory_space<vmem>> -> memref<1x256xf32, #tpu.memory_space<vmem>>
      %490 = tpu.memref_slice %arg5[%c0_i32_354, %c19_i32_355] : memref<2x32x!tpu.dma_semaphore, #tpu.memory_space<semaphore_mem>> -> memref<1x1x!tpu.dma_semaphore, #tpu.memory_space<semaphore_mem>>
      %491 = tpu.memref_squeeze %490 : memref<1x1x!tpu.dma_semaphore, #tpu.memory_space<semaphore_mem>> -> memref<!tpu.dma_semaphore, #tpu.memory_space<semaphore_mem>>
      tpu.enqueue_dma source(%487 : memref<1x256xf32, #tpu.memory_space<any>>) target(%489 : memref<1x256xf32, #tpu.memory_space<vmem>>) target_semaphore(%491 : memref<!tpu.dma_semaphore, #tpu.memory_space<semaphore_mem>>)
      %c20_i32_359 = arith.constant 20 : i32
      %c39_i32_360 = arith.constant 39 : i32
      %492 = arith.minsi %c20_i32_359, %c39_i32_360 : i32
      %493 = arith.index_cast %492 : i32 to index
      %494 = memref.load %arg1[%493] : memref<40xi32, #tpu.memory_space<smem>>
      %c0_i32_361 = arith.constant 0 : i32
      %c0_i32_362 = arith.constant 0 : i32
      %c20_i32_363 = arith.constant 20 : i32
      %c0_i32_364 = arith.constant 0 : i32
      %495 = tpu.memref_slice %arg2[%494, %c0_i32_364] : memref<512x256xf32, #tpu.memory_space<any>> -> memref<1x256xf32, #tpu.memory_space<any>>
      %c20_i32_365 = arith.constant 20 : i32
      %c0_i32_366 = arith.constant 0 : i32
      %496 = tpu.memref_slice %arg4[%c0_i32_361, %c20_i32_365, %c0_i32_366] : memref<2x32x256xf32, #tpu.memory_space<vmem>> -> memref<1x1x256xf32, #tpu.memory_space<vmem>>
      %497 = tpu.memref_squeeze %496 : memref<1x1x256xf32, #tpu.memory_space<vmem>> -> memref<1x256xf32, #tpu.memory_space<vmem>>
      %498 = tpu.memref_slice %arg5[%c0_i32_362, %c20_i32_363] : memref<2x32x!tpu.dma_semaphore, #tpu.memory_space<semaphore_mem>> -> memref<1x1x!tpu.dma_semaphore, #tpu.memory_space<semaphore_mem>>
      %499 = tpu.memref_squeeze %498 : memref<1x1x!tpu.dma_semaphore, #tpu.memory_space<semaphore_mem>> -> memref<!tpu.dma_semaphore, #tpu.memory_space<semaphore_mem>>
      tpu.enqueue_dma source(%495 : memref<1x256xf32, #tpu.memory_space<any>>) target(%497 : memref<1x256xf32, #tpu.memory_space<vmem>>) target_semaphore(%499 : memref<!tpu.dma_semaphore, #tpu.memory_space<semaphore_mem>>)
      %c21_i32_367 = arith.constant 21 : i32
      %c39_i32_368 = arith.constant 39 : i32
      %500 = arith.minsi %c21_i32_367, %c39_i32_368 : i32
      %501 = arith.index_cast %500 : i32 to index
      %502 = memref.load %arg1[%501] : memref<40xi32, #tpu.memory_space<smem>>
      %c0_i32_369 = arith.constant 0 : i32
      %c0_i32_370 = arith.constant 0 : i32
      %c21_i32_371 = arith.constant 21 : i32
      %c0_i32_372 = arith.constant 0 : i32
      %503 = tpu.memref_slice %arg2[%502, %c0_i32_372] : memref<512x256xf32, #tpu.memory_space<any>> -> memref<1x256xf32, #tpu.memory_space<any>>
      %c21_i32_373 = arith.constant 21 : i32
      %c0_i32_374 = arith.constant 0 : i32
      %504 = tpu.memref_slice %arg4[%c0_i32_369, %c21_i32_373, %c0_i32_374] : memref<2x32x256xf32, #tpu.memory_space<vmem>> -> memref<1x1x256xf32, #tpu.memory_space<vmem>>
      %505 = tpu.memref_squeeze %504 : memref<1x1x256xf32, #tpu.memory_space<vmem>> -> memref<1x256xf32, #tpu.memory_space<vmem>>
      %506 = tpu.memref_slice %arg5[%c0_i32_370, %c21_i32_371] : memref<2x32x!tpu.dma_semaphore, #tpu.memory_space<semaphore_mem>> -> memref<1x1x!tpu.dma_semaphore, #tpu.memory_space<semaphore_mem>>
      %507 = tpu.memref_squeeze %506 : memref<1x1x!tpu.dma_semaphore, #tpu.memory_space<semaphore_mem>> -> memref<!tpu.dma_semaphore, #tpu.memory_space<semaphore_mem>>
      tpu.enqueue_dma source(%503 : memref<1x256xf32, #tpu.memory_space<any>>) target(%505 : memref<1x256xf32, #tpu.memory_space<vmem>>) target_semaphore(%507 : memref<!tpu.dma_semaphore, #tpu.memory_space<semaphore_mem>>)
      %c22_i32_375 = arith.constant 22 : i32
      %c39_i32_376 = arith.constant 39 : i32
      %508 = arith.minsi %c22_i32_375, %c39_i32_376 : i32
      %509 = arith.index_cast %508 : i32 to index
      %510 = memref.load %arg1[%509] : memref<40xi32, #tpu.memory_space<smem>>
      %c0_i32_377 = arith.constant 0 : i32
      %c0_i32_378 = arith.constant 0 : i32
      %c22_i32_379 = arith.constant 22 : i32
      %c0_i32_380 = arith.constant 0 : i32
      %511 = tpu.memref_slice %arg2[%510, %c0_i32_380] : memref<512x256xf32, #tpu.memory_space<any>> -> memref<1x256xf32, #tpu.memory_space<any>>
      %c22_i32_381 = arith.constant 22 : i32
      %c0_i32_382 = arith.constant 0 : i32
      %512 = tpu.memref_slice %arg4[%c0_i32_377, %c22_i32_381, %c0_i32_382] : memref<2x32x256xf32, #tpu.memory_space<vmem>> -> memref<1x1x256xf32, #tpu.memory_space<vmem>>
      %513 = tpu.memref_squeeze %512 : memref<1x1x256xf32, #tpu.memory_space<vmem>> -> memref<1x256xf32, #tpu.memory_space<vmem>>
      %514 = tpu.memref_slice %arg5[%c0_i32_378, %c22_i32_379] : memref<2x32x!tpu.dma_semaphore, #tpu.memory_space<semaphore_mem>> -> memref<1x1x!tpu.dma_semaphore, #tpu.memory_space<semaphore_mem>>
      %515 = tpu.memref_squeeze %514 : memref<1x1x!tpu.dma_semaphore, #tpu.memory_space<semaphore_mem>> -> memref<!tpu.dma_semaphore, #tpu.memory_space<semaphore_mem>>
      tpu.enqueue_dma source(%511 : memref<1x256xf32, #tpu.memory_space<any>>) target(%513 : memref<1x256xf32, #tpu.memory_space<vmem>>) target_semaphore(%515 : memref<!tpu.dma_semaphore, #tpu.memory_space<semaphore_mem>>)
      %c23_i32_383 = arith.constant 23 : i32
      %c39_i32_384 = arith.constant 39 : i32
      %516 = arith.minsi %c23_i32_383, %c39_i32_384 : i32
      %517 = arith.index_cast %516 : i32 to index
      %518 = memref.load %arg1[%517] : memref<40xi32, #tpu.memory_space<smem>>
      %c0_i32_385 = arith.constant 0 : i32
      %c0_i32_386 = arith.constant 0 : i32
      %c23_i32_387 = arith.constant 23 : i32
      %c0_i32_388 = arith.constant 0 : i32
      %519 = tpu.memref_slice %arg2[%518, %c0_i32_388] : memref<512x256xf32, #tpu.memory_space<any>> -> memref<1x256xf32, #tpu.memory_space<any>>
      %c23_i32_389 = arith.constant 23 : i32
      %c0_i32_390 = arith.constant 0 : i32
      %520 = tpu.memref_slice %arg4[%c0_i32_385, %c23_i32_389, %c0_i32_390] : memref<2x32x256xf32, #tpu.memory_space<vmem>> -> memref<1x1x256xf32, #tpu.memory_space<vmem>>
      %521 = tpu.memref_squeeze %520 : memref<1x1x256xf32, #tpu.memory_space<vmem>> -> memref<1x256xf32, #tpu.memory_space<vmem>>
      %522 = tpu.memref_slice %arg5[%c0_i32_386, %c23_i32_387] : memref<2x32x!tpu.dma_semaphore, #tpu.memory_space<semaphore_mem>> -> memref<1x1x!tpu.dma_semaphore, #tpu.memory_space<semaphore_mem>>
      %523 = tpu.memref_squeeze %522 : memref<1x1x!tpu.dma_semaphore, #tpu.memory_space<semaphore_mem>> -> memref<!tpu.dma_semaphore, #tpu.memory_space<semaphore_mem>>
      tpu.enqueue_dma source(%519 : memref<1x256xf32, #tpu.memory_space<any>>) target(%521 : memref<1x256xf32, #tpu.memory_space<vmem>>) target_semaphore(%523 : memref<!tpu.dma_semaphore, #tpu.memory_space<semaphore_mem>>)
      %c24_i32_391 = arith.constant 24 : i32
      %c39_i32_392 = arith.constant 39 : i32
      %524 = arith.minsi %c24_i32_391, %c39_i32_392 : i32
      %525 = arith.index_cast %524 : i32 to index
      %526 = memref.load %arg1[%525] : memref<40xi32, #tpu.memory_space<smem>>
      %c0_i32_393 = arith.constant 0 : i32
      %c0_i32_394 = arith.constant 0 : i32
      %c24_i32_395 = arith.constant 24 : i32
      %c0_i32_396 = arith.constant 0 : i32
      %527 = tpu.memref_slice %arg2[%526, %c0_i32_396] : memref<512x256xf32, #tpu.memory_space<any>> -> memref<1x256xf32, #tpu.memory_space<any>>
      %c24_i32_397 = arith.constant 24 : i32
      %c0_i32_398 = arith.constant 0 : i32
      %528 = tpu.memref_slice %arg4[%c0_i32_393, %c24_i32_397, %c0_i32_398] : memref<2x32x256xf32, #tpu.memory_space<vmem>> -> memref<1x1x256xf32, #tpu.memory_space<vmem>>
      %529 = tpu.memref_squeeze %528 : memref<1x1x256xf32, #tpu.memory_space<vmem>> -> memref<1x256xf32, #tpu.memory_space<vmem>>
      %530 = tpu.memref_slice %arg5[%c0_i32_394, %c24_i32_395] : memref<2x32x!tpu.dma_semaphore, #tpu.memory_space<semaphore_mem>> -> memref<1x1x!tpu.dma_semaphore, #tpu.memory_space<semaphore_mem>>
      %531 = tpu.memref_squeeze %530 : memref<1x1x!tpu.dma_semaphore, #tpu.memory_space<semaphore_mem>> -> memref<!tpu.dma_semaphore, #tpu.memory_space<semaphore_mem>>
      tpu.enqueue_dma source(%527 : memref<1x256xf32, #tpu.memory_space<any>>) target(%529 : memref<1x256xf32, #tpu.memory_space<vmem>>) target_semaphore(%531 : memref<!tpu.dma_semaphore, #tpu.memory_space<semaphore_mem>>)
      %c25_i32_399 = arith.constant 25 : i32
      %c39_i32_400 = arith.constant 39 : i32
      %532 = arith.minsi %c25_i32_399, %c39_i32_400 : i32
      %533 = arith.index_cast %532 : i32 to index
      %534 = memref.load %arg1[%533] : memref<40xi32, #tpu.memory_space<smem>>
      %c0_i32_401 = arith.constant 0 : i32
      %c0_i32_402 = arith.constant 0 : i32
      %c25_i32_403 = arith.constant 25 : i32
      %c0_i32_404 = arith.constant 0 : i32
      %535 = tpu.memref_slice %arg2[%534, %c0_i32_404] : memref<512x256xf32, #tpu.memory_space<any>> -> memref<1x256xf32, #tpu.memory_space<any>>
      %c25_i32_405 = arith.constant 25 : i32
      %c0_i32_406 = arith.constant 0 : i32
      %536 = tpu.memref_slice %arg4[%c0_i32_401, %c25_i32_405, %c0_i32_406] : memref<2x32x256xf32, #tpu.memory_space<vmem>> -> memref<1x1x256xf32, #tpu.memory_space<vmem>>
      %537 = tpu.memref_squeeze %536 : memref<1x1x256xf32, #tpu.memory_space<vmem>> -> memref<1x256xf32, #tpu.memory_space<vmem>>
      %538 = tpu.memref_slice %arg5[%c0_i32_402, %c25_i32_403] : memref<2x32x!tpu.dma_semaphore, #tpu.memory_space<semaphore_mem>> -> memref<1x1x!tpu.dma_semaphore, #tpu.memory_space<semaphore_mem>>
      %539 = tpu.memref_squeeze %538 : memref<1x1x!tpu.dma_semaphore, #tpu.memory_space<semaphore_mem>> -> memref<!tpu.dma_semaphore, #tpu.memory_space<semaphore_mem>>
      tpu.enqueue_dma source(%535 : memref<1x256xf32, #tpu.memory_space<any>>) target(%537 : memref<1x256xf32, #tpu.memory_space<vmem>>) target_semaphore(%539 : memref<!tpu.dma_semaphore, #tpu.memory_space<semaphore_mem>>)
      %c26_i32_407 = arith.constant 26 : i32
      %c39_i32_408 = arith.constant 39 : i32
      %540 = arith.minsi %c26_i32_407, %c39_i32_408 : i32
      %541 = arith.index_cast %540 : i32 to index
      %542 = memref.load %arg1[%541] : memref<40xi32, #tpu.memory_space<smem>>
      %c0_i32_409 = arith.constant 0 : i32
      %c0_i32_410 = arith.constant 0 : i32
      %c26_i32_411 = arith.constant 26 : i32
      %c0_i32_412 = arith.constant 0 : i32
      %543 = tpu.memref_slice %arg2[%542, %c0_i32_412] : memref<512x256xf32, #tpu.memory_space<any>> -> memref<1x256xf32, #tpu.memory_space<any>>
      %c26_i32_413 = arith.constant 26 : i32
      %c0_i32_414 = arith.constant 0 : i32
      %544 = tpu.memref_slice %arg4[%c0_i32_409, %c26_i32_413, %c0_i32_414] : memref<2x32x256xf32, #tpu.memory_space<vmem>> -> memref<1x1x256xf32, #tpu.memory_space<vmem>>
      %545 = tpu.memref_squeeze %544 : memref<1x1x256xf32, #tpu.memory_space<vmem>> -> memref<1x256xf32, #tpu.memory_space<vmem>>
      %546 = tpu.memref_slice %arg5[%c0_i32_410, %c26_i32_411] : memref<2x32x!tpu.dma_semaphore, #tpu.memory_space<semaphore_mem>> -> memref<1x1x!tpu.dma_semaphore, #tpu.memory_space<semaphore_mem>>
      %547 = tpu.memref_squeeze %546 : memref<1x1x!tpu.dma_semaphore, #tpu.memory_space<semaphore_mem>> -> memref<!tpu.dma_semaphore, #tpu.memory_space<semaphore_mem>>
      tpu.enqueue_dma source(%543 : memref<1x256xf32, #tpu.memory_space<any>>) target(%545 : memref<1x256xf32, #tpu.memory_space<vmem>>) target_semaphore(%547 : memref<!tpu.dma_semaphore, #tpu.memory_space<semaphore_mem>>)
      %c27_i32_415 = arith.constant 27 : i32
      %c39_i32_416 = arith.constant 39 : i32
      %548 = arith.minsi %c27_i32_415, %c39_i32_416 : i32
      %549 = arith.index_cast %548 : i32 to index
      %550 = memref.load %arg1[%549] : memref<40xi32, #tpu.memory_space<smem>>
      %c0_i32_417 = arith.constant 0 : i32
      %c0_i32_418 = arith.constant 0 : i32
      %c27_i32_419 = arith.constant 27 : i32
      %c0_i32_420 = arith.constant 0 : i32
      %551 = tpu.memref_slice %arg2[%550, %c0_i32_420] : memref<512x256xf32, #tpu.memory_space<any>> -> memref<1x256xf32, #tpu.memory_space<any>>
      %c27_i32_421 = arith.constant 27 : i32
      %c0_i32_422 = arith.constant 0 : i32
      %552 = tpu.memref_slice %arg4[%c0_i32_417, %c27_i32_421, %c0_i32_422] : memref<2x32x256xf32, #tpu.memory_space<vmem>> -> memref<1x1x256xf32, #tpu.memory_space<vmem>>
      %553 = tpu.memref_squeeze %552 : memref<1x1x256xf32, #tpu.memory_space<vmem>> -> memref<1x256xf32, #tpu.memory_space<vmem>>
      %554 = tpu.memref_slice %arg5[%c0_i32_418, %c27_i32_419] : memref<2x32x!tpu.dma_semaphore, #tpu.memory_space<semaphore_mem>> -> memref<1x1x!tpu.dma_semaphore, #tpu.memory_space<semaphore_mem>>
      %555 = tpu.memref_squeeze %554 : memref<1x1x!tpu.dma_semaphore, #tpu.memory_space<semaphore_mem>> -> memref<!tpu.dma_semaphore, #tpu.memory_space<semaphore_mem>>
      tpu.enqueue_dma source(%551 : memref<1x256xf32, #tpu.memory_space<any>>) target(%553 : memref<1x256xf32, #tpu.memory_space<vmem>>) target_semaphore(%555 : memref<!tpu.dma_semaphore, #tpu.memory_space<semaphore_mem>>)
      %c28_i32_423 = arith.constant 28 : i32
      %c39_i32_424 = arith.constant 39 : i32
      %556 = arith.minsi %c28_i32_423, %c39_i32_424 : i32
      %557 = arith.index_cast %556 : i32 to index
      %558 = memref.load %arg1[%557] : memref<40xi32, #tpu.memory_space<smem>>
      %c0_i32_425 = arith.constant 0 : i32
      %c0_i32_426 = arith.constant 0 : i32
      %c28_i32_427 = arith.constant 28 : i32
      %c0_i32_428 = arith.constant 0 : i32
      %559 = tpu.memref_slice %arg2[%558, %c0_i32_428] : memref<512x256xf32, #tpu.memory_space<any>> -> memref<1x256xf32, #tpu.memory_space<any>>
      %c28_i32_429 = arith.constant 28 : i32
      %c0_i32_430 = arith.constant 0 : i32
      %560 = tpu.memref_slice %arg4[%c0_i32_425, %c28_i32_429, %c0_i32_430] : memref<2x32x256xf32, #tpu.memory_space<vmem>> -> memref<1x1x256xf32, #tpu.memory_space<vmem>>
      %561 = tpu.memref_squeeze %560 : memref<1x1x256xf32, #tpu.memory_space<vmem>> -> memref<1x256xf32, #tpu.memory_space<vmem>>
      %562 = tpu.memref_slice %arg5[%c0_i32_426, %c28_i32_427] : memref<2x32x!tpu.dma_semaphore, #tpu.memory_space<semaphore_mem>> -> memref<1x1x!tpu.dma_semaphore, #tpu.memory_space<semaphore_mem>>
      %563 = tpu.memref_squeeze %562 : memref<1x1x!tpu.dma_semaphore, #tpu.memory_space<semaphore_mem>> -> memref<!tpu.dma_semaphore, #tpu.memory_space<semaphore_mem>>
      tpu.enqueue_dma source(%559 : memref<1x256xf32, #tpu.memory_space<any>>) target(%561 : memref<1x256xf32, #tpu.memory_space<vmem>>) target_semaphore(%563 : memref<!tpu.dma_semaphore, #tpu.memory_space<semaphore_mem>>)
      %c29_i32_431 = arith.constant 29 : i32
      %c39_i32_432 = arith.constant 39 : i32
      %564 = arith.minsi %c29_i32_431, %c39_i32_432 : i32
      %565 = arith.index_cast %564 : i32 to index
      %566 = memref.load %arg1[%565] : memref<40xi32, #tpu.memory_space<smem>>
      %c0_i32_433 = arith.constant 0 : i32
      %c0_i32_434 = arith.constant 0 : i32
      %c29_i32_435 = arith.constant 29 : i32
      %c0_i32_436 = arith.constant 0 : i32
      %567 = tpu.memref_slice %arg2[%566, %c0_i32_436] : memref<512x256xf32, #tpu.memory_space<any>> -> memref<1x256xf32, #tpu.memory_space<any>>
      %c29_i32_437 = arith.constant 29 : i32
      %c0_i32_438 = arith.constant 0 : i32
      %568 = tpu.memref_slice %arg4[%c0_i32_433, %c29_i32_437, %c0_i32_438] : memref<2x32x256xf32, #tpu.memory_space<vmem>> -> memref<1x1x256xf32, #tpu.memory_space<vmem>>
      %569 = tpu.memref_squeeze %568 : memref<1x1x256xf32, #tpu.memory_space<vmem>> -> memref<1x256xf32, #tpu.memory_space<vmem>>
      %570 = tpu.memref_slice %arg5[%c0_i32_434, %c29_i32_435] : memref<2x32x!tpu.dma_semaphore, #tpu.memory_space<semaphore_mem>> -> memref<1x1x!tpu.dma_semaphore, #tpu.memory_space<semaphore_mem>>
      %571 = tpu.memref_squeeze %570 : memref<1x1x!tpu.dma_semaphore, #tpu.memory_space<semaphore_mem>> -> memref<!tpu.dma_semaphore, #tpu.memory_space<semaphore_mem>>
      tpu.enqueue_dma source(%567 : memref<1x256xf32, #tpu.memory_space<any>>) target(%569 : memref<1x256xf32, #tpu.memory_space<vmem>>) target_semaphore(%571 : memref<!tpu.dma_semaphore, #tpu.memory_space<semaphore_mem>>)
      %c30_i32_439 = arith.constant 30 : i32
      %c39_i32_440 = arith.constant 39 : i32
      %572 = arith.minsi %c30_i32_439, %c39_i32_440 : i32
      %573 = arith.index_cast %572 : i32 to index
      %574 = memref.load %arg1[%573] : memref<40xi32, #tpu.memory_space<smem>>
      %c0_i32_441 = arith.constant 0 : i32
      %c0_i32_442 = arith.constant 0 : i32
      %c30_i32_443 = arith.constant 30 : i32
      %c0_i32_444 = arith.constant 0 : i32
      %575 = tpu.memref_slice %arg2[%574, %c0_i32_444] : memref<512x256xf32, #tpu.memory_space<any>> -> memref<1x256xf32, #tpu.memory_space<any>>
      %c30_i32_445 = arith.constant 30 : i32
      %c0_i32_446 = arith.constant 0 : i32
      %576 = tpu.memref_slice %arg4[%c0_i32_441, %c30_i32_445, %c0_i32_446] : memref<2x32x256xf32, #tpu.memory_space<vmem>> -> memref<1x1x256xf32, #tpu.memory_space<vmem>>
      %577 = tpu.memref_squeeze %576 : memref<1x1x256xf32, #tpu.memory_space<vmem>> -> memref<1x256xf32, #tpu.memory_space<vmem>>
      %578 = tpu.memref_slice %arg5[%c0_i32_442, %c30_i32_443] : memref<2x32x!tpu.dma_semaphore, #tpu.memory_space<semaphore_mem>> -> memref<1x1x!tpu.dma_semaphore, #tpu.memory_space<semaphore_mem>>
      %579 = tpu.memref_squeeze %578 : memref<1x1x!tpu.dma_semaphore, #tpu.memory_space<semaphore_mem>> -> memref<!tpu.dma_semaphore, #tpu.memory_space<semaphore_mem>>
      tpu.enqueue_dma source(%575 : memref<1x256xf32, #tpu.memory_space<any>>) target(%577 : memref<1x256xf32, #tpu.memory_space<vmem>>) target_semaphore(%579 : memref<!tpu.dma_semaphore, #tpu.memory_space<semaphore_mem>>)
      %c31_i32_447 = arith.constant 31 : i32
      %c39_i32_448 = arith.constant 39 : i32
      %580 = arith.minsi %c31_i32_447, %c39_i32_448 : i32
      %581 = arith.index_cast %580 : i32 to index
      %582 = memref.load %arg1[%581] : memref<40xi32, #tpu.memory_space<smem>>
      %c0_i32_449 = arith.constant 0 : i32
      %c0_i32_450 = arith.constant 0 : i32
      %c31_i32_451 = arith.constant 31 : i32
      %c0_i32_452 = arith.constant 0 : i32
      %583 = tpu.memref_slice %arg2[%582, %c0_i32_452] : memref<512x256xf32, #tpu.memory_space<any>> -> memref<1x256xf32, #tpu.memory_space<any>>
      %c31_i32_453 = arith.constant 31 : i32
      %c0_i32_454 = arith.constant 0 : i32
      %584 = tpu.memref_slice %arg4[%c0_i32_449, %c31_i32_453, %c0_i32_454] : memref<2x32x256xf32, #tpu.memory_space<vmem>> -> memref<1x1x256xf32, #tpu.memory_space<vmem>>
      %585 = tpu.memref_squeeze %584 : memref<1x1x256xf32, #tpu.memory_space<vmem>> -> memref<1x256xf32, #tpu.memory_space<vmem>>
      %586 = tpu.memref_slice %arg5[%c0_i32_450, %c31_i32_451] : memref<2x32x!tpu.dma_semaphore, #tpu.memory_space<semaphore_mem>> -> memref<1x1x!tpu.dma_semaphore, #tpu.memory_space<semaphore_mem>>
      %587 = tpu.memref_squeeze %586 : memref<1x1x!tpu.dma_semaphore, #tpu.memory_space<semaphore_mem>> -> memref<!tpu.dma_semaphore, #tpu.memory_space<semaphore_mem>>
      tpu.enqueue_dma source(%583 : memref<1x256xf32, #tpu.memory_space<any>>) target(%585 : memref<1x256xf32, #tpu.memory_space<vmem>>) target_semaphore(%587 : memref<!tpu.dma_semaphore, #tpu.memory_space<semaphore_mem>>)
    } else {
    }
    %c1_i32_1 = arith.constant 1 : i32
    %4 = arith.addi %arg0, %c1_i32_1 : i32
    %c2_i32 = arith.constant 2 : i32
    %5 = arith.cmpi slt, %4, %c2_i32 : i32
    %6 = arith.extui %5 : i1 to i32
    %c0_i32_2 = arith.constant 0 : i32
    %7 = arith.cmpi ne, %6, %c0_i32_2 : i32
    scf.if %7 {
      %c1_i32_199 = arith.constant 1 : i32
      %332 = arith.addi %arg0, %c1_i32_199 : i32
      %c1_i32_200 = arith.constant 1 : i32
      %333 = arith.subi %c1_i32_200, %0 : i32
      %c32_i32_201 = arith.constant 32 : i32
      %334 = arith.muli %332, %c32_i32_201 : i32
      %c0_i32_202 = arith.constant 0 : i32
      %335 = arith.addi %334, %c0_i32_202 : i32
      %c39_i32_203 = arith.constant 39 : i32
      %336 = arith.minsi %335, %c39_i32_203 : i32
      %337 = arith.index_cast %336 : i32 to index
      %338 = memref.load %arg1[%337] : memref<40xi32, #tpu.memory_space<smem>>
      %c0_i32_204 = arith.constant 0 : i32
      %c0_i32_205 = arith.constant 0 : i32
      %339 = tpu.memref_slice %arg2[%338, %c0_i32_205] : memref<512x256xf32, #tpu.memory_space<any>> -> memref<1x256xf32, #tpu.memory_space<any>>
      %c0_i32_206 = arith.constant 0 : i32
      %c0_i32_207 = arith.constant 0 : i32
      %340 = tpu.memref_slice %arg4[%333, %c0_i32_206, %c0_i32_207] : memref<2x32x256xf32, #tpu.memory_space<vmem>> -> memref<1x1x256xf32, #tpu.memory_space<vmem>>
      %341 = tpu.memref_squeeze %340 : memref<1x1x256xf32, #tpu.memory_space<vmem>> -> memref<1x256xf32, #tpu.memory_space<vmem>>
      %342 = tpu.memref_slice %arg5[%333, %c0_i32_204] : memref<2x32x!tpu.dma_semaphore, #tpu.memory_space<semaphore_mem>> -> memref<1x1x!tpu.dma_semaphore, #tpu.memory_space<semaphore_mem>>
      %343 = tpu.memref_squeeze %342 : memref<1x1x!tpu.dma_semaphore, #tpu.memory_space<semaphore_mem>> -> memref<!tpu.dma_semaphore, #tpu.memory_space<semaphore_mem>>
      tpu.enqueue_dma source(%339 : memref<1x256xf32, #tpu.memory_space<any>>) target(%341 : memref<1x256xf32, #tpu.memory_space<vmem>>) target_semaphore(%343 : memref<!tpu.dma_semaphore, #tpu.memory_space<semaphore_mem>>)
      %c1_i32_208 = arith.constant 1 : i32
      %344 = arith.addi %arg0, %c1_i32_208 : i32
      %c1_i32_209 = arith.constant 1 : i32
      %345 = arith.subi %c1_i32_209, %0 : i32
      %c32_i32_210 = arith.constant 32 : i32
      %346 = arith.muli %344, %c32_i32_210 : i32
      %c1_i32_211 = arith.constant 1 : i32
      %347 = arith.addi %346, %c1_i32_211 : i32
      %c39_i32_212 = arith.constant 39 : i32
      %348 = arith.minsi %347, %c39_i32_212 : i32
      %349 = arith.index_cast %348 : i32 to index
      %350 = memref.load %arg1[%349] : memref<40xi32, #tpu.memory_space<smem>>
      %c1_i32_213 = arith.constant 1 : i32
      %c0_i32_214 = arith.constant 0 : i32
      %351 = tpu.memref_slice %arg2[%350, %c0_i32_214] : memref<512x256xf32, #tpu.memory_space<any>> -> memref<1x256xf32, #tpu.memory_space<any>>
      %c1_i32_215 = arith.constant 1 : i32
      %c0_i32_216 = arith.constant 0 : i32
      %352 = tpu.memref_slice %arg4[%345, %c1_i32_215, %c0_i32_216] : memref<2x32x256xf32, #tpu.memory_space<vmem>> -> memref<1x1x256xf32, #tpu.memory_space<vmem>>
      %353 = tpu.memref_squeeze %352 : memref<1x1x256xf32, #tpu.memory_space<vmem>> -> memref<1x256xf32, #tpu.memory_space<vmem>>
      %354 = tpu.memref_slice %arg5[%345, %c1_i32_213] : memref<2x32x!tpu.dma_semaphore, #tpu.memory_space<semaphore_mem>> -> memref<1x1x!tpu.dma_semaphore, #tpu.memory_space<semaphore_mem>>
      %355 = tpu.memref_squeeze %354 : memref<1x1x!tpu.dma_semaphore, #tpu.memory_space<semaphore_mem>> -> memref<!tpu.dma_semaphore, #tpu.memory_space<semaphore_mem>>
      tpu.enqueue_dma source(%351 : memref<1x256xf32, #tpu.memory_space<any>>) target(%353 : memref<1x256xf32, #tpu.memory_space<vmem>>) target_semaphore(%355 : memref<!tpu.dma_semaphore, #tpu.memory_space<semaphore_mem>>)
      %c1_i32_217 = arith.constant 1 : i32
      %356 = arith.addi %arg0, %c1_i32_217 : i32
      %c1_i32_218 = arith.constant 1 : i32
      %357 = arith.subi %c1_i32_218, %0 : i32
      %c32_i32_219 = arith.constant 32 : i32
      %358 = arith.muli %356, %c32_i32_219 : i32
      %c2_i32_220 = arith.constant 2 : i32
      %359 = arith.addi %358, %c2_i32_220 : i32
      %c39_i32_221 = arith.constant 39 : i32
      %360 = arith.minsi %359, %c39_i32_221 : i32
      %361 = arith.index_cast %360 : i32 to index
      %362 = memref.load %arg1[%361] : memref<40xi32, #tpu.memory_space<smem>>
      %c2_i32_222 = arith.constant 2 : i32
      %c0_i32_223 = arith.constant 0 : i32
      %363 = tpu.memref_slice %arg2[%362, %c0_i32_223] : memref<512x256xf32, #tpu.memory_space<any>> -> memref<1x256xf32, #tpu.memory_space<any>>
      %c2_i32_224 = arith.constant 2 : i32
      %c0_i32_225 = arith.constant 0 : i32
      %364 = tpu.memref_slice %arg4[%357, %c2_i32_224, %c0_i32_225] : memref<2x32x256xf32, #tpu.memory_space<vmem>> -> memref<1x1x256xf32, #tpu.memory_space<vmem>>
      %365 = tpu.memref_squeeze %364 : memref<1x1x256xf32, #tpu.memory_space<vmem>> -> memref<1x256xf32, #tpu.memory_space<vmem>>
      %366 = tpu.memref_slice %arg5[%357, %c2_i32_222] : memref<2x32x!tpu.dma_semaphore, #tpu.memory_space<semaphore_mem>> -> memref<1x1x!tpu.dma_semaphore, #tpu.memory_space<semaphore_mem>>
      %367 = tpu.memref_squeeze %366 : memref<1x1x!tpu.dma_semaphore, #tpu.memory_space<semaphore_mem>> -> memref<!tpu.dma_semaphore, #tpu.memory_space<semaphore_mem>>
      tpu.enqueue_dma source(%363 : memref<1x256xf32, #tpu.memory_space<any>>) target(%365 : memref<1x256xf32, #tpu.memory_space<vmem>>) target_semaphore(%367 : memref<!tpu.dma_semaphore, #tpu.memory_space<semaphore_mem>>)
      %c1_i32_226 = arith.constant 1 : i32
      %368 = arith.addi %arg0, %c1_i32_226 : i32
      %c1_i32_227 = arith.constant 1 : i32
      %369 = arith.subi %c1_i32_227, %0 : i32
      %c32_i32_228 = arith.constant 32 : i32
      %370 = arith.muli %368, %c32_i32_228 : i32
      %c3_i32_229 = arith.constant 3 : i32
      %371 = arith.addi %370, %c3_i32_229 : i32
      %c39_i32_230 = arith.constant 39 : i32
      %372 = arith.minsi %371, %c39_i32_230 : i32
      %373 = arith.index_cast %372 : i32 to index
      %374 = memref.load %arg1[%373] : memref<40xi32, #tpu.memory_space<smem>>
      %c3_i32_231 = arith.constant 3 : i32
      %c0_i32_232 = arith.constant 0 : i32
      %375 = tpu.memref_slice %arg2[%374, %c0_i32_232] : memref<512x256xf32, #tpu.memory_space<any>> -> memref<1x256xf32, #tpu.memory_space<any>>
      %c3_i32_233 = arith.constant 3 : i32
      %c0_i32_234 = arith.constant 0 : i32
      %376 = tpu.memref_slice %arg4[%369, %c3_i32_233, %c0_i32_234] : memref<2x32x256xf32, #tpu.memory_space<vmem>> -> memref<1x1x256xf32, #tpu.memory_space<vmem>>
      %377 = tpu.memref_squeeze %376 : memref<1x1x256xf32, #tpu.memory_space<vmem>> -> memref<1x256xf32, #tpu.memory_space<vmem>>
      %378 = tpu.memref_slice %arg5[%369, %c3_i32_231] : memref<2x32x!tpu.dma_semaphore, #tpu.memory_space<semaphore_mem>> -> memref<1x1x!tpu.dma_semaphore, #tpu.memory_space<semaphore_mem>>
      %379 = tpu.memref_squeeze %378 : memref<1x1x!tpu.dma_semaphore, #tpu.memory_space<semaphore_mem>> -> memref<!tpu.dma_semaphore, #tpu.memory_space<semaphore_mem>>
      tpu.enqueue_dma source(%375 : memref<1x256xf32, #tpu.memory_space<any>>) target(%377 : memref<1x256xf32, #tpu.memory_space<vmem>>) target_semaphore(%379 : memref<!tpu.dma_semaphore, #tpu.memory_space<semaphore_mem>>)
      %c1_i32_235 = arith.constant 1 : i32
      %380 = arith.addi %arg0, %c1_i32_235 : i32
      %c1_i32_236 = arith.constant 1 : i32
      %381 = arith.subi %c1_i32_236, %0 : i32
      %c32_i32_237 = arith.constant 32 : i32
      %382 = arith.muli %380, %c32_i32_237 : i32
      %c4_i32_238 = arith.constant 4 : i32
      %383 = arith.addi %382, %c4_i32_238 : i32
      %c39_i32_239 = arith.constant 39 : i32
      %384 = arith.minsi %383, %c39_i32_239 : i32
      %385 = arith.index_cast %384 : i32 to index
      %386 = memref.load %arg1[%385] : memref<40xi32, #tpu.memory_space<smem>>
      %c4_i32_240 = arith.constant 4 : i32
      %c0_i32_241 = arith.constant 0 : i32
      %387 = tpu.memref_slice %arg2[%386, %c0_i32_241] : memref<512x256xf32, #tpu.memory_space<any>> -> memref<1x256xf32, #tpu.memory_space<any>>
      %c4_i32_242 = arith.constant 4 : i32
      %c0_i32_243 = arith.constant 0 : i32
      %388 = tpu.memref_slice %arg4[%381, %c4_i32_242, %c0_i32_243] : memref<2x32x256xf32, #tpu.memory_space<vmem>> -> memref<1x1x256xf32, #tpu.memory_space<vmem>>
      %389 = tpu.memref_squeeze %388 : memref<1x1x256xf32, #tpu.memory_space<vmem>> -> memref<1x256xf32, #tpu.memory_space<vmem>>
      %390 = tpu.memref_slice %arg5[%381, %c4_i32_240] : memref<2x32x!tpu.dma_semaphore, #tpu.memory_space<semaphore_mem>> -> memref<1x1x!tpu.dma_semaphore, #tpu.memory_space<semaphore_mem>>
      %391 = tpu.memref_squeeze %390 : memref<1x1x!tpu.dma_semaphore, #tpu.memory_space<semaphore_mem>> -> memref<!tpu.dma_semaphore, #tpu.memory_space<semaphore_mem>>
      tpu.enqueue_dma source(%387 : memref<1x256xf32, #tpu.memory_space<any>>) target(%389 : memref<1x256xf32, #tpu.memory_space<vmem>>) target_semaphore(%391 : memref<!tpu.dma_semaphore, #tpu.memory_space<semaphore_mem>>)
      %c1_i32_244 = arith.constant 1 : i32
      %392 = arith.addi %arg0, %c1_i32_244 : i32
      %c1_i32_245 = arith.constant 1 : i32
      %393 = arith.subi %c1_i32_245, %0 : i32
      %c32_i32_246 = arith.constant 32 : i32
      %394 = arith.muli %392, %c32_i32_246 : i32
      %c5_i32_247 = arith.constant 5 : i32
      %395 = arith.addi %394, %c5_i32_247 : i32
      %c39_i32_248 = arith.constant 39 : i32
      %396 = arith.minsi %395, %c39_i32_248 : i32
      %397 = arith.index_cast %396 : i32 to index
      %398 = memref.load %arg1[%397] : memref<40xi32, #tpu.memory_space<smem>>
      %c5_i32_249 = arith.constant 5 : i32
      %c0_i32_250 = arith.constant 0 : i32
      %399 = tpu.memref_slice %arg2[%398, %c0_i32_250] : memref<512x256xf32, #tpu.memory_space<any>> -> memref<1x256xf32, #tpu.memory_space<any>>
      %c5_i32_251 = arith.constant 5 : i32
      %c0_i32_252 = arith.constant 0 : i32
      %400 = tpu.memref_slice %arg4[%393, %c5_i32_251, %c0_i32_252] : memref<2x32x256xf32, #tpu.memory_space<vmem>> -> memref<1x1x256xf32, #tpu.memory_space<vmem>>
      %401 = tpu.memref_squeeze %400 : memref<1x1x256xf32, #tpu.memory_space<vmem>> -> memref<1x256xf32, #tpu.memory_space<vmem>>
      %402 = tpu.memref_slice %arg5[%393, %c5_i32_249] : memref<2x32x!tpu.dma_semaphore, #tpu.memory_space<semaphore_mem>> -> memref<1x1x!tpu.dma_semaphore, #tpu.memory_space<semaphore_mem>>
      %403 = tpu.memref_squeeze %402 : memref<1x1x!tpu.dma_semaphore, #tpu.memory_space<semaphore_mem>> -> memref<!tpu.dma_semaphore, #tpu.memory_space<semaphore_mem>>
      tpu.enqueue_dma source(%399 : memref<1x256xf32, #tpu.memory_space<any>>) target(%401 : memref<1x256xf32, #tpu.memory_space<vmem>>) target_semaphore(%403 : memref<!tpu.dma_semaphore, #tpu.memory_space<semaphore_mem>>)
      %c1_i32_253 = arith.constant 1 : i32
      %404 = arith.addi %arg0, %c1_i32_253 : i32
      %c1_i32_254 = arith.constant 1 : i32
      %405 = arith.subi %c1_i32_254, %0 : i32
      %c32_i32_255 = arith.constant 32 : i32
      %406 = arith.muli %404, %c32_i32_255 : i32
      %c6_i32_256 = arith.constant 6 : i32
      %407 = arith.addi %406, %c6_i32_256 : i32
      %c39_i32_257 = arith.constant 39 : i32
      %408 = arith.minsi %407, %c39_i32_257 : i32
      %409 = arith.index_cast %408 : i32 to index
      %410 = memref.load %arg1[%409] : memref<40xi32, #tpu.memory_space<smem>>
      %c6_i32_258 = arith.constant 6 : i32
      %c0_i32_259 = arith.constant 0 : i32
      %411 = tpu.memref_slice %arg2[%410, %c0_i32_259] : memref<512x256xf32, #tpu.memory_space<any>> -> memref<1x256xf32, #tpu.memory_space<any>>
      %c6_i32_260 = arith.constant 6 : i32
      %c0_i32_261 = arith.constant 0 : i32
      %412 = tpu.memref_slice %arg4[%405, %c6_i32_260, %c0_i32_261] : memref<2x32x256xf32, #tpu.memory_space<vmem>> -> memref<1x1x256xf32, #tpu.memory_space<vmem>>
      %413 = tpu.memref_squeeze %412 : memref<1x1x256xf32, #tpu.memory_space<vmem>> -> memref<1x256xf32, #tpu.memory_space<vmem>>
      %414 = tpu.memref_slice %arg5[%405, %c6_i32_258] : memref<2x32x!tpu.dma_semaphore, #tpu.memory_space<semaphore_mem>> -> memref<1x1x!tpu.dma_semaphore, #tpu.memory_space<semaphore_mem>>
      %415 = tpu.memref_squeeze %414 : memref<1x1x!tpu.dma_semaphore, #tpu.memory_space<semaphore_mem>> -> memref<!tpu.dma_semaphore, #tpu.memory_space<semaphore_mem>>
      tpu.enqueue_dma source(%411 : memref<1x256xf32, #tpu.memory_space<any>>) target(%413 : memref<1x256xf32, #tpu.memory_space<vmem>>) target_semaphore(%415 : memref<!tpu.dma_semaphore, #tpu.memory_space<semaphore_mem>>)
      %c1_i32_262 = arith.constant 1 : i32
      %416 = arith.addi %arg0, %c1_i32_262 : i32
      %c1_i32_263 = arith.constant 1 : i32
      %417 = arith.subi %c1_i32_263, %0 : i32
      %c32_i32_264 = arith.constant 32 : i32
      %418 = arith.muli %416, %c32_i32_264 : i32
      %c7_i32_265 = arith.constant 7 : i32
      %419 = arith.addi %418, %c7_i32_265 : i32
      %c39_i32_266 = arith.constant 39 : i32
      %420 = arith.minsi %419, %c39_i32_266 : i32
      %421 = arith.index_cast %420 : i32 to index
      %422 = memref.load %arg1[%421] : memref<40xi32, #tpu.memory_space<smem>>
      %c7_i32_267 = arith.constant 7 : i32
      %c0_i32_268 = arith.constant 0 : i32
      %423 = tpu.memref_slice %arg2[%422, %c0_i32_268] : memref<512x256xf32, #tpu.memory_space<any>> -> memref<1x256xf32, #tpu.memory_space<any>>
      %c7_i32_269 = arith.constant 7 : i32
      %c0_i32_270 = arith.constant 0 : i32
      %424 = tpu.memref_slice %arg4[%417, %c7_i32_269, %c0_i32_270] : memref<2x32x256xf32, #tpu.memory_space<vmem>> -> memref<1x1x256xf32, #tpu.memory_space<vmem>>
      %425 = tpu.memref_squeeze %424 : memref<1x1x256xf32, #tpu.memory_space<vmem>> -> memref<1x256xf32, #tpu.memory_space<vmem>>
      %426 = tpu.memref_slice %arg5[%417, %c7_i32_267] : memref<2x32x!tpu.dma_semaphore, #tpu.memory_space<semaphore_mem>> -> memref<1x1x!tpu.dma_semaphore, #tpu.memory_space<semaphore_mem>>
      %427 = tpu.memref_squeeze %426 : memref<1x1x!tpu.dma_semaphore, #tpu.memory_space<semaphore_mem>> -> memref<!tpu.dma_semaphore, #tpu.memory_space<semaphore_mem>>
      tpu.enqueue_dma source(%423 : memref<1x256xf32, #tpu.memory_space<any>>) target(%425 : memref<1x256xf32, #tpu.memory_space<vmem>>) target_semaphore(%427 : memref<!tpu.dma_semaphore, #tpu.memory_space<semaphore_mem>>)
      %c1_i32_271 = arith.constant 1 : i32
      %428 = arith.addi %arg0, %c1_i32_271 : i32
      %c1_i32_272 = arith.constant 1 : i32
      %429 = arith.subi %c1_i32_272, %0 : i32
      %c32_i32_273 = arith.constant 32 : i32
      %430 = arith.muli %428, %c32_i32_273 : i32
      %c8_i32_274 = arith.constant 8 : i32
      %431 = arith.addi %430, %c8_i32_274 : i32
      %c39_i32_275 = arith.constant 39 : i32
      %432 = arith.minsi %431, %c39_i32_275 : i32
      %433 = arith.index_cast %432 : i32 to index
      %434 = memref.load %arg1[%433] : memref<40xi32, #tpu.memory_space<smem>>
      %c8_i32_276 = arith.constant 8 : i32
      %c0_i32_277 = arith.constant 0 : i32
      %435 = tpu.memref_slice %arg2[%434, %c0_i32_277] : memref<512x256xf32, #tpu.memory_space<any>> -> memref<1x256xf32, #tpu.memory_space<any>>
      %c8_i32_278 = arith.constant 8 : i32
      %c0_i32_279 = arith.constant 0 : i32
      %436 = tpu.memref_slice %arg4[%429, %c8_i32_278, %c0_i32_279] : memref<2x32x256xf32, #tpu.memory_space<vmem>> -> memref<1x1x256xf32, #tpu.memory_space<vmem>>
      %437 = tpu.memref_squeeze %436 : memref<1x1x256xf32, #tpu.memory_space<vmem>> -> memref<1x256xf32, #tpu.memory_space<vmem>>
      %438 = tpu.memref_slice %arg5[%429, %c8_i32_276] : memref<2x32x!tpu.dma_semaphore, #tpu.memory_space<semaphore_mem>> -> memref<1x1x!tpu.dma_semaphore, #tpu.memory_space<semaphore_mem>>
      %439 = tpu.memref_squeeze %438 : memref<1x1x!tpu.dma_semaphore, #tpu.memory_space<semaphore_mem>> -> memref<!tpu.dma_semaphore, #tpu.memory_space<semaphore_mem>>
      tpu.enqueue_dma source(%435 : memref<1x256xf32, #tpu.memory_space<any>>) target(%437 : memref<1x256xf32, #tpu.memory_space<vmem>>) target_semaphore(%439 : memref<!tpu.dma_semaphore, #tpu.memory_space<semaphore_mem>>)
      %c1_i32_280 = arith.constant 1 : i32
      %440 = arith.addi %arg0, %c1_i32_280 : i32
      %c1_i32_281 = arith.constant 1 : i32
      %441 = arith.subi %c1_i32_281, %0 : i32
      %c32_i32_282 = arith.constant 32 : i32
      %442 = arith.muli %440, %c32_i32_282 : i32
      %c9_i32_283 = arith.constant 9 : i32
      %443 = arith.addi %442, %c9_i32_283 : i32
      %c39_i32_284 = arith.constant 39 : i32
      %444 = arith.minsi %443, %c39_i32_284 : i32
      %445 = arith.index_cast %444 : i32 to index
      %446 = memref.load %arg1[%445] : memref<40xi32, #tpu.memory_space<smem>>
      %c9_i32_285 = arith.constant 9 : i32
      %c0_i32_286 = arith.constant 0 : i32
      %447 = tpu.memref_slice %arg2[%446, %c0_i32_286] : memref<512x256xf32, #tpu.memory_space<any>> -> memref<1x256xf32, #tpu.memory_space<any>>
      %c9_i32_287 = arith.constant 9 : i32
      %c0_i32_288 = arith.constant 0 : i32
      %448 = tpu.memref_slice %arg4[%441, %c9_i32_287, %c0_i32_288] : memref<2x32x256xf32, #tpu.memory_space<vmem>> -> memref<1x1x256xf32, #tpu.memory_space<vmem>>
      %449 = tpu.memref_squeeze %448 : memref<1x1x256xf32, #tpu.memory_space<vmem>> -> memref<1x256xf32, #tpu.memory_space<vmem>>
      %450 = tpu.memref_slice %arg5[%441, %c9_i32_285] : memref<2x32x!tpu.dma_semaphore, #tpu.memory_space<semaphore_mem>> -> memref<1x1x!tpu.dma_semaphore, #tpu.memory_space<semaphore_mem>>
      %451 = tpu.memref_squeeze %450 : memref<1x1x!tpu.dma_semaphore, #tpu.memory_space<semaphore_mem>> -> memref<!tpu.dma_semaphore, #tpu.memory_space<semaphore_mem>>
      tpu.enqueue_dma source(%447 : memref<1x256xf32, #tpu.memory_space<any>>) target(%449 : memref<1x256xf32, #tpu.memory_space<vmem>>) target_semaphore(%451 : memref<!tpu.dma_semaphore, #tpu.memory_space<semaphore_mem>>)
      %c1_i32_289 = arith.constant 1 : i32
      %452 = arith.addi %arg0, %c1_i32_289 : i32
      %c1_i32_290 = arith.constant 1 : i32
      %453 = arith.subi %c1_i32_290, %0 : i32
      %c32_i32_291 = arith.constant 32 : i32
      %454 = arith.muli %452, %c32_i32_291 : i32
      %c10_i32_292 = arith.constant 10 : i32
      %455 = arith.addi %454, %c10_i32_292 : i32
      %c39_i32_293 = arith.constant 39 : i32
      %456 = arith.minsi %455, %c39_i32_293 : i32
      %457 = arith.index_cast %456 : i32 to index
      %458 = memref.load %arg1[%457] : memref<40xi32, #tpu.memory_space<smem>>
      %c10_i32_294 = arith.constant 10 : i32
      %c0_i32_295 = arith.constant 0 : i32
      %459 = tpu.memref_slice %arg2[%458, %c0_i32_295] : memref<512x256xf32, #tpu.memory_space<any>> -> memref<1x256xf32, #tpu.memory_space<any>>
      %c10_i32_296 = arith.constant 10 : i32
      %c0_i32_297 = arith.constant 0 : i32
      %460 = tpu.memref_slice %arg4[%453, %c10_i32_296, %c0_i32_297] : memref<2x32x256xf32, #tpu.memory_space<vmem>> -> memref<1x1x256xf32, #tpu.memory_space<vmem>>
      %461 = tpu.memref_squeeze %460 : memref<1x1x256xf32, #tpu.memory_space<vmem>> -> memref<1x256xf32, #tpu.memory_space<vmem>>
      %462 = tpu.memref_slice %arg5[%453, %c10_i32_294] : memref<2x32x!tpu.dma_semaphore, #tpu.memory_space<semaphore_mem>> -> memref<1x1x!tpu.dma_semaphore, #tpu.memory_space<semaphore_mem>>
      %463 = tpu.memref_squeeze %462 : memref<1x1x!tpu.dma_semaphore, #tpu.memory_space<semaphore_mem>> -> memref<!tpu.dma_semaphore, #tpu.memory_space<semaphore_mem>>
      tpu.enqueue_dma source(%459 : memref<1x256xf32, #tpu.memory_space<any>>) target(%461 : memref<1x256xf32, #tpu.memory_space<vmem>>) target_semaphore(%463 : memref<!tpu.dma_semaphore, #tpu.memory_space<semaphore_mem>>)
      %c1_i32_298 = arith.constant 1 : i32
      %464 = arith.addi %arg0, %c1_i32_298 : i32
      %c1_i32_299 = arith.constant 1 : i32
      %465 = arith.subi %c1_i32_299, %0 : i32
      %c32_i32_300 = arith.constant 32 : i32
      %466 = arith.muli %464, %c32_i32_300 : i32
      %c11_i32_301 = arith.constant 11 : i32
      %467 = arith.addi %466, %c11_i32_301 : i32
      %c39_i32_302 = arith.constant 39 : i32
      %468 = arith.minsi %467, %c39_i32_302 : i32
      %469 = arith.index_cast %468 : i32 to index
      %470 = memref.load %arg1[%469] : memref<40xi32, #tpu.memory_space<smem>>
      %c11_i32_303 = arith.constant 11 : i32
      %c0_i32_304 = arith.constant 0 : i32
      %471 = tpu.memref_slice %arg2[%470, %c0_i32_304] : memref<512x256xf32, #tpu.memory_space<any>> -> memref<1x256xf32, #tpu.memory_space<any>>
      %c11_i32_305 = arith.constant 11 : i32
      %c0_i32_306 = arith.constant 0 : i32
      %472 = tpu.memref_slice %arg4[%465, %c11_i32_305, %c0_i32_306] : memref<2x32x256xf32, #tpu.memory_space<vmem>> -> memref<1x1x256xf32, #tpu.memory_space<vmem>>
      %473 = tpu.memref_squeeze %472 : memref<1x1x256xf32, #tpu.memory_space<vmem>> -> memref<1x256xf32, #tpu.memory_space<vmem>>
      %474 = tpu.memref_slice %arg5[%465, %c11_i32_303] : memref<2x32x!tpu.dma_semaphore, #tpu.memory_space<semaphore_mem>> -> memref<1x1x!tpu.dma_semaphore, #tpu.memory_space<semaphore_mem>>
      %475 = tpu.memref_squeeze %474 : memref<1x1x!tpu.dma_semaphore, #tpu.memory_space<semaphore_mem>> -> memref<!tpu.dma_semaphore, #tpu.memory_space<semaphore_mem>>
      tpu.enqueue_dma source(%471 : memref<1x256xf32, #tpu.memory_space<any>>) target(%473 : memref<1x256xf32, #tpu.memory_space<vmem>>) target_semaphore(%475 : memref<!tpu.dma_semaphore, #tpu.memory_space<semaphore_mem>>)
      %c1_i32_307 = arith.constant 1 : i32
      %476 = arith.addi %arg0, %c1_i32_307 : i32
      %c1_i32_308 = arith.constant 1 : i32
      %477 = arith.subi %c1_i32_308, %0 : i32
      %c32_i32_309 = arith.constant 32 : i32
      %478 = arith.muli %476, %c32_i32_309 : i32
      %c12_i32_310 = arith.constant 12 : i32
      %479 = arith.addi %478, %c12_i32_310 : i32
      %c39_i32_311 = arith.constant 39 : i32
      %480 = arith.minsi %479, %c39_i32_311 : i32
      %481 = arith.index_cast %480 : i32 to index
      %482 = memref.load %arg1[%481] : memref<40xi32, #tpu.memory_space<smem>>
      %c12_i32_312 = arith.constant 12 : i32
      %c0_i32_313 = arith.constant 0 : i32
      %483 = tpu.memref_slice %arg2[%482, %c0_i32_313] : memref<512x256xf32, #tpu.memory_space<any>> -> memref<1x256xf32, #tpu.memory_space<any>>
      %c12_i32_314 = arith.constant 12 : i32
      %c0_i32_315 = arith.constant 0 : i32
      %484 = tpu.memref_slice %arg4[%477, %c12_i32_314, %c0_i32_315] : memref<2x32x256xf32, #tpu.memory_space<vmem>> -> memref<1x1x256xf32, #tpu.memory_space<vmem>>
      %485 = tpu.memref_squeeze %484 : memref<1x1x256xf32, #tpu.memory_space<vmem>> -> memref<1x256xf32, #tpu.memory_space<vmem>>
      %486 = tpu.memref_slice %arg5[%477, %c12_i32_312] : memref<2x32x!tpu.dma_semaphore, #tpu.memory_space<semaphore_mem>> -> memref<1x1x!tpu.dma_semaphore, #tpu.memory_space<semaphore_mem>>
      %487 = tpu.memref_squeeze %486 : memref<1x1x!tpu.dma_semaphore, #tpu.memory_space<semaphore_mem>> -> memref<!tpu.dma_semaphore, #tpu.memory_space<semaphore_mem>>
      tpu.enqueue_dma source(%483 : memref<1x256xf32, #tpu.memory_space<any>>) target(%485 : memref<1x256xf32, #tpu.memory_space<vmem>>) target_semaphore(%487 : memref<!tpu.dma_semaphore, #tpu.memory_space<semaphore_mem>>)
      %c1_i32_316 = arith.constant 1 : i32
      %488 = arith.addi %arg0, %c1_i32_316 : i32
      %c1_i32_317 = arith.constant 1 : i32
      %489 = arith.subi %c1_i32_317, %0 : i32
      %c32_i32_318 = arith.constant 32 : i32
      %490 = arith.muli %488, %c32_i32_318 : i32
      %c13_i32_319 = arith.constant 13 : i32
      %491 = arith.addi %490, %c13_i32_319 : i32
      %c39_i32_320 = arith.constant 39 : i32
      %492 = arith.minsi %491, %c39_i32_320 : i32
      %493 = arith.index_cast %492 : i32 to index
      %494 = memref.load %arg1[%493] : memref<40xi32, #tpu.memory_space<smem>>
      %c13_i32_321 = arith.constant 13 : i32
      %c0_i32_322 = arith.constant 0 : i32
      %495 = tpu.memref_slice %arg2[%494, %c0_i32_322] : memref<512x256xf32, #tpu.memory_space<any>> -> memref<1x256xf32, #tpu.memory_space<any>>
      %c13_i32_323 = arith.constant 13 : i32
      %c0_i32_324 = arith.constant 0 : i32
      %496 = tpu.memref_slice %arg4[%489, %c13_i32_323, %c0_i32_324] : memref<2x32x256xf32, #tpu.memory_space<vmem>> -> memref<1x1x256xf32, #tpu.memory_space<vmem>>
      %497 = tpu.memref_squeeze %496 : memref<1x1x256xf32, #tpu.memory_space<vmem>> -> memref<1x256xf32, #tpu.memory_space<vmem>>
      %498 = tpu.memref_slice %arg5[%489, %c13_i32_321] : memref<2x32x!tpu.dma_semaphore, #tpu.memory_space<semaphore_mem>> -> memref<1x1x!tpu.dma_semaphore, #tpu.memory_space<semaphore_mem>>
      %499 = tpu.memref_squeeze %498 : memref<1x1x!tpu.dma_semaphore, #tpu.memory_space<semaphore_mem>> -> memref<!tpu.dma_semaphore, #tpu.memory_space<semaphore_mem>>
      tpu.enqueue_dma source(%495 : memref<1x256xf32, #tpu.memory_space<any>>) target(%497 : memref<1x256xf32, #tpu.memory_space<vmem>>) target_semaphore(%499 : memref<!tpu.dma_semaphore, #tpu.memory_space<semaphore_mem>>)
      %c1_i32_325 = arith.constant 1 : i32
      %500 = arith.addi %arg0, %c1_i32_325 : i32
      %c1_i32_326 = arith.constant 1 : i32
      %501 = arith.subi %c1_i32_326, %0 : i32
      %c32_i32_327 = arith.constant 32 : i32
      %502 = arith.muli %500, %c32_i32_327 : i32
      %c14_i32_328 = arith.constant 14 : i32
      %503 = arith.addi %502, %c14_i32_328 : i32
      %c39_i32_329 = arith.constant 39 : i32
      %504 = arith.minsi %503, %c39_i32_329 : i32
      %505 = arith.index_cast %504 : i32 to index
      %506 = memref.load %arg1[%505] : memref<40xi32, #tpu.memory_space<smem>>
      %c14_i32_330 = arith.constant 14 : i32
      %c0_i32_331 = arith.constant 0 : i32
      %507 = tpu.memref_slice %arg2[%506, %c0_i32_331] : memref<512x256xf32, #tpu.memory_space<any>> -> memref<1x256xf32, #tpu.memory_space<any>>
      %c14_i32_332 = arith.constant 14 : i32
      %c0_i32_333 = arith.constant 0 : i32
      %508 = tpu.memref_slice %arg4[%501, %c14_i32_332, %c0_i32_333] : memref<2x32x256xf32, #tpu.memory_space<vmem>> -> memref<1x1x256xf32, #tpu.memory_space<vmem>>
      %509 = tpu.memref_squeeze %508 : memref<1x1x256xf32, #tpu.memory_space<vmem>> -> memref<1x256xf32, #tpu.memory_space<vmem>>
      %510 = tpu.memref_slice %arg5[%501, %c14_i32_330] : memref<2x32x!tpu.dma_semaphore, #tpu.memory_space<semaphore_mem>> -> memref<1x1x!tpu.dma_semaphore, #tpu.memory_space<semaphore_mem>>
      %511 = tpu.memref_squeeze %510 : memref<1x1x!tpu.dma_semaphore, #tpu.memory_space<semaphore_mem>> -> memref<!tpu.dma_semaphore, #tpu.memory_space<semaphore_mem>>
      tpu.enqueue_dma source(%507 : memref<1x256xf32, #tpu.memory_space<any>>) target(%509 : memref<1x256xf32, #tpu.memory_space<vmem>>) target_semaphore(%511 : memref<!tpu.dma_semaphore, #tpu.memory_space<semaphore_mem>>)
      %c1_i32_334 = arith.constant 1 : i32
      %512 = arith.addi %arg0, %c1_i32_334 : i32
      %c1_i32_335 = arith.constant 1 : i32
      %513 = arith.subi %c1_i32_335, %0 : i32
      %c32_i32_336 = arith.constant 32 : i32
      %514 = arith.muli %512, %c32_i32_336 : i32
      %c15_i32_337 = arith.constant 15 : i32
      %515 = arith.addi %514, %c15_i32_337 : i32
      %c39_i32_338 = arith.constant 39 : i32
      %516 = arith.minsi %515, %c39_i32_338 : i32
      %517 = arith.index_cast %516 : i32 to index
      %518 = memref.load %arg1[%517] : memref<40xi32, #tpu.memory_space<smem>>
      %c15_i32_339 = arith.constant 15 : i32
      %c0_i32_340 = arith.constant 0 : i32
      %519 = tpu.memref_slice %arg2[%518, %c0_i32_340] : memref<512x256xf32, #tpu.memory_space<any>> -> memref<1x256xf32, #tpu.memory_space<any>>
      %c15_i32_341 = arith.constant 15 : i32
      %c0_i32_342 = arith.constant 0 : i32
      %520 = tpu.memref_slice %arg4[%513, %c15_i32_341, %c0_i32_342] : memref<2x32x256xf32, #tpu.memory_space<vmem>> -> memref<1x1x256xf32, #tpu.memory_space<vmem>>
      %521 = tpu.memref_squeeze %520 : memref<1x1x256xf32, #tpu.memory_space<vmem>> -> memref<1x256xf32, #tpu.memory_space<vmem>>
      %522 = tpu.memref_slice %arg5[%513, %c15_i32_339] : memref<2x32x!tpu.dma_semaphore, #tpu.memory_space<semaphore_mem>> -> memref<1x1x!tpu.dma_semaphore, #tpu.memory_space<semaphore_mem>>
      %523 = tpu.memref_squeeze %522 : memref<1x1x!tpu.dma_semaphore, #tpu.memory_space<semaphore_mem>> -> memref<!tpu.dma_semaphore, #tpu.memory_space<semaphore_mem>>
      tpu.enqueue_dma source(%519 : memref<1x256xf32, #tpu.memory_space<any>>) target(%521 : memref<1x256xf32, #tpu.memory_space<vmem>>) target_semaphore(%523 : memref<!tpu.dma_semaphore, #tpu.memory_space<semaphore_mem>>)
      %c1_i32_343 = arith.constant 1 : i32
      %524 = arith.addi %arg0, %c1_i32_343 : i32
      %c1_i32_344 = arith.constant 1 : i32
      %525 = arith.subi %c1_i32_344, %0 : i32
      %c32_i32_345 = arith.constant 32 : i32
      %526 = arith.muli %524, %c32_i32_345 : i32
      %c16_i32_346 = arith.constant 16 : i32
      %527 = arith.addi %526, %c16_i32_346 : i32
      %c39_i32_347 = arith.constant 39 : i32
      %528 = arith.minsi %527, %c39_i32_347 : i32
      %529 = arith.index_cast %528 : i32 to index
      %530 = memref.load %arg1[%529] : memref<40xi32, #tpu.memory_space<smem>>
      %c16_i32_348 = arith.constant 16 : i32
      %c0_i32_349 = arith.constant 0 : i32
      %531 = tpu.memref_slice %arg2[%530, %c0_i32_349] : memref<512x256xf32, #tpu.memory_space<any>> -> memref<1x256xf32, #tpu.memory_space<any>>
      %c16_i32_350 = arith.constant 16 : i32
      %c0_i32_351 = arith.constant 0 : i32
      %532 = tpu.memref_slice %arg4[%525, %c16_i32_350, %c0_i32_351] : memref<2x32x256xf32, #tpu.memory_space<vmem>> -> memref<1x1x256xf32, #tpu.memory_space<vmem>>
      %533 = tpu.memref_squeeze %532 : memref<1x1x256xf32, #tpu.memory_space<vmem>> -> memref<1x256xf32, #tpu.memory_space<vmem>>
      %534 = tpu.memref_slice %arg5[%525, %c16_i32_348] : memref<2x32x!tpu.dma_semaphore, #tpu.memory_space<semaphore_mem>> -> memref<1x1x!tpu.dma_semaphore, #tpu.memory_space<semaphore_mem>>
      %535 = tpu.memref_squeeze %534 : memref<1x1x!tpu.dma_semaphore, #tpu.memory_space<semaphore_mem>> -> memref<!tpu.dma_semaphore, #tpu.memory_space<semaphore_mem>>
      tpu.enqueue_dma source(%531 : memref<1x256xf32, #tpu.memory_space<any>>) target(%533 : memref<1x256xf32, #tpu.memory_space<vmem>>) target_semaphore(%535 : memref<!tpu.dma_semaphore, #tpu.memory_space<semaphore_mem>>)
      %c1_i32_352 = arith.constant 1 : i32
      %536 = arith.addi %arg0, %c1_i32_352 : i32
      %c1_i32_353 = arith.constant 1 : i32
      %537 = arith.subi %c1_i32_353, %0 : i32
      %c32_i32_354 = arith.constant 32 : i32
      %538 = arith.muli %536, %c32_i32_354 : i32
      %c17_i32_355 = arith.constant 17 : i32
      %539 = arith.addi %538, %c17_i32_355 : i32
      %c39_i32_356 = arith.constant 39 : i32
      %540 = arith.minsi %539, %c39_i32_356 : i32
      %541 = arith.index_cast %540 : i32 to index
      %542 = memref.load %arg1[%541] : memref<40xi32, #tpu.memory_space<smem>>
      %c17_i32_357 = arith.constant 17 : i32
      %c0_i32_358 = arith.constant 0 : i32
      %543 = tpu.memref_slice %arg2[%542, %c0_i32_358] : memref<512x256xf32, #tpu.memory_space<any>> -> memref<1x256xf32, #tpu.memory_space<any>>
      %c17_i32_359 = arith.constant 17 : i32
      %c0_i32_360 = arith.constant 0 : i32
      %544 = tpu.memref_slice %arg4[%537, %c17_i32_359, %c0_i32_360] : memref<2x32x256xf32, #tpu.memory_space<vmem>> -> memref<1x1x256xf32, #tpu.memory_space<vmem>>
      %545 = tpu.memref_squeeze %544 : memref<1x1x256xf32, #tpu.memory_space<vmem>> -> memref<1x256xf32, #tpu.memory_space<vmem>>
      %546 = tpu.memref_slice %arg5[%537, %c17_i32_357] : memref<2x32x!tpu.dma_semaphore, #tpu.memory_space<semaphore_mem>> -> memref<1x1x!tpu.dma_semaphore, #tpu.memory_space<semaphore_mem>>
      %547 = tpu.memref_squeeze %546 : memref<1x1x!tpu.dma_semaphore, #tpu.memory_space<semaphore_mem>> -> memref<!tpu.dma_semaphore, #tpu.memory_space<semaphore_mem>>
      tpu.enqueue_dma source(%543 : memref<1x256xf32, #tpu.memory_space<any>>) target(%545 : memref<1x256xf32, #tpu.memory_space<vmem>>) target_semaphore(%547 : memref<!tpu.dma_semaphore, #tpu.memory_space<semaphore_mem>>)
      %c1_i32_361 = arith.constant 1 : i32
      %548 = arith.addi %arg0, %c1_i32_361 : i32
      %c1_i32_362 = arith.constant 1 : i32
      %549 = arith.subi %c1_i32_362, %0 : i32
      %c32_i32_363 = arith.constant 32 : i32
      %550 = arith.muli %548, %c32_i32_363 : i32
      %c18_i32_364 = arith.constant 18 : i32
      %551 = arith.addi %550, %c18_i32_364 : i32
      %c39_i32_365 = arith.constant 39 : i32
      %552 = arith.minsi %551, %c39_i32_365 : i32
      %553 = arith.index_cast %552 : i32 to index
      %554 = memref.load %arg1[%553] : memref<40xi32, #tpu.memory_space<smem>>
      %c18_i32_366 = arith.constant 18 : i32
      %c0_i32_367 = arith.constant 0 : i32
      %555 = tpu.memref_slice %arg2[%554, %c0_i32_367] : memref<512x256xf32, #tpu.memory_space<any>> -> memref<1x256xf32, #tpu.memory_space<any>>
      %c18_i32_368 = arith.constant 18 : i32
      %c0_i32_369 = arith.constant 0 : i32
      %556 = tpu.memref_slice %arg4[%549, %c18_i32_368, %c0_i32_369] : memref<2x32x256xf32, #tpu.memory_space<vmem>> -> memref<1x1x256xf32, #tpu.memory_space<vmem>>
      %557 = tpu.memref_squeeze %556 : memref<1x1x256xf32, #tpu.memory_space<vmem>> -> memref<1x256xf32, #tpu.memory_space<vmem>>
      %558 = tpu.memref_slice %arg5[%549, %c18_i32_366] : memref<2x32x!tpu.dma_semaphore, #tpu.memory_space<semaphore_mem>> -> memref<1x1x!tpu.dma_semaphore, #tpu.memory_space<semaphore_mem>>
      %559 = tpu.memref_squeeze %558 : memref<1x1x!tpu.dma_semaphore, #tpu.memory_space<semaphore_mem>> -> memref<!tpu.dma_semaphore, #tpu.memory_space<semaphore_mem>>
      tpu.enqueue_dma source(%555 : memref<1x256xf32, #tpu.memory_space<any>>) target(%557 : memref<1x256xf32, #tpu.memory_space<vmem>>) target_semaphore(%559 : memref<!tpu.dma_semaphore, #tpu.memory_space<semaphore_mem>>)
      %c1_i32_370 = arith.constant 1 : i32
      %560 = arith.addi %arg0, %c1_i32_370 : i32
      %c1_i32_371 = arith.constant 1 : i32
      %561 = arith.subi %c1_i32_371, %0 : i32
      %c32_i32_372 = arith.constant 32 : i32
      %562 = arith.muli %560, %c32_i32_372 : i32
      %c19_i32_373 = arith.constant 19 : i32
      %563 = arith.addi %562, %c19_i32_373 : i32
      %c39_i32_374 = arith.constant 39 : i32
      %564 = arith.minsi %563, %c39_i32_374 : i32
      %565 = arith.index_cast %564 : i32 to index
      %566 = memref.load %arg1[%565] : memref<40xi32, #tpu.memory_space<smem>>
      %c19_i32_375 = arith.constant 19 : i32
      %c0_i32_376 = arith.constant 0 : i32
      %567 = tpu.memref_slice %arg2[%566, %c0_i32_376] : memref<512x256xf32, #tpu.memory_space<any>> -> memref<1x256xf32, #tpu.memory_space<any>>
      %c19_i32_377 = arith.constant 19 : i32
      %c0_i32_378 = arith.constant 0 : i32
      %568 = tpu.memref_slice %arg4[%561, %c19_i32_377, %c0_i32_378] : memref<2x32x256xf32, #tpu.memory_space<vmem>> -> memref<1x1x256xf32, #tpu.memory_space<vmem>>
      %569 = tpu.memref_squeeze %568 : memref<1x1x256xf32, #tpu.memory_space<vmem>> -> memref<1x256xf32, #tpu.memory_space<vmem>>
      %570 = tpu.memref_slice %arg5[%561, %c19_i32_375] : memref<2x32x!tpu.dma_semaphore, #tpu.memory_space<semaphore_mem>> -> memref<1x1x!tpu.dma_semaphore, #tpu.memory_space<semaphore_mem>>
      %571 = tpu.memref_squeeze %570 : memref<1x1x!tpu.dma_semaphore, #tpu.memory_space<semaphore_mem>> -> memref<!tpu.dma_semaphore, #tpu.memory_space<semaphore_mem>>
      tpu.enqueue_dma source(%567 : memref<1x256xf32, #tpu.memory_space<any>>) target(%569 : memref<1x256xf32, #tpu.memory_space<vmem>>) target_semaphore(%571 : memref<!tpu.dma_semaphore, #tpu.memory_space<semaphore_mem>>)
      %c1_i32_379 = arith.constant 1 : i32
      %572 = arith.addi %arg0, %c1_i32_379 : i32
      %c1_i32_380 = arith.constant 1 : i32
      %573 = arith.subi %c1_i32_380, %0 : i32
      %c32_i32_381 = arith.constant 32 : i32
      %574 = arith.muli %572, %c32_i32_381 : i32
      %c20_i32_382 = arith.constant 20 : i32
      %575 = arith.addi %574, %c20_i32_382 : i32
      %c39_i32_383 = arith.constant 39 : i32
      %576 = arith.minsi %575, %c39_i32_383 : i32
      %577 = arith.index_cast %576 : i32 to index
      %578 = memref.load %arg1[%577] : memref<40xi32, #tpu.memory_space<smem>>
      %c20_i32_384 = arith.constant 20 : i32
      %c0_i32_385 = arith.constant 0 : i32
      %579 = tpu.memref_slice %arg2[%578, %c0_i32_385] : memref<512x256xf32, #tpu.memory_space<any>> -> memref<1x256xf32, #tpu.memory_space<any>>
      %c20_i32_386 = arith.constant 20 : i32
      %c0_i32_387 = arith.constant 0 : i32
      %580 = tpu.memref_slice %arg4[%573, %c20_i32_386, %c0_i32_387] : memref<2x32x256xf32, #tpu.memory_space<vmem>> -> memref<1x1x256xf32, #tpu.memory_space<vmem>>
      %581 = tpu.memref_squeeze %580 : memref<1x1x256xf32, #tpu.memory_space<vmem>> -> memref<1x256xf32, #tpu.memory_space<vmem>>
      %582 = tpu.memref_slice %arg5[%573, %c20_i32_384] : memref<2x32x!tpu.dma_semaphore, #tpu.memory_space<semaphore_mem>> -> memref<1x1x!tpu.dma_semaphore, #tpu.memory_space<semaphore_mem>>
      %583 = tpu.memref_squeeze %582 : memref<1x1x!tpu.dma_semaphore, #tpu.memory_space<semaphore_mem>> -> memref<!tpu.dma_semaphore, #tpu.memory_space<semaphore_mem>>
      tpu.enqueue_dma source(%579 : memref<1x256xf32, #tpu.memory_space<any>>) target(%581 : memref<1x256xf32, #tpu.memory_space<vmem>>) target_semaphore(%583 : memref<!tpu.dma_semaphore, #tpu.memory_space<semaphore_mem>>)
      %c1_i32_388 = arith.constant 1 : i32
      %584 = arith.addi %arg0, %c1_i32_388 : i32
      %c1_i32_389 = arith.constant 1 : i32
      %585 = arith.subi %c1_i32_389, %0 : i32
      %c32_i32_390 = arith.constant 32 : i32
      %586 = arith.muli %584, %c32_i32_390 : i32
      %c21_i32_391 = arith.constant 21 : i32
      %587 = arith.addi %586, %c21_i32_391 : i32
      %c39_i32_392 = arith.constant 39 : i32
      %588 = arith.minsi %587, %c39_i32_392 : i32
      %589 = arith.index_cast %588 : i32 to index
      %590 = memref.load %arg1[%589] : memref<40xi32, #tpu.memory_space<smem>>
      %c21_i32_393 = arith.constant 21 : i32
      %c0_i32_394 = arith.constant 0 : i32
      %591 = tpu.memref_slice %arg2[%590, %c0_i32_394] : memref<512x256xf32, #tpu.memory_space<any>> -> memref<1x256xf32, #tpu.memory_space<any>>
      %c21_i32_395 = arith.constant 21 : i32
      %c0_i32_396 = arith.constant 0 : i32
      %592 = tpu.memref_slice %arg4[%585, %c21_i32_395, %c0_i32_396] : memref<2x32x256xf32, #tpu.memory_space<vmem>> -> memref<1x1x256xf32, #tpu.memory_space<vmem>>
      %593 = tpu.memref_squeeze %592 : memref<1x1x256xf32, #tpu.memory_space<vmem>> -> memref<1x256xf32, #tpu.memory_space<vmem>>
      %594 = tpu.memref_slice %arg5[%585, %c21_i32_393] : memref<2x32x!tpu.dma_semaphore, #tpu.memory_space<semaphore_mem>> -> memref<1x1x!tpu.dma_semaphore, #tpu.memory_space<semaphore_mem>>
      %595 = tpu.memref_squeeze %594 : memref<1x1x!tpu.dma_semaphore, #tpu.memory_space<semaphore_mem>> -> memref<!tpu.dma_semaphore, #tpu.memory_space<semaphore_mem>>
      tpu.enqueue_dma source(%591 : memref<1x256xf32, #tpu.memory_space<any>>) target(%593 : memref<1x256xf32, #tpu.memory_space<vmem>>) target_semaphore(%595 : memref<!tpu.dma_semaphore, #tpu.memory_space<semaphore_mem>>)
      %c1_i32_397 = arith.constant 1 : i32
      %596 = arith.addi %arg0, %c1_i32_397 : i32
      %c1_i32_398 = arith.constant 1 : i32
      %597 = arith.subi %c1_i32_398, %0 : i32
      %c32_i32_399 = arith.constant 32 : i32
      %598 = arith.muli %596, %c32_i32_399 : i32
      %c22_i32_400 = arith.constant 22 : i32
      %599 = arith.addi %598, %c22_i32_400 : i32
      %c39_i32_401 = arith.constant 39 : i32
      %600 = arith.minsi %599, %c39_i32_401 : i32
      %601 = arith.index_cast %600 : i32 to index
      %602 = memref.load %arg1[%601] : memref<40xi32, #tpu.memory_space<smem>>
      %c22_i32_402 = arith.constant 22 : i32
      %c0_i32_403 = arith.constant 0 : i32
      %603 = tpu.memref_slice %arg2[%602, %c0_i32_403] : memref<512x256xf32, #tpu.memory_space<any>> -> memref<1x256xf32, #tpu.memory_space<any>>
      %c22_i32_404 = arith.constant 22 : i32
      %c0_i32_405 = arith.constant 0 : i32
      %604 = tpu.memref_slice %arg4[%597, %c22_i32_404, %c0_i32_405] : memref<2x32x256xf32, #tpu.memory_space<vmem>> -> memref<1x1x256xf32, #tpu.memory_space<vmem>>
      %605 = tpu.memref_squeeze %604 : memref<1x1x256xf32, #tpu.memory_space<vmem>> -> memref<1x256xf32, #tpu.memory_space<vmem>>
      %606 = tpu.memref_slice %arg5[%597, %c22_i32_402] : memref<2x32x!tpu.dma_semaphore, #tpu.memory_space<semaphore_mem>> -> memref<1x1x!tpu.dma_semaphore, #tpu.memory_space<semaphore_mem>>
      %607 = tpu.memref_squeeze %606 : memref<1x1x!tpu.dma_semaphore, #tpu.memory_space<semaphore_mem>> -> memref<!tpu.dma_semaphore, #tpu.memory_space<semaphore_mem>>
      tpu.enqueue_dma source(%603 : memref<1x256xf32, #tpu.memory_space<any>>) target(%605 : memref<1x256xf32, #tpu.memory_space<vmem>>) target_semaphore(%607 : memref<!tpu.dma_semaphore, #tpu.memory_space<semaphore_mem>>)
      %c1_i32_406 = arith.constant 1 : i32
      %608 = arith.addi %arg0, %c1_i32_406 : i32
      %c1_i32_407 = arith.constant 1 : i32
      %609 = arith.subi %c1_i32_407, %0 : i32
      %c32_i32_408 = arith.constant 32 : i32
      %610 = arith.muli %608, %c32_i32_408 : i32
      %c23_i32_409 = arith.constant 23 : i32
      %611 = arith.addi %610, %c23_i32_409 : i32
      %c39_i32_410 = arith.constant 39 : i32
      %612 = arith.minsi %611, %c39_i32_410 : i32
      %613 = arith.index_cast %612 : i32 to index
      %614 = memref.load %arg1[%613] : memref<40xi32, #tpu.memory_space<smem>>
      %c23_i32_411 = arith.constant 23 : i32
      %c0_i32_412 = arith.constant 0 : i32
      %615 = tpu.memref_slice %arg2[%614, %c0_i32_412] : memref<512x256xf32, #tpu.memory_space<any>> -> memref<1x256xf32, #tpu.memory_space<any>>
      %c23_i32_413 = arith.constant 23 : i32
      %c0_i32_414 = arith.constant 0 : i32
      %616 = tpu.memref_slice %arg4[%609, %c23_i32_413, %c0_i32_414] : memref<2x32x256xf32, #tpu.memory_space<vmem>> -> memref<1x1x256xf32, #tpu.memory_space<vmem>>
      %617 = tpu.memref_squeeze %616 : memref<1x1x256xf32, #tpu.memory_space<vmem>> -> memref<1x256xf32, #tpu.memory_space<vmem>>
      %618 = tpu.memref_slice %arg5[%609, %c23_i32_411] : memref<2x32x!tpu.dma_semaphore, #tpu.memory_space<semaphore_mem>> -> memref<1x1x!tpu.dma_semaphore, #tpu.memory_space<semaphore_mem>>
      %619 = tpu.memref_squeeze %618 : memref<1x1x!tpu.dma_semaphore, #tpu.memory_space<semaphore_mem>> -> memref<!tpu.dma_semaphore, #tpu.memory_space<semaphore_mem>>
      tpu.enqueue_dma source(%615 : memref<1x256xf32, #tpu.memory_space<any>>) target(%617 : memref<1x256xf32, #tpu.memory_space<vmem>>) target_semaphore(%619 : memref<!tpu.dma_semaphore, #tpu.memory_space<semaphore_mem>>)
      %c1_i32_415 = arith.constant 1 : i32
      %620 = arith.addi %arg0, %c1_i32_415 : i32
      %c1_i32_416 = arith.constant 1 : i32
      %621 = arith.subi %c1_i32_416, %0 : i32
      %c32_i32_417 = arith.constant 32 : i32
      %622 = arith.muli %620, %c32_i32_417 : i32
      %c24_i32_418 = arith.constant 24 : i32
      %623 = arith.addi %622, %c24_i32_418 : i32
      %c39_i32_419 = arith.constant 39 : i32
      %624 = arith.minsi %623, %c39_i32_419 : i32
      %625 = arith.index_cast %624 : i32 to index
      %626 = memref.load %arg1[%625] : memref<40xi32, #tpu.memory_space<smem>>
      %c24_i32_420 = arith.constant 24 : i32
      %c0_i32_421 = arith.constant 0 : i32
      %627 = tpu.memref_slice %arg2[%626, %c0_i32_421] : memref<512x256xf32, #tpu.memory_space<any>> -> memref<1x256xf32, #tpu.memory_space<any>>
      %c24_i32_422 = arith.constant 24 : i32
      %c0_i32_423 = arith.constant 0 : i32
      %628 = tpu.memref_slice %arg4[%621, %c24_i32_422, %c0_i32_423] : memref<2x32x256xf32, #tpu.memory_space<vmem>> -> memref<1x1x256xf32, #tpu.memory_space<vmem>>
      %629 = tpu.memref_squeeze %628 : memref<1x1x256xf32, #tpu.memory_space<vmem>> -> memref<1x256xf32, #tpu.memory_space<vmem>>
      %630 = tpu.memref_slice %arg5[%621, %c24_i32_420] : memref<2x32x!tpu.dma_semaphore, #tpu.memory_space<semaphore_mem>> -> memref<1x1x!tpu.dma_semaphore, #tpu.memory_space<semaphore_mem>>
      %631 = tpu.memref_squeeze %630 : memref<1x1x!tpu.dma_semaphore, #tpu.memory_space<semaphore_mem>> -> memref<!tpu.dma_semaphore, #tpu.memory_space<semaphore_mem>>
      tpu.enqueue_dma source(%627 : memref<1x256xf32, #tpu.memory_space<any>>) target(%629 : memref<1x256xf32, #tpu.memory_space<vmem>>) target_semaphore(%631 : memref<!tpu.dma_semaphore, #tpu.memory_space<semaphore_mem>>)
      %c1_i32_424 = arith.constant 1 : i32
      %632 = arith.addi %arg0, %c1_i32_424 : i32
      %c1_i32_425 = arith.constant 1 : i32
      %633 = arith.subi %c1_i32_425, %0 : i32
      %c32_i32_426 = arith.constant 32 : i32
      %634 = arith.muli %632, %c32_i32_426 : i32
      %c25_i32_427 = arith.constant 25 : i32
      %635 = arith.addi %634, %c25_i32_427 : i32
      %c39_i32_428 = arith.constant 39 : i32
      %636 = arith.minsi %635, %c39_i32_428 : i32
      %637 = arith.index_cast %636 : i32 to index
      %638 = memref.load %arg1[%637] : memref<40xi32, #tpu.memory_space<smem>>
      %c25_i32_429 = arith.constant 25 : i32
      %c0_i32_430 = arith.constant 0 : i32
      %639 = tpu.memref_slice %arg2[%638, %c0_i32_430] : memref<512x256xf32, #tpu.memory_space<any>> -> memref<1x256xf32, #tpu.memory_space<any>>
      %c25_i32_431 = arith.constant 25 : i32
      %c0_i32_432 = arith.constant 0 : i32
      %640 = tpu.memref_slice %arg4[%633, %c25_i32_431, %c0_i32_432] : memref<2x32x256xf32, #tpu.memory_space<vmem>> -> memref<1x1x256xf32, #tpu.memory_space<vmem>>
      %641 = tpu.memref_squeeze %640 : memref<1x1x256xf32, #tpu.memory_space<vmem>> -> memref<1x256xf32, #tpu.memory_space<vmem>>
      %642 = tpu.memref_slice %arg5[%633, %c25_i32_429] : memref<2x32x!tpu.dma_semaphore, #tpu.memory_space<semaphore_mem>> -> memref<1x1x!tpu.dma_semaphore, #tpu.memory_space<semaphore_mem>>
      %643 = tpu.memref_squeeze %642 : memref<1x1x!tpu.dma_semaphore, #tpu.memory_space<semaphore_mem>> -> memref<!tpu.dma_semaphore, #tpu.memory_space<semaphore_mem>>
      tpu.enqueue_dma source(%639 : memref<1x256xf32, #tpu.memory_space<any>>) target(%641 : memref<1x256xf32, #tpu.memory_space<vmem>>) target_semaphore(%643 : memref<!tpu.dma_semaphore, #tpu.memory_space<semaphore_mem>>)
      %c1_i32_433 = arith.constant 1 : i32
      %644 = arith.addi %arg0, %c1_i32_433 : i32
      %c1_i32_434 = arith.constant 1 : i32
      %645 = arith.subi %c1_i32_434, %0 : i32
      %c32_i32_435 = arith.constant 32 : i32
      %646 = arith.muli %644, %c32_i32_435 : i32
      %c26_i32_436 = arith.constant 26 : i32
      %647 = arith.addi %646, %c26_i32_436 : i32
      %c39_i32_437 = arith.constant 39 : i32
      %648 = arith.minsi %647, %c39_i32_437 : i32
      %649 = arith.index_cast %648 : i32 to index
      %650 = memref.load %arg1[%649] : memref<40xi32, #tpu.memory_space<smem>>
      %c26_i32_438 = arith.constant 26 : i32
      %c0_i32_439 = arith.constant 0 : i32
      %651 = tpu.memref_slice %arg2[%650, %c0_i32_439] : memref<512x256xf32, #tpu.memory_space<any>> -> memref<1x256xf32, #tpu.memory_space<any>>
      %c26_i32_440 = arith.constant 26 : i32
      %c0_i32_441 = arith.constant 0 : i32
      %652 = tpu.memref_slice %arg4[%645, %c26_i32_440, %c0_i32_441] : memref<2x32x256xf32, #tpu.memory_space<vmem>> -> memref<1x1x256xf32, #tpu.memory_space<vmem>>
      %653 = tpu.memref_squeeze %652 : memref<1x1x256xf32, #tpu.memory_space<vmem>> -> memref<1x256xf32, #tpu.memory_space<vmem>>
      %654 = tpu.memref_slice %arg5[%645, %c26_i32_438] : memref<2x32x!tpu.dma_semaphore, #tpu.memory_space<semaphore_mem>> -> memref<1x1x!tpu.dma_semaphore, #tpu.memory_space<semaphore_mem>>
      %655 = tpu.memref_squeeze %654 : memref<1x1x!tpu.dma_semaphore, #tpu.memory_space<semaphore_mem>> -> memref<!tpu.dma_semaphore, #tpu.memory_space<semaphore_mem>>
      tpu.enqueue_dma source(%651 : memref<1x256xf32, #tpu.memory_space<any>>) target(%653 : memref<1x256xf32, #tpu.memory_space<vmem>>) target_semaphore(%655 : memref<!tpu.dma_semaphore, #tpu.memory_space<semaphore_mem>>)
      %c1_i32_442 = arith.constant 1 : i32
      %656 = arith.addi %arg0, %c1_i32_442 : i32
      %c1_i32_443 = arith.constant 1 : i32
      %657 = arith.subi %c1_i32_443, %0 : i32
      %c32_i32_444 = arith.constant 32 : i32
      %658 = arith.muli %656, %c32_i32_444 : i32
      %c27_i32_445 = arith.constant 27 : i32
      %659 = arith.addi %658, %c27_i32_445 : i32
      %c39_i32_446 = arith.constant 39 : i32
      %660 = arith.minsi %659, %c39_i32_446 : i32
      %661 = arith.index_cast %660 : i32 to index
      %662 = memref.load %arg1[%661] : memref<40xi32, #tpu.memory_space<smem>>
      %c27_i32_447 = arith.constant 27 : i32
      %c0_i32_448 = arith.constant 0 : i32
      %663 = tpu.memref_slice %arg2[%662, %c0_i32_448] : memref<512x256xf32, #tpu.memory_space<any>> -> memref<1x256xf32, #tpu.memory_space<any>>
      %c27_i32_449 = arith.constant 27 : i32
      %c0_i32_450 = arith.constant 0 : i32
      %664 = tpu.memref_slice %arg4[%657, %c27_i32_449, %c0_i32_450] : memref<2x32x256xf32, #tpu.memory_space<vmem>> -> memref<1x1x256xf32, #tpu.memory_space<vmem>>
      %665 = tpu.memref_squeeze %664 : memref<1x1x256xf32, #tpu.memory_space<vmem>> -> memref<1x256xf32, #tpu.memory_space<vmem>>
      %666 = tpu.memref_slice %arg5[%657, %c27_i32_447] : memref<2x32x!tpu.dma_semaphore, #tpu.memory_space<semaphore_mem>> -> memref<1x1x!tpu.dma_semaphore, #tpu.memory_space<semaphore_mem>>
      %667 = tpu.memref_squeeze %666 : memref<1x1x!tpu.dma_semaphore, #tpu.memory_space<semaphore_mem>> -> memref<!tpu.dma_semaphore, #tpu.memory_space<semaphore_mem>>
      tpu.enqueue_dma source(%663 : memref<1x256xf32, #tpu.memory_space<any>>) target(%665 : memref<1x256xf32, #tpu.memory_space<vmem>>) target_semaphore(%667 : memref<!tpu.dma_semaphore, #tpu.memory_space<semaphore_mem>>)
      %c1_i32_451 = arith.constant 1 : i32
      %668 = arith.addi %arg0, %c1_i32_451 : i32
      %c1_i32_452 = arith.constant 1 : i32
      %669 = arith.subi %c1_i32_452, %0 : i32
      %c32_i32_453 = arith.constant 32 : i32
      %670 = arith.muli %668, %c32_i32_453 : i32
      %c28_i32_454 = arith.constant 28 : i32
      %671 = arith.addi %670, %c28_i32_454 : i32
      %c39_i32_455 = arith.constant 39 : i32
      %672 = arith.minsi %671, %c39_i32_455 : i32
      %673 = arith.index_cast %672 : i32 to index
      %674 = memref.load %arg1[%673] : memref<40xi32, #tpu.memory_space<smem>>
      %c28_i32_456 = arith.constant 28 : i32
      %c0_i32_457 = arith.constant 0 : i32
      %675 = tpu.memref_slice %arg2[%674, %c0_i32_457] : memref<512x256xf32, #tpu.memory_space<any>> -> memref<1x256xf32, #tpu.memory_space<any>>
      %c28_i32_458 = arith.constant 28 : i32
      %c0_i32_459 = arith.constant 0 : i32
      %676 = tpu.memref_slice %arg4[%669, %c28_i32_458, %c0_i32_459] : memref<2x32x256xf32, #tpu.memory_space<vmem>> -> memref<1x1x256xf32, #tpu.memory_space<vmem>>
      %677 = tpu.memref_squeeze %676 : memref<1x1x256xf32, #tpu.memory_space<vmem>> -> memref<1x256xf32, #tpu.memory_space<vmem>>
      %678 = tpu.memref_slice %arg5[%669, %c28_i32_456] : memref<2x32x!tpu.dma_semaphore, #tpu.memory_space<semaphore_mem>> -> memref<1x1x!tpu.dma_semaphore, #tpu.memory_space<semaphore_mem>>
      %679 = tpu.memref_squeeze %678 : memref<1x1x!tpu.dma_semaphore, #tpu.memory_space<semaphore_mem>> -> memref<!tpu.dma_semaphore, #tpu.memory_space<semaphore_mem>>
      tpu.enqueue_dma source(%675 : memref<1x256xf32, #tpu.memory_space<any>>) target(%677 : memref<1x256xf32, #tpu.memory_space<vmem>>) target_semaphore(%679 : memref<!tpu.dma_semaphore, #tpu.memory_space<semaphore_mem>>)
      %c1_i32_460 = arith.constant 1 : i32
      %680 = arith.addi %arg0, %c1_i32_460 : i32
      %c1_i32_461 = arith.constant 1 : i32
      %681 = arith.subi %c1_i32_461, %0 : i32
      %c32_i32_462 = arith.constant 32 : i32
      %682 = arith.muli %680, %c32_i32_462 : i32
      %c29_i32_463 = arith.constant 29 : i32
      %683 = arith.addi %682, %c29_i32_463 : i32
      %c39_i32_464 = arith.constant 39 : i32
      %684 = arith.minsi %683, %c39_i32_464 : i32
      %685 = arith.index_cast %684 : i32 to index
      %686 = memref.load %arg1[%685] : memref<40xi32, #tpu.memory_space<smem>>
      %c29_i32_465 = arith.constant 29 : i32
      %c0_i32_466 = arith.constant 0 : i32
      %687 = tpu.memref_slice %arg2[%686, %c0_i32_466] : memref<512x256xf32, #tpu.memory_space<any>> -> memref<1x256xf32, #tpu.memory_space<any>>
      %c29_i32_467 = arith.constant 29 : i32
      %c0_i32_468 = arith.constant 0 : i32
      %688 = tpu.memref_slice %arg4[%681, %c29_i32_467, %c0_i32_468] : memref<2x32x256xf32, #tpu.memory_space<vmem>> -> memref<1x1x256xf32, #tpu.memory_space<vmem>>
      %689 = tpu.memref_squeeze %688 : memref<1x1x256xf32, #tpu.memory_space<vmem>> -> memref<1x256xf32, #tpu.memory_space<vmem>>
      %690 = tpu.memref_slice %arg5[%681, %c29_i32_465] : memref<2x32x!tpu.dma_semaphore, #tpu.memory_space<semaphore_mem>> -> memref<1x1x!tpu.dma_semaphore, #tpu.memory_space<semaphore_mem>>
      %691 = tpu.memref_squeeze %690 : memref<1x1x!tpu.dma_semaphore, #tpu.memory_space<semaphore_mem>> -> memref<!tpu.dma_semaphore, #tpu.memory_space<semaphore_mem>>
      tpu.enqueue_dma source(%687 : memref<1x256xf32, #tpu.memory_space<any>>) target(%689 : memref<1x256xf32, #tpu.memory_space<vmem>>) target_semaphore(%691 : memref<!tpu.dma_semaphore, #tpu.memory_space<semaphore_mem>>)
      %c1_i32_469 = arith.constant 1 : i32
      %692 = arith.addi %arg0, %c1_i32_469 : i32
      %c1_i32_470 = arith.constant 1 : i32
      %693 = arith.subi %c1_i32_470, %0 : i32
      %c32_i32_471 = arith.constant 32 : i32
      %694 = arith.muli %692, %c32_i32_471 : i32
      %c30_i32_472 = arith.constant 30 : i32
      %695 = arith.addi %694, %c30_i32_472 : i32
      %c39_i32_473 = arith.constant 39 : i32
      %696 = arith.minsi %695, %c39_i32_473 : i32
      %697 = arith.index_cast %696 : i32 to index
      %698 = memref.load %arg1[%697] : memref<40xi32, #tpu.memory_space<smem>>
      %c30_i32_474 = arith.constant 30 : i32
      %c0_i32_475 = arith.constant 0 : i32
      %699 = tpu.memref_slice %arg2[%698, %c0_i32_475] : memref<512x256xf32, #tpu.memory_space<any>> -> memref<1x256xf32, #tpu.memory_space<any>>
      %c30_i32_476 = arith.constant 30 : i32
      %c0_i32_477 = arith.constant 0 : i32
      %700 = tpu.memref_slice %arg4[%693, %c30_i32_476, %c0_i32_477] : memref<2x32x256xf32, #tpu.memory_space<vmem>> -> memref<1x1x256xf32, #tpu.memory_space<vmem>>
      %701 = tpu.memref_squeeze %700 : memref<1x1x256xf32, #tpu.memory_space<vmem>> -> memref<1x256xf32, #tpu.memory_space<vmem>>
      %702 = tpu.memref_slice %arg5[%693, %c30_i32_474] : memref<2x32x!tpu.dma_semaphore, #tpu.memory_space<semaphore_mem>> -> memref<1x1x!tpu.dma_semaphore, #tpu.memory_space<semaphore_mem>>
      %703 = tpu.memref_squeeze %702 : memref<1x1x!tpu.dma_semaphore, #tpu.memory_space<semaphore_mem>> -> memref<!tpu.dma_semaphore, #tpu.memory_space<semaphore_mem>>
      tpu.enqueue_dma source(%699 : memref<1x256xf32, #tpu.memory_space<any>>) target(%701 : memref<1x256xf32, #tpu.memory_space<vmem>>) target_semaphore(%703 : memref<!tpu.dma_semaphore, #tpu.memory_space<semaphore_mem>>)
      %c1_i32_478 = arith.constant 1 : i32
      %704 = arith.addi %arg0, %c1_i32_478 : i32
      %c1_i32_479 = arith.constant 1 : i32
      %705 = arith.subi %c1_i32_479, %0 : i32
      %c32_i32_480 = arith.constant 32 : i32
      %706 = arith.muli %704, %c32_i32_480 : i32
      %c31_i32_481 = arith.constant 31 : i32
      %707 = arith.addi %706, %c31_i32_481 : i32
      %c39_i32_482 = arith.constant 39 : i32
      %708 = arith.minsi %707, %c39_i32_482 : i32
      %709 = arith.index_cast %708 : i32 to index
      %710 = memref.load %arg1[%709] : memref<40xi32, #tpu.memory_space<smem>>
      %c31_i32_483 = arith.constant 31 : i32
      %c0_i32_484 = arith.constant 0 : i32
      %711 = tpu.memref_slice %arg2[%710, %c0_i32_484] : memref<512x256xf32, #tpu.memory_space<any>> -> memref<1x256xf32, #tpu.memory_space<any>>
      %c31_i32_485 = arith.constant 31 : i32
      %c0_i32_486 = arith.constant 0 : i32
      %712 = tpu.memref_slice %arg4[%705, %c31_i32_485, %c0_i32_486] : memref<2x32x256xf32, #tpu.memory_space<vmem>> -> memref<1x1x256xf32, #tpu.memory_space<vmem>>
      %713 = tpu.memref_squeeze %712 : memref<1x1x256xf32, #tpu.memory_space<vmem>> -> memref<1x256xf32, #tpu.memory_space<vmem>>
      %714 = tpu.memref_slice %arg5[%705, %c31_i32_483] : memref<2x32x!tpu.dma_semaphore, #tpu.memory_space<semaphore_mem>> -> memref<1x1x!tpu.dma_semaphore, #tpu.memory_space<semaphore_mem>>
      %715 = tpu.memref_squeeze %714 : memref<1x1x!tpu.dma_semaphore, #tpu.memory_space<semaphore_mem>> -> memref<!tpu.dma_semaphore, #tpu.memory_space<semaphore_mem>>
      tpu.enqueue_dma source(%711 : memref<1x256xf32, #tpu.memory_space<any>>) target(%713 : memref<1x256xf32, #tpu.memory_space<vmem>>) target_semaphore(%715 : memref<!tpu.dma_semaphore, #tpu.memory_space<semaphore_mem>>)
    } else {
    }
    %c32_i32 = arith.constant 32 : i32
    %8 = arith.muli %arg0, %c32_i32 : i32
    %c0_i32_3 = arith.constant 0 : i32
    %9 = arith.addi %8, %c0_i32_3 : i32
    %c39_i32 = arith.constant 39 : i32
    %10 = arith.minsi %9, %c39_i32 : i32
    %11 = arith.index_cast %10 : i32 to index
    %12 = memref.load %arg1[%11] : memref<40xi32, #tpu.memory_space<smem>>
    %c32_i32_4 = arith.constant 32 : i32
    %13 = arith.muli %arg0, %c32_i32_4 : i32
    %c1_i32_5 = arith.constant 1 : i32
    %14 = arith.addi %13, %c1_i32_5 : i32
    %c39_i32_6 = arith.constant 39 : i32
    %15 = arith.minsi %14, %c39_i32_6 : i32
    %16 = arith.index_cast %15 : i32 to index
    %17 = memref.load %arg1[%16] : memref<40xi32, #tpu.memory_space<smem>>
    %c32_i32_7 = arith.constant 32 : i32
    %18 = arith.muli %arg0, %c32_i32_7 : i32
    %c2_i32_8 = arith.constant 2 : i32
    %19 = arith.addi %18, %c2_i32_8 : i32
    %c39_i32_9 = arith.constant 39 : i32
    %20 = arith.minsi %19, %c39_i32_9 : i32
    %21 = arith.index_cast %20 : i32 to index
    %22 = memref.load %arg1[%21] : memref<40xi32, #tpu.memory_space<smem>>
    %c32_i32_10 = arith.constant 32 : i32
    %23 = arith.muli %arg0, %c32_i32_10 : i32
    %c3_i32 = arith.constant 3 : i32
    %24 = arith.addi %23, %c3_i32 : i32
    %c39_i32_11 = arith.constant 39 : i32
    %25 = arith.minsi %24, %c39_i32_11 : i32
    %26 = arith.index_cast %25 : i32 to index
    %27 = memref.load %arg1[%26] : memref<40xi32, #tpu.memory_space<smem>>
    %c32_i32_12 = arith.constant 32 : i32
    %28 = arith.muli %arg0, %c32_i32_12 : i32
    %c4_i32 = arith.constant 4 : i32
    %29 = arith.addi %28, %c4_i32 : i32
    %c39_i32_13 = arith.constant 39 : i32
    %30 = arith.minsi %29, %c39_i32_13 : i32
    %31 = arith.index_cast %30 : i32 to index
    %32 = memref.load %arg1[%31] : memref<40xi32, #tpu.memory_space<smem>>
    %c32_i32_14 = arith.constant 32 : i32
    %33 = arith.muli %arg0, %c32_i32_14 : i32
    %c5_i32 = arith.constant 5 : i32
    %34 = arith.addi %33, %c5_i32 : i32
    %c39_i32_15 = arith.constant 39 : i32
    %35 = arith.minsi %34, %c39_i32_15 : i32
    %36 = arith.index_cast %35 : i32 to index
    %37 = memref.load %arg1[%36] : memref<40xi32, #tpu.memory_space<smem>>
    %c32_i32_16 = arith.constant 32 : i32
    %38 = arith.muli %arg0, %c32_i32_16 : i32
    %c6_i32 = arith.constant 6 : i32
    %39 = arith.addi %38, %c6_i32 : i32
    %c39_i32_17 = arith.constant 39 : i32
    %40 = arith.minsi %39, %c39_i32_17 : i32
    %41 = arith.index_cast %40 : i32 to index
    %42 = memref.load %arg1[%41] : memref<40xi32, #tpu.memory_space<smem>>
    %c32_i32_18 = arith.constant 32 : i32
    %43 = arith.muli %arg0, %c32_i32_18 : i32
    %c7_i32 = arith.constant 7 : i32
    %44 = arith.addi %43, %c7_i32 : i32
    %c39_i32_19 = arith.constant 39 : i32
    %45 = arith.minsi %44, %c39_i32_19 : i32
    %46 = arith.index_cast %45 : i32 to index
    %47 = memref.load %arg1[%46] : memref<40xi32, #tpu.memory_space<smem>>
    %c32_i32_20 = arith.constant 32 : i32
    %48 = arith.muli %arg0, %c32_i32_20 : i32
    %c8_i32 = arith.constant 8 : i32
    %49 = arith.addi %48, %c8_i32 : i32
    %c39_i32_21 = arith.constant 39 : i32
    %50 = arith.minsi %49, %c39_i32_21 : i32
    %51 = arith.index_cast %50 : i32 to index
    %52 = memref.load %arg1[%51] : memref<40xi32, #tpu.memory_space<smem>>
    %c32_i32_22 = arith.constant 32 : i32
    %53 = arith.muli %arg0, %c32_i32_22 : i32
    %c9_i32 = arith.constant 9 : i32
    %54 = arith.addi %53, %c9_i32 : i32
    %c39_i32_23 = arith.constant 39 : i32
    %55 = arith.minsi %54, %c39_i32_23 : i32
    %56 = arith.index_cast %55 : i32 to index
    %57 = memref.load %arg1[%56] : memref<40xi32, #tpu.memory_space<smem>>
    %c32_i32_24 = arith.constant 32 : i32
    %58 = arith.muli %arg0, %c32_i32_24 : i32
    %c10_i32 = arith.constant 10 : i32
    %59 = arith.addi %58, %c10_i32 : i32
    %c39_i32_25 = arith.constant 39 : i32
    %60 = arith.minsi %59, %c39_i32_25 : i32
    %61 = arith.index_cast %60 : i32 to index
    %62 = memref.load %arg1[%61] : memref<40xi32, #tpu.memory_space<smem>>
    %c32_i32_26 = arith.constant 32 : i32
    %63 = arith.muli %arg0, %c32_i32_26 : i32
    %c11_i32 = arith.constant 11 : i32
    %64 = arith.addi %63, %c11_i32 : i32
    %c39_i32_27 = arith.constant 39 : i32
    %65 = arith.minsi %64, %c39_i32_27 : i32
    %66 = arith.index_cast %65 : i32 to index
    %67 = memref.load %arg1[%66] : memref<40xi32, #tpu.memory_space<smem>>
    %c32_i32_28 = arith.constant 32 : i32
    %68 = arith.muli %arg0, %c32_i32_28 : i32
    %c12_i32 = arith.constant 12 : i32
    %69 = arith.addi %68, %c12_i32 : i32
    %c39_i32_29 = arith.constant 39 : i32
    %70 = arith.minsi %69, %c39_i32_29 : i32
    %71 = arith.index_cast %70 : i32 to index
    %72 = memref.load %arg1[%71] : memref<40xi32, #tpu.memory_space<smem>>
    %c32_i32_30 = arith.constant 32 : i32
    %73 = arith.muli %arg0, %c32_i32_30 : i32
    %c13_i32 = arith.constant 13 : i32
    %74 = arith.addi %73, %c13_i32 : i32
    %c39_i32_31 = arith.constant 39 : i32
    %75 = arith.minsi %74, %c39_i32_31 : i32
    %76 = arith.index_cast %75 : i32 to index
    %77 = memref.load %arg1[%76] : memref<40xi32, #tpu.memory_space<smem>>
    %c32_i32_32 = arith.constant 32 : i32
    %78 = arith.muli %arg0, %c32_i32_32 : i32
    %c14_i32 = arith.constant 14 : i32
    %79 = arith.addi %78, %c14_i32 : i32
    %c39_i32_33 = arith.constant 39 : i32
    %80 = arith.minsi %79, %c39_i32_33 : i32
    %81 = arith.index_cast %80 : i32 to index
    %82 = memref.load %arg1[%81] : memref<40xi32, #tpu.memory_space<smem>>
    %c32_i32_34 = arith.constant 32 : i32
    %83 = arith.muli %arg0, %c32_i32_34 : i32
    %c15_i32 = arith.constant 15 : i32
    %84 = arith.addi %83, %c15_i32 : i32
    %c39_i32_35 = arith.constant 39 : i32
    %85 = arith.minsi %84, %c39_i32_35 : i32
    %86 = arith.index_cast %85 : i32 to index
    %87 = memref.load %arg1[%86] : memref<40xi32, #tpu.memory_space<smem>>
    %c32_i32_36 = arith.constant 32 : i32
    %88 = arith.muli %arg0, %c32_i32_36 : i32
    %c16_i32 = arith.constant 16 : i32
    %89 = arith.addi %88, %c16_i32 : i32
    %c39_i32_37 = arith.constant 39 : i32
    %90 = arith.minsi %89, %c39_i32_37 : i32
    %91 = arith.index_cast %90 : i32 to index
    %92 = memref.load %arg1[%91] : memref<40xi32, #tpu.memory_space<smem>>
    %c32_i32_38 = arith.constant 32 : i32
    %93 = arith.muli %arg0, %c32_i32_38 : i32
    %c17_i32 = arith.constant 17 : i32
    %94 = arith.addi %93, %c17_i32 : i32
    %c39_i32_39 = arith.constant 39 : i32
    %95 = arith.minsi %94, %c39_i32_39 : i32
    %96 = arith.index_cast %95 : i32 to index
    %97 = memref.load %arg1[%96] : memref<40xi32, #tpu.memory_space<smem>>
    %c32_i32_40 = arith.constant 32 : i32
    %98 = arith.muli %arg0, %c32_i32_40 : i32
    %c18_i32 = arith.constant 18 : i32
    %99 = arith.addi %98, %c18_i32 : i32
    %c39_i32_41 = arith.constant 39 : i32
    %100 = arith.minsi %99, %c39_i32_41 : i32
    %101 = arith.index_cast %100 : i32 to index
    %102 = memref.load %arg1[%101] : memref<40xi32, #tpu.memory_space<smem>>
    %c32_i32_42 = arith.constant 32 : i32
    %103 = arith.muli %arg0, %c32_i32_42 : i32
    %c19_i32 = arith.constant 19 : i32
    %104 = arith.addi %103, %c19_i32 : i32
    %c39_i32_43 = arith.constant 39 : i32
    %105 = arith.minsi %104, %c39_i32_43 : i32
    %106 = arith.index_cast %105 : i32 to index
    %107 = memref.load %arg1[%106] : memref<40xi32, #tpu.memory_space<smem>>
    %c32_i32_44 = arith.constant 32 : i32
    %108 = arith.muli %arg0, %c32_i32_44 : i32
    %c20_i32 = arith.constant 20 : i32
    %109 = arith.addi %108, %c20_i32 : i32
    %c39_i32_45 = arith.constant 39 : i32
    %110 = arith.minsi %109, %c39_i32_45 : i32
    %111 = arith.index_cast %110 : i32 to index
    %112 = memref.load %arg1[%111] : memref<40xi32, #tpu.memory_space<smem>>
    %c32_i32_46 = arith.constant 32 : i32
    %113 = arith.muli %arg0, %c32_i32_46 : i32
    %c21_i32 = arith.constant 21 : i32
    %114 = arith.addi %113, %c21_i32 : i32
    %c39_i32_47 = arith.constant 39 : i32
    %115 = arith.minsi %114, %c39_i32_47 : i32
    %116 = arith.index_cast %115 : i32 to index
    %117 = memref.load %arg1[%116] : memref<40xi32, #tpu.memory_space<smem>>
    %c32_i32_48 = arith.constant 32 : i32
    %118 = arith.muli %arg0, %c32_i32_48 : i32
    %c22_i32 = arith.constant 22 : i32
    %119 = arith.addi %118, %c22_i32 : i32
    %c39_i32_49 = arith.constant 39 : i32
    %120 = arith.minsi %119, %c39_i32_49 : i32
    %121 = arith.index_cast %120 : i32 to index
    %122 = memref.load %arg1[%121] : memref<40xi32, #tpu.memory_space<smem>>
    %c32_i32_50 = arith.constant 32 : i32
    %123 = arith.muli %arg0, %c32_i32_50 : i32
    %c23_i32 = arith.constant 23 : i32
    %124 = arith.addi %123, %c23_i32 : i32
    %c39_i32_51 = arith.constant 39 : i32
    %125 = arith.minsi %124, %c39_i32_51 : i32
    %126 = arith.index_cast %125 : i32 to index
    %127 = memref.load %arg1[%126] : memref<40xi32, #tpu.memory_space<smem>>
    %c32_i32_52 = arith.constant 32 : i32
    %128 = arith.muli %arg0, %c32_i32_52 : i32
    %c24_i32 = arith.constant 24 : i32
    %129 = arith.addi %128, %c24_i32 : i32
    %c39_i32_53 = arith.constant 39 : i32
    %130 = arith.minsi %129, %c39_i32_53 : i32
    %131 = arith.index_cast %130 : i32 to index
    %132 = memref.load %arg1[%131] : memref<40xi32, #tpu.memory_space<smem>>
    %c32_i32_54 = arith.constant 32 : i32
    %133 = arith.muli %arg0, %c32_i32_54 : i32
    %c25_i32 = arith.constant 25 : i32
    %134 = arith.addi %133, %c25_i32 : i32
    %c39_i32_55 = arith.constant 39 : i32
    %135 = arith.minsi %134, %c39_i32_55 : i32
    %136 = arith.index_cast %135 : i32 to index
    %137 = memref.load %arg1[%136] : memref<40xi32, #tpu.memory_space<smem>>
    %c32_i32_56 = arith.constant 32 : i32
    %138 = arith.muli %arg0, %c32_i32_56 : i32
    %c26_i32 = arith.constant 26 : i32
    %139 = arith.addi %138, %c26_i32 : i32
    %c39_i32_57 = arith.constant 39 : i32
    %140 = arith.minsi %139, %c39_i32_57 : i32
    %141 = arith.index_cast %140 : i32 to index
    %142 = memref.load %arg1[%141] : memref<40xi32, #tpu.memory_space<smem>>
    %c32_i32_58 = arith.constant 32 : i32
    %143 = arith.muli %arg0, %c32_i32_58 : i32
    %c27_i32 = arith.constant 27 : i32
    %144 = arith.addi %143, %c27_i32 : i32
    %c39_i32_59 = arith.constant 39 : i32
    %145 = arith.minsi %144, %c39_i32_59 : i32
    %146 = arith.index_cast %145 : i32 to index
    %147 = memref.load %arg1[%146] : memref<40xi32, #tpu.memory_space<smem>>
    %c32_i32_60 = arith.constant 32 : i32
    %148 = arith.muli %arg0, %c32_i32_60 : i32
    %c28_i32 = arith.constant 28 : i32
    %149 = arith.addi %148, %c28_i32 : i32
    %c39_i32_61 = arith.constant 39 : i32
    %150 = arith.minsi %149, %c39_i32_61 : i32
    %151 = arith.index_cast %150 : i32 to index
    %152 = memref.load %arg1[%151] : memref<40xi32, #tpu.memory_space<smem>>
    %c32_i32_62 = arith.constant 32 : i32
    %153 = arith.muli %arg0, %c32_i32_62 : i32
    %c29_i32 = arith.constant 29 : i32
    %154 = arith.addi %153, %c29_i32 : i32
    %c39_i32_63 = arith.constant 39 : i32
    %155 = arith.minsi %154, %c39_i32_63 : i32
    %156 = arith.index_cast %155 : i32 to index
    %157 = memref.load %arg1[%156] : memref<40xi32, #tpu.memory_space<smem>>
    %c32_i32_64 = arith.constant 32 : i32
    %158 = arith.muli %arg0, %c32_i32_64 : i32
    %c30_i32 = arith.constant 30 : i32
    %159 = arith.addi %158, %c30_i32 : i32
    %c39_i32_65 = arith.constant 39 : i32
    %160 = arith.minsi %159, %c39_i32_65 : i32
    %161 = arith.index_cast %160 : i32 to index
    %162 = memref.load %arg1[%161] : memref<40xi32, #tpu.memory_space<smem>>
    %c32_i32_66 = arith.constant 32 : i32
    %163 = arith.muli %arg0, %c32_i32_66 : i32
    %c31_i32 = arith.constant 31 : i32
    %164 = arith.addi %163, %c31_i32 : i32
    %c39_i32_67 = arith.constant 39 : i32
    %165 = arith.minsi %164, %c39_i32_67 : i32
    %166 = arith.index_cast %165 : i32 to index
    %167 = memref.load %arg1[%166] : memref<40xi32, #tpu.memory_space<smem>>
    %c0_i32_68 = arith.constant 0 : i32
    %c0_i32_69 = arith.constant 0 : i32
    %168 = tpu.memref_slice %arg2[%12, %c0_i32_69] : memref<512x256xf32, #tpu.memory_space<any>> -> memref<1x256xf32, #tpu.memory_space<any>>
    %c0_i32_70 = arith.constant 0 : i32
    %c0_i32_71 = arith.constant 0 : i32
    %169 = tpu.memref_slice %arg4[%0, %c0_i32_70, %c0_i32_71] : memref<2x32x256xf32, #tpu.memory_space<vmem>> -> memref<1x1x256xf32, #tpu.memory_space<vmem>>
    %170 = tpu.memref_squeeze %169 : memref<1x1x256xf32, #tpu.memory_space<vmem>> -> memref<1x256xf32, #tpu.memory_space<vmem>>
    %171 = tpu.memref_slice %arg5[%0, %c0_i32_68] : memref<2x32x!tpu.dma_semaphore, #tpu.memory_space<semaphore_mem>> -> memref<1x1x!tpu.dma_semaphore, #tpu.memory_space<semaphore_mem>>
    %172 = tpu.memref_squeeze %171 : memref<1x1x!tpu.dma_semaphore, #tpu.memory_space<semaphore_mem>> -> memref<!tpu.dma_semaphore, #tpu.memory_space<semaphore_mem>>
    tpu.wait_dma2 semaphore(%172 : memref<!tpu.dma_semaphore, #tpu.memory_space<semaphore_mem>>) src(%168 : memref<1x256xf32, #tpu.memory_space<any>>) dst(%170 : memref<1x256xf32, #tpu.memory_space<vmem>>)
    %c1_i32_72 = arith.constant 1 : i32
    %c0_i32_73 = arith.constant 0 : i32
    %173 = tpu.memref_slice %arg2[%17, %c0_i32_73] : memref<512x256xf32, #tpu.memory_space<any>> -> memref<1x256xf32, #tpu.memory_space<any>>
    %c1_i32_74 = arith.constant 1 : i32
    %c0_i32_75 = arith.constant 0 : i32
    %174 = tpu.memref_slice %arg4[%0, %c1_i32_74, %c0_i32_75] : memref<2x32x256xf32, #tpu.memory_space<vmem>> -> memref<1x1x256xf32, #tpu.memory_space<vmem>>
    %175 = tpu.memref_squeeze %174 : memref<1x1x256xf32, #tpu.memory_space<vmem>> -> memref<1x256xf32, #tpu.memory_space<vmem>>
    %176 = tpu.memref_slice %arg5[%0, %c1_i32_72] : memref<2x32x!tpu.dma_semaphore, #tpu.memory_space<semaphore_mem>> -> memref<1x1x!tpu.dma_semaphore, #tpu.memory_space<semaphore_mem>>
    %177 = tpu.memref_squeeze %176 : memref<1x1x!tpu.dma_semaphore, #tpu.memory_space<semaphore_mem>> -> memref<!tpu.dma_semaphore, #tpu.memory_space<semaphore_mem>>
    tpu.wait_dma2 semaphore(%177 : memref<!tpu.dma_semaphore, #tpu.memory_space<semaphore_mem>>) src(%173 : memref<1x256xf32, #tpu.memory_space<any>>) dst(%175 : memref<1x256xf32, #tpu.memory_space<vmem>>)
    %c2_i32_76 = arith.constant 2 : i32
    %c0_i32_77 = arith.constant 0 : i32
    %178 = tpu.memref_slice %arg2[%22, %c0_i32_77] : memref<512x256xf32, #tpu.memory_space<any>> -> memref<1x256xf32, #tpu.memory_space<any>>
    %c2_i32_78 = arith.constant 2 : i32
    %c0_i32_79 = arith.constant 0 : i32
    %179 = tpu.memref_slice %arg4[%0, %c2_i32_78, %c0_i32_79] : memref<2x32x256xf32, #tpu.memory_space<vmem>> -> memref<1x1x256xf32, #tpu.memory_space<vmem>>
    %180 = tpu.memref_squeeze %179 : memref<1x1x256xf32, #tpu.memory_space<vmem>> -> memref<1x256xf32, #tpu.memory_space<vmem>>
    %181 = tpu.memref_slice %arg5[%0, %c2_i32_76] : memref<2x32x!tpu.dma_semaphore, #tpu.memory_space<semaphore_mem>> -> memref<1x1x!tpu.dma_semaphore, #tpu.memory_space<semaphore_mem>>
    %182 = tpu.memref_squeeze %181 : memref<1x1x!tpu.dma_semaphore, #tpu.memory_space<semaphore_mem>> -> memref<!tpu.dma_semaphore, #tpu.memory_space<semaphore_mem>>
    tpu.wait_dma2 semaphore(%182 : memref<!tpu.dma_semaphore, #tpu.memory_space<semaphore_mem>>) src(%178 : memref<1x256xf32, #tpu.memory_space<any>>) dst(%180 : memref<1x256xf32, #tpu.memory_space<vmem>>)
    %c3_i32_80 = arith.constant 3 : i32
    %c0_i32_81 = arith.constant 0 : i32
    %183 = tpu.memref_slice %arg2[%27, %c0_i32_81] : memref<512x256xf32, #tpu.memory_space<any>> -> memref<1x256xf32, #tpu.memory_space<any>>
    %c3_i32_82 = arith.constant 3 : i32
    %c0_i32_83 = arith.constant 0 : i32
    %184 = tpu.memref_slice %arg4[%0, %c3_i32_82, %c0_i32_83] : memref<2x32x256xf32, #tpu.memory_space<vmem>> -> memref<1x1x256xf32, #tpu.memory_space<vmem>>
    %185 = tpu.memref_squeeze %184 : memref<1x1x256xf32, #tpu.memory_space<vmem>> -> memref<1x256xf32, #tpu.memory_space<vmem>>
    %186 = tpu.memref_slice %arg5[%0, %c3_i32_80] : memref<2x32x!tpu.dma_semaphore, #tpu.memory_space<semaphore_mem>> -> memref<1x1x!tpu.dma_semaphore, #tpu.memory_space<semaphore_mem>>
    %187 = tpu.memref_squeeze %186 : memref<1x1x!tpu.dma_semaphore, #tpu.memory_space<semaphore_mem>> -> memref<!tpu.dma_semaphore, #tpu.memory_space<semaphore_mem>>
    tpu.wait_dma2 semaphore(%187 : memref<!tpu.dma_semaphore, #tpu.memory_space<semaphore_mem>>) src(%183 : memref<1x256xf32, #tpu.memory_space<any>>) dst(%185 : memref<1x256xf32, #tpu.memory_space<vmem>>)
    %c4_i32_84 = arith.constant 4 : i32
    %c0_i32_85 = arith.constant 0 : i32
    %188 = tpu.memref_slice %arg2[%32, %c0_i32_85] : memref<512x256xf32, #tpu.memory_space<any>> -> memref<1x256xf32, #tpu.memory_space<any>>
    %c4_i32_86 = arith.constant 4 : i32
    %c0_i32_87 = arith.constant 0 : i32
    %189 = tpu.memref_slice %arg4[%0, %c4_i32_86, %c0_i32_87] : memref<2x32x256xf32, #tpu.memory_space<vmem>> -> memref<1x1x256xf32, #tpu.memory_space<vmem>>
    %190 = tpu.memref_squeeze %189 : memref<1x1x256xf32, #tpu.memory_space<vmem>> -> memref<1x256xf32, #tpu.memory_space<vmem>>
    %191 = tpu.memref_slice %arg5[%0, %c4_i32_84] : memref<2x32x!tpu.dma_semaphore, #tpu.memory_space<semaphore_mem>> -> memref<1x1x!tpu.dma_semaphore, #tpu.memory_space<semaphore_mem>>
    %192 = tpu.memref_squeeze %191 : memref<1x1x!tpu.dma_semaphore, #tpu.memory_space<semaphore_mem>> -> memref<!tpu.dma_semaphore, #tpu.memory_space<semaphore_mem>>
    tpu.wait_dma2 semaphore(%192 : memref<!tpu.dma_semaphore, #tpu.memory_space<semaphore_mem>>) src(%188 : memref<1x256xf32, #tpu.memory_space<any>>) dst(%190 : memref<1x256xf32, #tpu.memory_space<vmem>>)
    %c5_i32_88 = arith.constant 5 : i32
    %c0_i32_89 = arith.constant 0 : i32
    %193 = tpu.memref_slice %arg2[%37, %c0_i32_89] : memref<512x256xf32, #tpu.memory_space<any>> -> memref<1x256xf32, #tpu.memory_space<any>>
    %c5_i32_90 = arith.constant 5 : i32
    %c0_i32_91 = arith.constant 0 : i32
    %194 = tpu.memref_slice %arg4[%0, %c5_i32_90, %c0_i32_91] : memref<2x32x256xf32, #tpu.memory_space<vmem>> -> memref<1x1x256xf32, #tpu.memory_space<vmem>>
    %195 = tpu.memref_squeeze %194 : memref<1x1x256xf32, #tpu.memory_space<vmem>> -> memref<1x256xf32, #tpu.memory_space<vmem>>
    %196 = tpu.memref_slice %arg5[%0, %c5_i32_88] : memref<2x32x!tpu.dma_semaphore, #tpu.memory_space<semaphore_mem>> -> memref<1x1x!tpu.dma_semaphore, #tpu.memory_space<semaphore_mem>>
    %197 = tpu.memref_squeeze %196 : memref<1x1x!tpu.dma_semaphore, #tpu.memory_space<semaphore_mem>> -> memref<!tpu.dma_semaphore, #tpu.memory_space<semaphore_mem>>
    tpu.wait_dma2 semaphore(%197 : memref<!tpu.dma_semaphore, #tpu.memory_space<semaphore_mem>>) src(%193 : memref<1x256xf32, #tpu.memory_space<any>>) dst(%195 : memref<1x256xf32, #tpu.memory_space<vmem>>)
    %c6_i32_92 = arith.constant 6 : i32
    %c0_i32_93 = arith.constant 0 : i32
    %198 = tpu.memref_slice %arg2[%42, %c0_i32_93] : memref<512x256xf32, #tpu.memory_space<any>> -> memref<1x256xf32, #tpu.memory_space<any>>
    %c6_i32_94 = arith.constant 6 : i32
    %c0_i32_95 = arith.constant 0 : i32
    %199 = tpu.memref_slice %arg4[%0, %c6_i32_94, %c0_i32_95] : memref<2x32x256xf32, #tpu.memory_space<vmem>> -> memref<1x1x256xf32, #tpu.memory_space<vmem>>
    %200 = tpu.memref_squeeze %199 : memref<1x1x256xf32, #tpu.memory_space<vmem>> -> memref<1x256xf32, #tpu.memory_space<vmem>>
    %201 = tpu.memref_slice %arg5[%0, %c6_i32_92] : memref<2x32x!tpu.dma_semaphore, #tpu.memory_space<semaphore_mem>> -> memref<1x1x!tpu.dma_semaphore, #tpu.memory_space<semaphore_mem>>
    %202 = tpu.memref_squeeze %201 : memref<1x1x!tpu.dma_semaphore, #tpu.memory_space<semaphore_mem>> -> memref<!tpu.dma_semaphore, #tpu.memory_space<semaphore_mem>>
    tpu.wait_dma2 semaphore(%202 : memref<!tpu.dma_semaphore, #tpu.memory_space<semaphore_mem>>) src(%198 : memref<1x256xf32, #tpu.memory_space<any>>) dst(%200 : memref<1x256xf32, #tpu.memory_space<vmem>>)
    %c7_i32_96 = arith.constant 7 : i32
    %c0_i32_97 = arith.constant 0 : i32
    %203 = tpu.memref_slice %arg2[%47, %c0_i32_97] : memref<512x256xf32, #tpu.memory_space<any>> -> memref<1x256xf32, #tpu.memory_space<any>>
    %c7_i32_98 = arith.constant 7 : i32
    %c0_i32_99 = arith.constant 0 : i32
    %204 = tpu.memref_slice %arg4[%0, %c7_i32_98, %c0_i32_99] : memref<2x32x256xf32, #tpu.memory_space<vmem>> -> memref<1x1x256xf32, #tpu.memory_space<vmem>>
    %205 = tpu.memref_squeeze %204 : memref<1x1x256xf32, #tpu.memory_space<vmem>> -> memref<1x256xf32, #tpu.memory_space<vmem>>
    %206 = tpu.memref_slice %arg5[%0, %c7_i32_96] : memref<2x32x!tpu.dma_semaphore, #tpu.memory_space<semaphore_mem>> -> memref<1x1x!tpu.dma_semaphore, #tpu.memory_space<semaphore_mem>>
    %207 = tpu.memref_squeeze %206 : memref<1x1x!tpu.dma_semaphore, #tpu.memory_space<semaphore_mem>> -> memref<!tpu.dma_semaphore, #tpu.memory_space<semaphore_mem>>
    tpu.wait_dma2 semaphore(%207 : memref<!tpu.dma_semaphore, #tpu.memory_space<semaphore_mem>>) src(%203 : memref<1x256xf32, #tpu.memory_space<any>>) dst(%205 : memref<1x256xf32, #tpu.memory_space<vmem>>)
    %c8_i32_100 = arith.constant 8 : i32
    %c0_i32_101 = arith.constant 0 : i32
    %208 = tpu.memref_slice %arg2[%52, %c0_i32_101] : memref<512x256xf32, #tpu.memory_space<any>> -> memref<1x256xf32, #tpu.memory_space<any>>
    %c8_i32_102 = arith.constant 8 : i32
    %c0_i32_103 = arith.constant 0 : i32
    %209 = tpu.memref_slice %arg4[%0, %c8_i32_102, %c0_i32_103] : memref<2x32x256xf32, #tpu.memory_space<vmem>> -> memref<1x1x256xf32, #tpu.memory_space<vmem>>
    %210 = tpu.memref_squeeze %209 : memref<1x1x256xf32, #tpu.memory_space<vmem>> -> memref<1x256xf32, #tpu.memory_space<vmem>>
    %211 = tpu.memref_slice %arg5[%0, %c8_i32_100] : memref<2x32x!tpu.dma_semaphore, #tpu.memory_space<semaphore_mem>> -> memref<1x1x!tpu.dma_semaphore, #tpu.memory_space<semaphore_mem>>
    %212 = tpu.memref_squeeze %211 : memref<1x1x!tpu.dma_semaphore, #tpu.memory_space<semaphore_mem>> -> memref<!tpu.dma_semaphore, #tpu.memory_space<semaphore_mem>>
    tpu.wait_dma2 semaphore(%212 : memref<!tpu.dma_semaphore, #tpu.memory_space<semaphore_mem>>) src(%208 : memref<1x256xf32, #tpu.memory_space<any>>) dst(%210 : memref<1x256xf32, #tpu.memory_space<vmem>>)
    %c9_i32_104 = arith.constant 9 : i32
    %c0_i32_105 = arith.constant 0 : i32
    %213 = tpu.memref_slice %arg2[%57, %c0_i32_105] : memref<512x256xf32, #tpu.memory_space<any>> -> memref<1x256xf32, #tpu.memory_space<any>>
    %c9_i32_106 = arith.constant 9 : i32
    %c0_i32_107 = arith.constant 0 : i32
    %214 = tpu.memref_slice %arg4[%0, %c9_i32_106, %c0_i32_107] : memref<2x32x256xf32, #tpu.memory_space<vmem>> -> memref<1x1x256xf32, #tpu.memory_space<vmem>>
    %215 = tpu.memref_squeeze %214 : memref<1x1x256xf32, #tpu.memory_space<vmem>> -> memref<1x256xf32, #tpu.memory_space<vmem>>
    %216 = tpu.memref_slice %arg5[%0, %c9_i32_104] : memref<2x32x!tpu.dma_semaphore, #tpu.memory_space<semaphore_mem>> -> memref<1x1x!tpu.dma_semaphore, #tpu.memory_space<semaphore_mem>>
    %217 = tpu.memref_squeeze %216 : memref<1x1x!tpu.dma_semaphore, #tpu.memory_space<semaphore_mem>> -> memref<!tpu.dma_semaphore, #tpu.memory_space<semaphore_mem>>
    tpu.wait_dma2 semaphore(%217 : memref<!tpu.dma_semaphore, #tpu.memory_space<semaphore_mem>>) src(%213 : memref<1x256xf32, #tpu.memory_space<any>>) dst(%215 : memref<1x256xf32, #tpu.memory_space<vmem>>)
    %c10_i32_108 = arith.constant 10 : i32
    %c0_i32_109 = arith.constant 0 : i32
    %218 = tpu.memref_slice %arg2[%62, %c0_i32_109] : memref<512x256xf32, #tpu.memory_space<any>> -> memref<1x256xf32, #tpu.memory_space<any>>
    %c10_i32_110 = arith.constant 10 : i32
    %c0_i32_111 = arith.constant 0 : i32
    %219 = tpu.memref_slice %arg4[%0, %c10_i32_110, %c0_i32_111] : memref<2x32x256xf32, #tpu.memory_space<vmem>> -> memref<1x1x256xf32, #tpu.memory_space<vmem>>
    %220 = tpu.memref_squeeze %219 : memref<1x1x256xf32, #tpu.memory_space<vmem>> -> memref<1x256xf32, #tpu.memory_space<vmem>>
    %221 = tpu.memref_slice %arg5[%0, %c10_i32_108] : memref<2x32x!tpu.dma_semaphore, #tpu.memory_space<semaphore_mem>> -> memref<1x1x!tpu.dma_semaphore, #tpu.memory_space<semaphore_mem>>
    %222 = tpu.memref_squeeze %221 : memref<1x1x!tpu.dma_semaphore, #tpu.memory_space<semaphore_mem>> -> memref<!tpu.dma_semaphore, #tpu.memory_space<semaphore_mem>>
    tpu.wait_dma2 semaphore(%222 : memref<!tpu.dma_semaphore, #tpu.memory_space<semaphore_mem>>) src(%218 : memref<1x256xf32, #tpu.memory_space<any>>) dst(%220 : memref<1x256xf32, #tpu.memory_space<vmem>>)
    %c11_i32_112 = arith.constant 11 : i32
    %c0_i32_113 = arith.constant 0 : i32
    %223 = tpu.memref_slice %arg2[%67, %c0_i32_113] : memref<512x256xf32, #tpu.memory_space<any>> -> memref<1x256xf32, #tpu.memory_space<any>>
    %c11_i32_114 = arith.constant 11 : i32
    %c0_i32_115 = arith.constant 0 : i32
    %224 = tpu.memref_slice %arg4[%0, %c11_i32_114, %c0_i32_115] : memref<2x32x256xf32, #tpu.memory_space<vmem>> -> memref<1x1x256xf32, #tpu.memory_space<vmem>>
    %225 = tpu.memref_squeeze %224 : memref<1x1x256xf32, #tpu.memory_space<vmem>> -> memref<1x256xf32, #tpu.memory_space<vmem>>
    %226 = tpu.memref_slice %arg5[%0, %c11_i32_112] : memref<2x32x!tpu.dma_semaphore, #tpu.memory_space<semaphore_mem>> -> memref<1x1x!tpu.dma_semaphore, #tpu.memory_space<semaphore_mem>>
    %227 = tpu.memref_squeeze %226 : memref<1x1x!tpu.dma_semaphore, #tpu.memory_space<semaphore_mem>> -> memref<!tpu.dma_semaphore, #tpu.memory_space<semaphore_mem>>
    tpu.wait_dma2 semaphore(%227 : memref<!tpu.dma_semaphore, #tpu.memory_space<semaphore_mem>>) src(%223 : memref<1x256xf32, #tpu.memory_space<any>>) dst(%225 : memref<1x256xf32, #tpu.memory_space<vmem>>)
    %c12_i32_116 = arith.constant 12 : i32
    %c0_i32_117 = arith.constant 0 : i32
    %228 = tpu.memref_slice %arg2[%72, %c0_i32_117] : memref<512x256xf32, #tpu.memory_space<any>> -> memref<1x256xf32, #tpu.memory_space<any>>
    %c12_i32_118 = arith.constant 12 : i32
    %c0_i32_119 = arith.constant 0 : i32
    %229 = tpu.memref_slice %arg4[%0, %c12_i32_118, %c0_i32_119] : memref<2x32x256xf32, #tpu.memory_space<vmem>> -> memref<1x1x256xf32, #tpu.memory_space<vmem>>
    %230 = tpu.memref_squeeze %229 : memref<1x1x256xf32, #tpu.memory_space<vmem>> -> memref<1x256xf32, #tpu.memory_space<vmem>>
    %231 = tpu.memref_slice %arg5[%0, %c12_i32_116] : memref<2x32x!tpu.dma_semaphore, #tpu.memory_space<semaphore_mem>> -> memref<1x1x!tpu.dma_semaphore, #tpu.memory_space<semaphore_mem>>
    %232 = tpu.memref_squeeze %231 : memref<1x1x!tpu.dma_semaphore, #tpu.memory_space<semaphore_mem>> -> memref<!tpu.dma_semaphore, #tpu.memory_space<semaphore_mem>>
    tpu.wait_dma2 semaphore(%232 : memref<!tpu.dma_semaphore, #tpu.memory_space<semaphore_mem>>) src(%228 : memref<1x256xf32, #tpu.memory_space<any>>) dst(%230 : memref<1x256xf32, #tpu.memory_space<vmem>>)
    %c13_i32_120 = arith.constant 13 : i32
    %c0_i32_121 = arith.constant 0 : i32
    %233 = tpu.memref_slice %arg2[%77, %c0_i32_121] : memref<512x256xf32, #tpu.memory_space<any>> -> memref<1x256xf32, #tpu.memory_space<any>>
    %c13_i32_122 = arith.constant 13 : i32
    %c0_i32_123 = arith.constant 0 : i32
    %234 = tpu.memref_slice %arg4[%0, %c13_i32_122, %c0_i32_123] : memref<2x32x256xf32, #tpu.memory_space<vmem>> -> memref<1x1x256xf32, #tpu.memory_space<vmem>>
    %235 = tpu.memref_squeeze %234 : memref<1x1x256xf32, #tpu.memory_space<vmem>> -> memref<1x256xf32, #tpu.memory_space<vmem>>
    %236 = tpu.memref_slice %arg5[%0, %c13_i32_120] : memref<2x32x!tpu.dma_semaphore, #tpu.memory_space<semaphore_mem>> -> memref<1x1x!tpu.dma_semaphore, #tpu.memory_space<semaphore_mem>>
    %237 = tpu.memref_squeeze %236 : memref<1x1x!tpu.dma_semaphore, #tpu.memory_space<semaphore_mem>> -> memref<!tpu.dma_semaphore, #tpu.memory_space<semaphore_mem>>
    tpu.wait_dma2 semaphore(%237 : memref<!tpu.dma_semaphore, #tpu.memory_space<semaphore_mem>>) src(%233 : memref<1x256xf32, #tpu.memory_space<any>>) dst(%235 : memref<1x256xf32, #tpu.memory_space<vmem>>)
    %c14_i32_124 = arith.constant 14 : i32
    %c0_i32_125 = arith.constant 0 : i32
    %238 = tpu.memref_slice %arg2[%82, %c0_i32_125] : memref<512x256xf32, #tpu.memory_space<any>> -> memref<1x256xf32, #tpu.memory_space<any>>
    %c14_i32_126 = arith.constant 14 : i32
    %c0_i32_127 = arith.constant 0 : i32
    %239 = tpu.memref_slice %arg4[%0, %c14_i32_126, %c0_i32_127] : memref<2x32x256xf32, #tpu.memory_space<vmem>> -> memref<1x1x256xf32, #tpu.memory_space<vmem>>
    %240 = tpu.memref_squeeze %239 : memref<1x1x256xf32, #tpu.memory_space<vmem>> -> memref<1x256xf32, #tpu.memory_space<vmem>>
    %241 = tpu.memref_slice %arg5[%0, %c14_i32_124] : memref<2x32x!tpu.dma_semaphore, #tpu.memory_space<semaphore_mem>> -> memref<1x1x!tpu.dma_semaphore, #tpu.memory_space<semaphore_mem>>
    %242 = tpu.memref_squeeze %241 : memref<1x1x!tpu.dma_semaphore, #tpu.memory_space<semaphore_mem>> -> memref<!tpu.dma_semaphore, #tpu.memory_space<semaphore_mem>>
    tpu.wait_dma2 semaphore(%242 : memref<!tpu.dma_semaphore, #tpu.memory_space<semaphore_mem>>) src(%238 : memref<1x256xf32, #tpu.memory_space<any>>) dst(%240 : memref<1x256xf32, #tpu.memory_space<vmem>>)
    %c15_i32_128 = arith.constant 15 : i32
    %c0_i32_129 = arith.constant 0 : i32
    %243 = tpu.memref_slice %arg2[%87, %c0_i32_129] : memref<512x256xf32, #tpu.memory_space<any>> -> memref<1x256xf32, #tpu.memory_space<any>>
    %c15_i32_130 = arith.constant 15 : i32
    %c0_i32_131 = arith.constant 0 : i32
    %244 = tpu.memref_slice %arg4[%0, %c15_i32_130, %c0_i32_131] : memref<2x32x256xf32, #tpu.memory_space<vmem>> -> memref<1x1x256xf32, #tpu.memory_space<vmem>>
    %245 = tpu.memref_squeeze %244 : memref<1x1x256xf32, #tpu.memory_space<vmem>> -> memref<1x256xf32, #tpu.memory_space<vmem>>
    %246 = tpu.memref_slice %arg5[%0, %c15_i32_128] : memref<2x32x!tpu.dma_semaphore, #tpu.memory_space<semaphore_mem>> -> memref<1x1x!tpu.dma_semaphore, #tpu.memory_space<semaphore_mem>>
    %247 = tpu.memref_squeeze %246 : memref<1x1x!tpu.dma_semaphore, #tpu.memory_space<semaphore_mem>> -> memref<!tpu.dma_semaphore, #tpu.memory_space<semaphore_mem>>
    tpu.wait_dma2 semaphore(%247 : memref<!tpu.dma_semaphore, #tpu.memory_space<semaphore_mem>>) src(%243 : memref<1x256xf32, #tpu.memory_space<any>>) dst(%245 : memref<1x256xf32, #tpu.memory_space<vmem>>)
    %c16_i32_132 = arith.constant 16 : i32
    %c0_i32_133 = arith.constant 0 : i32
    %248 = tpu.memref_slice %arg2[%92, %c0_i32_133] : memref<512x256xf32, #tpu.memory_space<any>> -> memref<1x256xf32, #tpu.memory_space<any>>
    %c16_i32_134 = arith.constant 16 : i32
    %c0_i32_135 = arith.constant 0 : i32
    %249 = tpu.memref_slice %arg4[%0, %c16_i32_134, %c0_i32_135] : memref<2x32x256xf32, #tpu.memory_space<vmem>> -> memref<1x1x256xf32, #tpu.memory_space<vmem>>
    %250 = tpu.memref_squeeze %249 : memref<1x1x256xf32, #tpu.memory_space<vmem>> -> memref<1x256xf32, #tpu.memory_space<vmem>>
    %251 = tpu.memref_slice %arg5[%0, %c16_i32_132] : memref<2x32x!tpu.dma_semaphore, #tpu.memory_space<semaphore_mem>> -> memref<1x1x!tpu.dma_semaphore, #tpu.memory_space<semaphore_mem>>
    %252 = tpu.memref_squeeze %251 : memref<1x1x!tpu.dma_semaphore, #tpu.memory_space<semaphore_mem>> -> memref<!tpu.dma_semaphore, #tpu.memory_space<semaphore_mem>>
    tpu.wait_dma2 semaphore(%252 : memref<!tpu.dma_semaphore, #tpu.memory_space<semaphore_mem>>) src(%248 : memref<1x256xf32, #tpu.memory_space<any>>) dst(%250 : memref<1x256xf32, #tpu.memory_space<vmem>>)
    %c17_i32_136 = arith.constant 17 : i32
    %c0_i32_137 = arith.constant 0 : i32
    %253 = tpu.memref_slice %arg2[%97, %c0_i32_137] : memref<512x256xf32, #tpu.memory_space<any>> -> memref<1x256xf32, #tpu.memory_space<any>>
    %c17_i32_138 = arith.constant 17 : i32
    %c0_i32_139 = arith.constant 0 : i32
    %254 = tpu.memref_slice %arg4[%0, %c17_i32_138, %c0_i32_139] : memref<2x32x256xf32, #tpu.memory_space<vmem>> -> memref<1x1x256xf32, #tpu.memory_space<vmem>>
    %255 = tpu.memref_squeeze %254 : memref<1x1x256xf32, #tpu.memory_space<vmem>> -> memref<1x256xf32, #tpu.memory_space<vmem>>
    %256 = tpu.memref_slice %arg5[%0, %c17_i32_136] : memref<2x32x!tpu.dma_semaphore, #tpu.memory_space<semaphore_mem>> -> memref<1x1x!tpu.dma_semaphore, #tpu.memory_space<semaphore_mem>>
    %257 = tpu.memref_squeeze %256 : memref<1x1x!tpu.dma_semaphore, #tpu.memory_space<semaphore_mem>> -> memref<!tpu.dma_semaphore, #tpu.memory_space<semaphore_mem>>
    tpu.wait_dma2 semaphore(%257 : memref<!tpu.dma_semaphore, #tpu.memory_space<semaphore_mem>>) src(%253 : memref<1x256xf32, #tpu.memory_space<any>>) dst(%255 : memref<1x256xf32, #tpu.memory_space<vmem>>)
    %c18_i32_140 = arith.constant 18 : i32
    %c0_i32_141 = arith.constant 0 : i32
    %258 = tpu.memref_slice %arg2[%102, %c0_i32_141] : memref<512x256xf32, #tpu.memory_space<any>> -> memref<1x256xf32, #tpu.memory_space<any>>
    %c18_i32_142 = arith.constant 18 : i32
    %c0_i32_143 = arith.constant 0 : i32
    %259 = tpu.memref_slice %arg4[%0, %c18_i32_142, %c0_i32_143] : memref<2x32x256xf32, #tpu.memory_space<vmem>> -> memref<1x1x256xf32, #tpu.memory_space<vmem>>
    %260 = tpu.memref_squeeze %259 : memref<1x1x256xf32, #tpu.memory_space<vmem>> -> memref<1x256xf32, #tpu.memory_space<vmem>>
    %261 = tpu.memref_slice %arg5[%0, %c18_i32_140] : memref<2x32x!tpu.dma_semaphore, #tpu.memory_space<semaphore_mem>> -> memref<1x1x!tpu.dma_semaphore, #tpu.memory_space<semaphore_mem>>
    %262 = tpu.memref_squeeze %261 : memref<1x1x!tpu.dma_semaphore, #tpu.memory_space<semaphore_mem>> -> memref<!tpu.dma_semaphore, #tpu.memory_space<semaphore_mem>>
    tpu.wait_dma2 semaphore(%262 : memref<!tpu.dma_semaphore, #tpu.memory_space<semaphore_mem>>) src(%258 : memref<1x256xf32, #tpu.memory_space<any>>) dst(%260 : memref<1x256xf32, #tpu.memory_space<vmem>>)
    %c19_i32_144 = arith.constant 19 : i32
    %c0_i32_145 = arith.constant 0 : i32
    %263 = tpu.memref_slice %arg2[%107, %c0_i32_145] : memref<512x256xf32, #tpu.memory_space<any>> -> memref<1x256xf32, #tpu.memory_space<any>>
    %c19_i32_146 = arith.constant 19 : i32
    %c0_i32_147 = arith.constant 0 : i32
    %264 = tpu.memref_slice %arg4[%0, %c19_i32_146, %c0_i32_147] : memref<2x32x256xf32, #tpu.memory_space<vmem>> -> memref<1x1x256xf32, #tpu.memory_space<vmem>>
    %265 = tpu.memref_squeeze %264 : memref<1x1x256xf32, #tpu.memory_space<vmem>> -> memref<1x256xf32, #tpu.memory_space<vmem>>
    %266 = tpu.memref_slice %arg5[%0, %c19_i32_144] : memref<2x32x!tpu.dma_semaphore, #tpu.memory_space<semaphore_mem>> -> memref<1x1x!tpu.dma_semaphore, #tpu.memory_space<semaphore_mem>>
    %267 = tpu.memref_squeeze %266 : memref<1x1x!tpu.dma_semaphore, #tpu.memory_space<semaphore_mem>> -> memref<!tpu.dma_semaphore, #tpu.memory_space<semaphore_mem>>
    tpu.wait_dma2 semaphore(%267 : memref<!tpu.dma_semaphore, #tpu.memory_space<semaphore_mem>>) src(%263 : memref<1x256xf32, #tpu.memory_space<any>>) dst(%265 : memref<1x256xf32, #tpu.memory_space<vmem>>)
    %c20_i32_148 = arith.constant 20 : i32
    %c0_i32_149 = arith.constant 0 : i32
    %268 = tpu.memref_slice %arg2[%112, %c0_i32_149] : memref<512x256xf32, #tpu.memory_space<any>> -> memref<1x256xf32, #tpu.memory_space<any>>
    %c20_i32_150 = arith.constant 20 : i32
    %c0_i32_151 = arith.constant 0 : i32
    %269 = tpu.memref_slice %arg4[%0, %c20_i32_150, %c0_i32_151] : memref<2x32x256xf32, #tpu.memory_space<vmem>> -> memref<1x1x256xf32, #tpu.memory_space<vmem>>
    %270 = tpu.memref_squeeze %269 : memref<1x1x256xf32, #tpu.memory_space<vmem>> -> memref<1x256xf32, #tpu.memory_space<vmem>>
    %271 = tpu.memref_slice %arg5[%0, %c20_i32_148] : memref<2x32x!tpu.dma_semaphore, #tpu.memory_space<semaphore_mem>> -> memref<1x1x!tpu.dma_semaphore, #tpu.memory_space<semaphore_mem>>
    %272 = tpu.memref_squeeze %271 : memref<1x1x!tpu.dma_semaphore, #tpu.memory_space<semaphore_mem>> -> memref<!tpu.dma_semaphore, #tpu.memory_space<semaphore_mem>>
    tpu.wait_dma2 semaphore(%272 : memref<!tpu.dma_semaphore, #tpu.memory_space<semaphore_mem>>) src(%268 : memref<1x256xf32, #tpu.memory_space<any>>) dst(%270 : memref<1x256xf32, #tpu.memory_space<vmem>>)
    %c21_i32_152 = arith.constant 21 : i32
    %c0_i32_153 = arith.constant 0 : i32
    %273 = tpu.memref_slice %arg2[%117, %c0_i32_153] : memref<512x256xf32, #tpu.memory_space<any>> -> memref<1x256xf32, #tpu.memory_space<any>>
    %c21_i32_154 = arith.constant 21 : i32
    %c0_i32_155 = arith.constant 0 : i32
    %274 = tpu.memref_slice %arg4[%0, %c21_i32_154, %c0_i32_155] : memref<2x32x256xf32, #tpu.memory_space<vmem>> -> memref<1x1x256xf32, #tpu.memory_space<vmem>>
    %275 = tpu.memref_squeeze %274 : memref<1x1x256xf32, #tpu.memory_space<vmem>> -> memref<1x256xf32, #tpu.memory_space<vmem>>
    %276 = tpu.memref_slice %arg5[%0, %c21_i32_152] : memref<2x32x!tpu.dma_semaphore, #tpu.memory_space<semaphore_mem>> -> memref<1x1x!tpu.dma_semaphore, #tpu.memory_space<semaphore_mem>>
    %277 = tpu.memref_squeeze %276 : memref<1x1x!tpu.dma_semaphore, #tpu.memory_space<semaphore_mem>> -> memref<!tpu.dma_semaphore, #tpu.memory_space<semaphore_mem>>
    tpu.wait_dma2 semaphore(%277 : memref<!tpu.dma_semaphore, #tpu.memory_space<semaphore_mem>>) src(%273 : memref<1x256xf32, #tpu.memory_space<any>>) dst(%275 : memref<1x256xf32, #tpu.memory_space<vmem>>)
    %c22_i32_156 = arith.constant 22 : i32
    %c0_i32_157 = arith.constant 0 : i32
    %278 = tpu.memref_slice %arg2[%122, %c0_i32_157] : memref<512x256xf32, #tpu.memory_space<any>> -> memref<1x256xf32, #tpu.memory_space<any>>
    %c22_i32_158 = arith.constant 22 : i32
    %c0_i32_159 = arith.constant 0 : i32
    %279 = tpu.memref_slice %arg4[%0, %c22_i32_158, %c0_i32_159] : memref<2x32x256xf32, #tpu.memory_space<vmem>> -> memref<1x1x256xf32, #tpu.memory_space<vmem>>
    %280 = tpu.memref_squeeze %279 : memref<1x1x256xf32, #tpu.memory_space<vmem>> -> memref<1x256xf32, #tpu.memory_space<vmem>>
    %281 = tpu.memref_slice %arg5[%0, %c22_i32_156] : memref<2x32x!tpu.dma_semaphore, #tpu.memory_space<semaphore_mem>> -> memref<1x1x!tpu.dma_semaphore, #tpu.memory_space<semaphore_mem>>
    %282 = tpu.memref_squeeze %281 : memref<1x1x!tpu.dma_semaphore, #tpu.memory_space<semaphore_mem>> -> memref<!tpu.dma_semaphore, #tpu.memory_space<semaphore_mem>>
    tpu.wait_dma2 semaphore(%282 : memref<!tpu.dma_semaphore, #tpu.memory_space<semaphore_mem>>) src(%278 : memref<1x256xf32, #tpu.memory_space<any>>) dst(%280 : memref<1x256xf32, #tpu.memory_space<vmem>>)
    %c23_i32_160 = arith.constant 23 : i32
    %c0_i32_161 = arith.constant 0 : i32
    %283 = tpu.memref_slice %arg2[%127, %c0_i32_161] : memref<512x256xf32, #tpu.memory_space<any>> -> memref<1x256xf32, #tpu.memory_space<any>>
    %c23_i32_162 = arith.constant 23 : i32
    %c0_i32_163 = arith.constant 0 : i32
    %284 = tpu.memref_slice %arg4[%0, %c23_i32_162, %c0_i32_163] : memref<2x32x256xf32, #tpu.memory_space<vmem>> -> memref<1x1x256xf32, #tpu.memory_space<vmem>>
    %285 = tpu.memref_squeeze %284 : memref<1x1x256xf32, #tpu.memory_space<vmem>> -> memref<1x256xf32, #tpu.memory_space<vmem>>
    %286 = tpu.memref_slice %arg5[%0, %c23_i32_160] : memref<2x32x!tpu.dma_semaphore, #tpu.memory_space<semaphore_mem>> -> memref<1x1x!tpu.dma_semaphore, #tpu.memory_space<semaphore_mem>>
    %287 = tpu.memref_squeeze %286 : memref<1x1x!tpu.dma_semaphore, #tpu.memory_space<semaphore_mem>> -> memref<!tpu.dma_semaphore, #tpu.memory_space<semaphore_mem>>
    tpu.wait_dma2 semaphore(%287 : memref<!tpu.dma_semaphore, #tpu.memory_space<semaphore_mem>>) src(%283 : memref<1x256xf32, #tpu.memory_space<any>>) dst(%285 : memref<1x256xf32, #tpu.memory_space<vmem>>)
    %c24_i32_164 = arith.constant 24 : i32
    %c0_i32_165 = arith.constant 0 : i32
    %288 = tpu.memref_slice %arg2[%132, %c0_i32_165] : memref<512x256xf32, #tpu.memory_space<any>> -> memref<1x256xf32, #tpu.memory_space<any>>
    %c24_i32_166 = arith.constant 24 : i32
    %c0_i32_167 = arith.constant 0 : i32
    %289 = tpu.memref_slice %arg4[%0, %c24_i32_166, %c0_i32_167] : memref<2x32x256xf32, #tpu.memory_space<vmem>> -> memref<1x1x256xf32, #tpu.memory_space<vmem>>
    %290 = tpu.memref_squeeze %289 : memref<1x1x256xf32, #tpu.memory_space<vmem>> -> memref<1x256xf32, #tpu.memory_space<vmem>>
    %291 = tpu.memref_slice %arg5[%0, %c24_i32_164] : memref<2x32x!tpu.dma_semaphore, #tpu.memory_space<semaphore_mem>> -> memref<1x1x!tpu.dma_semaphore, #tpu.memory_space<semaphore_mem>>
    %292 = tpu.memref_squeeze %291 : memref<1x1x!tpu.dma_semaphore, #tpu.memory_space<semaphore_mem>> -> memref<!tpu.dma_semaphore, #tpu.memory_space<semaphore_mem>>
    tpu.wait_dma2 semaphore(%292 : memref<!tpu.dma_semaphore, #tpu.memory_space<semaphore_mem>>) src(%288 : memref<1x256xf32, #tpu.memory_space<any>>) dst(%290 : memref<1x256xf32, #tpu.memory_space<vmem>>)
    %c25_i32_168 = arith.constant 25 : i32
    %c0_i32_169 = arith.constant 0 : i32
    %293 = tpu.memref_slice %arg2[%137, %c0_i32_169] : memref<512x256xf32, #tpu.memory_space<any>> -> memref<1x256xf32, #tpu.memory_space<any>>
    %c25_i32_170 = arith.constant 25 : i32
    %c0_i32_171 = arith.constant 0 : i32
    %294 = tpu.memref_slice %arg4[%0, %c25_i32_170, %c0_i32_171] : memref<2x32x256xf32, #tpu.memory_space<vmem>> -> memref<1x1x256xf32, #tpu.memory_space<vmem>>
    %295 = tpu.memref_squeeze %294 : memref<1x1x256xf32, #tpu.memory_space<vmem>> -> memref<1x256xf32, #tpu.memory_space<vmem>>
    %296 = tpu.memref_slice %arg5[%0, %c25_i32_168] : memref<2x32x!tpu.dma_semaphore, #tpu.memory_space<semaphore_mem>> -> memref<1x1x!tpu.dma_semaphore, #tpu.memory_space<semaphore_mem>>
    %297 = tpu.memref_squeeze %296 : memref<1x1x!tpu.dma_semaphore, #tpu.memory_space<semaphore_mem>> -> memref<!tpu.dma_semaphore, #tpu.memory_space<semaphore_mem>>
    tpu.wait_dma2 semaphore(%297 : memref<!tpu.dma_semaphore, #tpu.memory_space<semaphore_mem>>) src(%293 : memref<1x256xf32, #tpu.memory_space<any>>) dst(%295 : memref<1x256xf32, #tpu.memory_space<vmem>>)
    %c26_i32_172 = arith.constant 26 : i32
    %c0_i32_173 = arith.constant 0 : i32
    %298 = tpu.memref_slice %arg2[%142, %c0_i32_173] : memref<512x256xf32, #tpu.memory_space<any>> -> memref<1x256xf32, #tpu.memory_space<any>>
    %c26_i32_174 = arith.constant 26 : i32
    %c0_i32_175 = arith.constant 0 : i32
    %299 = tpu.memref_slice %arg4[%0, %c26_i32_174, %c0_i32_175] : memref<2x32x256xf32, #tpu.memory_space<vmem>> -> memref<1x1x256xf32, #tpu.memory_space<vmem>>
    %300 = tpu.memref_squeeze %299 : memref<1x1x256xf32, #tpu.memory_space<vmem>> -> memref<1x256xf32, #tpu.memory_space<vmem>>
    %301 = tpu.memref_slice %arg5[%0, %c26_i32_172] : memref<2x32x!tpu.dma_semaphore, #tpu.memory_space<semaphore_mem>> -> memref<1x1x!tpu.dma_semaphore, #tpu.memory_space<semaphore_mem>>
    %302 = tpu.memref_squeeze %301 : memref<1x1x!tpu.dma_semaphore, #tpu.memory_space<semaphore_mem>> -> memref<!tpu.dma_semaphore, #tpu.memory_space<semaphore_mem>>
    tpu.wait_dma2 semaphore(%302 : memref<!tpu.dma_semaphore, #tpu.memory_space<semaphore_mem>>) src(%298 : memref<1x256xf32, #tpu.memory_space<any>>) dst(%300 : memref<1x256xf32, #tpu.memory_space<vmem>>)
    %c27_i32_176 = arith.constant 27 : i32
    %c0_i32_177 = arith.constant 0 : i32
    %303 = tpu.memref_slice %arg2[%147, %c0_i32_177] : memref<512x256xf32, #tpu.memory_space<any>> -> memref<1x256xf32, #tpu.memory_space<any>>
    %c27_i32_178 = arith.constant 27 : i32
    %c0_i32_179 = arith.constant 0 : i32
    %304 = tpu.memref_slice %arg4[%0, %c27_i32_178, %c0_i32_179] : memref<2x32x256xf32, #tpu.memory_space<vmem>> -> memref<1x1x256xf32, #tpu.memory_space<vmem>>
    %305 = tpu.memref_squeeze %304 : memref<1x1x256xf32, #tpu.memory_space<vmem>> -> memref<1x256xf32, #tpu.memory_space<vmem>>
    %306 = tpu.memref_slice %arg5[%0, %c27_i32_176] : memref<2x32x!tpu.dma_semaphore, #tpu.memory_space<semaphore_mem>> -> memref<1x1x!tpu.dma_semaphore, #tpu.memory_space<semaphore_mem>>
    %307 = tpu.memref_squeeze %306 : memref<1x1x!tpu.dma_semaphore, #tpu.memory_space<semaphore_mem>> -> memref<!tpu.dma_semaphore, #tpu.memory_space<semaphore_mem>>
    tpu.wait_dma2 semaphore(%307 : memref<!tpu.dma_semaphore, #tpu.memory_space<semaphore_mem>>) src(%303 : memref<1x256xf32, #tpu.memory_space<any>>) dst(%305 : memref<1x256xf32, #tpu.memory_space<vmem>>)
    %c28_i32_180 = arith.constant 28 : i32
    %c0_i32_181 = arith.constant 0 : i32
    %308 = tpu.memref_slice %arg2[%152, %c0_i32_181] : memref<512x256xf32, #tpu.memory_space<any>> -> memref<1x256xf32, #tpu.memory_space<any>>
    %c28_i32_182 = arith.constant 28 : i32
    %c0_i32_183 = arith.constant 0 : i32
    %309 = tpu.memref_slice %arg4[%0, %c28_i32_182, %c0_i32_183] : memref<2x32x256xf32, #tpu.memory_space<vmem>> -> memref<1x1x256xf32, #tpu.memory_space<vmem>>
    %310 = tpu.memref_squeeze %309 : memref<1x1x256xf32, #tpu.memory_space<vmem>> -> memref<1x256xf32, #tpu.memory_space<vmem>>
    %311 = tpu.memref_slice %arg5[%0, %c28_i32_180] : memref<2x32x!tpu.dma_semaphore, #tpu.memory_space<semaphore_mem>> -> memref<1x1x!tpu.dma_semaphore, #tpu.memory_space<semaphore_mem>>
    %312 = tpu.memref_squeeze %311 : memref<1x1x!tpu.dma_semaphore, #tpu.memory_space<semaphore_mem>> -> memref<!tpu.dma_semaphore, #tpu.memory_space<semaphore_mem>>
    tpu.wait_dma2 semaphore(%312 : memref<!tpu.dma_semaphore, #tpu.memory_space<semaphore_mem>>) src(%308 : memref<1x256xf32, #tpu.memory_space<any>>) dst(%310 : memref<1x256xf32, #tpu.memory_space<vmem>>)
    %c29_i32_184 = arith.constant 29 : i32
    %c0_i32_185 = arith.constant 0 : i32
    %313 = tpu.memref_slice %arg2[%157, %c0_i32_185] : memref<512x256xf32, #tpu.memory_space<any>> -> memref<1x256xf32, #tpu.memory_space<any>>
    %c29_i32_186 = arith.constant 29 : i32
    %c0_i32_187 = arith.constant 0 : i32
    %314 = tpu.memref_slice %arg4[%0, %c29_i32_186, %c0_i32_187] : memref<2x32x256xf32, #tpu.memory_space<vmem>> -> memref<1x1x256xf32, #tpu.memory_space<vmem>>
    %315 = tpu.memref_squeeze %314 : memref<1x1x256xf32, #tpu.memory_space<vmem>> -> memref<1x256xf32, #tpu.memory_space<vmem>>
    %316 = tpu.memref_slice %arg5[%0, %c29_i32_184] : memref<2x32x!tpu.dma_semaphore, #tpu.memory_space<semaphore_mem>> -> memref<1x1x!tpu.dma_semaphore, #tpu.memory_space<semaphore_mem>>
    %317 = tpu.memref_squeeze %316 : memref<1x1x!tpu.dma_semaphore, #tpu.memory_space<semaphore_mem>> -> memref<!tpu.dma_semaphore, #tpu.memory_space<semaphore_mem>>
    tpu.wait_dma2 semaphore(%317 : memref<!tpu.dma_semaphore, #tpu.memory_space<semaphore_mem>>) src(%313 : memref<1x256xf32, #tpu.memory_space<any>>) dst(%315 : memref<1x256xf32, #tpu.memory_space<vmem>>)
    %c30_i32_188 = arith.constant 30 : i32
    %c0_i32_189 = arith.constant 0 : i32
    %318 = tpu.memref_slice %arg2[%162, %c0_i32_189] : memref<512x256xf32, #tpu.memory_space<any>> -> memref<1x256xf32, #tpu.memory_space<any>>
    %c30_i32_190 = arith.constant 30 : i32
    %c0_i32_191 = arith.constant 0 : i32
    %319 = tpu.memref_slice %arg4[%0, %c30_i32_190, %c0_i32_191] : memref<2x32x256xf32, #tpu.memory_space<vmem>> -> memref<1x1x256xf32, #tpu.memory_space<vmem>>
    %320 = tpu.memref_squeeze %319 : memref<1x1x256xf32, #tpu.memory_space<vmem>> -> memref<1x256xf32, #tpu.memory_space<vmem>>
    %321 = tpu.memref_slice %arg5[%0, %c30_i32_188] : memref<2x32x!tpu.dma_semaphore, #tpu.memory_space<semaphore_mem>> -> memref<1x1x!tpu.dma_semaphore, #tpu.memory_space<semaphore_mem>>
    %322 = tpu.memref_squeeze %321 : memref<1x1x!tpu.dma_semaphore, #tpu.memory_space<semaphore_mem>> -> memref<!tpu.dma_semaphore, #tpu.memory_space<semaphore_mem>>
    tpu.wait_dma2 semaphore(%322 : memref<!tpu.dma_semaphore, #tpu.memory_space<semaphore_mem>>) src(%318 : memref<1x256xf32, #tpu.memory_space<any>>) dst(%320 : memref<1x256xf32, #tpu.memory_space<vmem>>)
    %c31_i32_192 = arith.constant 31 : i32
    %c0_i32_193 = arith.constant 0 : i32
    %323 = tpu.memref_slice %arg2[%167, %c0_i32_193] : memref<512x256xf32, #tpu.memory_space<any>> -> memref<1x256xf32, #tpu.memory_space<any>>
    %c31_i32_194 = arith.constant 31 : i32
    %c0_i32_195 = arith.constant 0 : i32
    %324 = tpu.memref_slice %arg4[%0, %c31_i32_194, %c0_i32_195] : memref<2x32x256xf32, #tpu.memory_space<vmem>> -> memref<1x1x256xf32, #tpu.memory_space<vmem>>
    %325 = tpu.memref_squeeze %324 : memref<1x1x256xf32, #tpu.memory_space<vmem>> -> memref<1x256xf32, #tpu.memory_space<vmem>>
    %326 = tpu.memref_slice %arg5[%0, %c31_i32_192] : memref<2x32x!tpu.dma_semaphore, #tpu.memory_space<semaphore_mem>> -> memref<1x1x!tpu.dma_semaphore, #tpu.memory_space<semaphore_mem>>
    %327 = tpu.memref_squeeze %326 : memref<1x1x!tpu.dma_semaphore, #tpu.memory_space<semaphore_mem>> -> memref<!tpu.dma_semaphore, #tpu.memory_space<semaphore_mem>>
    tpu.wait_dma2 semaphore(%327 : memref<!tpu.dma_semaphore, #tpu.memory_space<semaphore_mem>>) src(%323 : memref<1x256xf32, #tpu.memory_space<any>>) dst(%325 : memref<1x256xf32, #tpu.memory_space<vmem>>)
    %328 = arith.index_cast %0 : i32 to index
    %c0 = arith.constant 0 : index
    %c0_196 = arith.constant 0 : index
    %329 = vector.load %arg4[%328, %c0, %c0_196] : memref<2x32x256xf32, #tpu.memory_space<vmem>>, vector<1x32x256xf32>
    %330 = vector.shape_cast %329 : vector<1x32x256xf32> to vector<32x256xf32>
    %c0_197 = arith.constant 0 : index
    %c0_198 = arith.constant 0 : index
    %331 = vector.load %arg3[%c0_197, %c0_198] : memref<32x256xf32, #tpu.memory_space<vmem>>, vector<32x256xf32>
    tpu.vector_store %arg3[%c0_197, %c0_198], %330 {strides = array<i32>} : memref<32x256xf32, #tpu.memory_space<vmem>>, vector<32x256xf32>,
    return
  }
  func.func @transform_1(%arg0: i32, %arg1: memref<40xi32, #tpu.memory_space<smem>>) -> (i32, i32) {
    %c0_i32 = arith.constant 0 : i32
    %c0_i32_0 = arith.constant 0 : i32
    return %arg0, %c0_i32 : i32, i32
  }
}

</mosaic_0001>

<llo_original>
// kernel: tpu_custom_call.1
$region0: #{tpu_custom_call.1}
  #allocation0 [shape = 'u32[]', space=smem, size = 0x4, offset = 0x4, fixed_abs, tag = 'smem constant byte address 0x4 - core index']
  #allocation1 [shape = 'u32[144,128]{1,0:T(1,128)}', space=vmem, size = 0x12000, scoped, tag = 'internal scratch']
  #allocation2 [shape = 'f32[2,32,256]{2,1,0:T(8,128)}', space=vmem, size = 0x10000, scoped, tag = 'scratch operand']
  #allocation3 [shape = 's32[64]{0}', space=sflag, size = 0x100, scoped, tag = 'scratch operand']
  #allocation4 [shape = 's32[1]{0}', space=sflag, size = 0x4, scoped, tag = 'scoped memory for tpu_custom_call.1']
  #allocation5 [shape = 'u8[512]{0}', space=smem, size = 0x200, scoped, tag = 'prefetched SMEM operand 0']
  #allocation8 [shape = 's32[]', space=sflag, size = 0x4, offset = 0, fixed_abs, tag = 'sflag constant byte address 0x0 - dummy sync flag']
  #allocation9 [shape = 's32[]', space=sflag, size = 0x4, offset = 0, fixed_abs, tag = 'sflag constant byte address 0x0 - dummy sync flag']
  #allocation10 [shape = 's32[]', space=sflag, size = 0x4, offset = 0, fixed_abs, tag = 'sflag constant byte address 0x0 - dummy sync flag']
  #allocation11 [shape = 's32[]', space=sflag, size = 0x4, offset = 0, fixed_abs, tag = 'sflag constant byte address 0x0 - dummy sync flag']
  #allocation12 [shape = 's32[]', space=sflag, size = 0x4, offset = 0, fixed_abs, tag = 'sflag constant byte address 0x0 - dummy sync flag']
  #allocation13 [shape = 's32[]', space=sflag, size = 0x4, offset = 0, fixed_abs, tag = 'sflag constant byte address 0x0 - dummy sync flag']
  #allocation14 [shape = 's32[]', space=sflag, size = 0x4, offset = 0, fixed_abs, tag = 'sflag constant byte address 0x0 - dummy sync flag']
  #allocation15 [shape = 's32[]', space=sflag, size = 0x4, offset = 0, fixed_abs, tag = 'sflag constant byte address 0x0 - dummy sync flag']
  #allocation16 [shape = 's32[]', space=sflag, size = 0x4, offset = 0, fixed_abs, tag = 'sflag constant byte address 0x0 - dummy sync flag']
  #allocation17 [shape = 's32[]', space=sflag, size = 0x4, offset = 0, fixed_abs, tag = 'sflag constant byte address 0x0 - dummy sync flag']
  #allocation18 [shape = 's32[]', space=sflag, size = 0x4, offset = 0, fixed_abs, tag = 'sflag constant byte address 0x0 - dummy sync flag']
  #allocation19 [shape = 's32[]', space=sflag, size = 0x4, offset = 0, fixed_abs, tag = 'sflag constant byte address 0x0 - dummy sync flag']
  #allocation20 [shape = 's32[]', space=sflag, size = 0x4, offset = 0, fixed_abs, tag = 'sflag constant byte address 0x0 - dummy sync flag']
  #allocation21 [shape = 's32[]', space=sflag, size = 0x4, offset = 0, fixed_abs, tag = 'sflag constant byte address 0x0 - dummy sync flag']
  #allocation22 [shape = 's32[]', space=sflag, size = 0x4, offset = 0, fixed_abs, tag = 'sflag constant byte address 0x0 - dummy sync flag']
  #allocation23 [shape = 's32[]', space=sflag, size = 0x4, offset = 0, fixed_abs, tag = 'sflag constant byte address 0x0 - dummy sync flag']
  #allocation24 [shape = 's32[]', space=sflag, size = 0x4, offset = 0, fixed_abs, tag = 'sflag constant byte address 0x0 - dummy sync flag']
  #allocation25 [shape = 's32[]', space=sflag, size = 0x4, offset = 0, fixed_abs, tag = 'sflag constant byte address 0x0 - dummy sync flag']
  #allocation26 [shape = 's32[]', space=sflag, size = 0x4, offset = 0, fixed_abs, tag = 'sflag constant byte address 0x0 - dummy sync flag']
  #allocation27 [shape = 's32[]', space=sflag, size = 0x4, offset = 0, fixed_abs, tag = 'sflag constant byte address 0x0 - dummy sync flag']
  #allocation28 [shape = 's32[]', space=sflag, size = 0x4, offset = 0, fixed_abs, tag = 'sflag constant byte address 0x0 - dummy sync flag']
  #allocation29 [shape = 's32[]', space=sflag, size = 0x4, offset = 0, fixed_abs, tag = 'sflag constant byte address 0x0 - dummy sync flag']
  #allocation30 [shape = 's32[]', space=sflag, size = 0x4, offset = 0, fixed_abs, tag = 'sflag constant byte address 0x0 - dummy sync flag']
  #allocation31 [shape = 's32[]', space=sflag, size = 0x4, offset = 0, fixed_abs, tag = 'sflag constant byte address 0x0 - dummy sync flag']
  #allocation32 [shape = 's32[]', space=sflag, size = 0x4, offset = 0, fixed_abs, tag = 'sflag constant byte address 0x0 - dummy sync flag']
  #allocation33 [shape = 's32[]', space=sflag, size = 0x4, offset = 0, fixed_abs, tag = 'sflag constant byte address 0x0 - dummy sync flag']
  #allocation34 [shape = 's32[]', space=sflag, size = 0x4, offset = 0, fixed_abs, tag = 'sflag constant byte address 0x0 - dummy sync flag']
  #allocation35 [shape = 's32[]', space=sflag, size = 0x4, offset = 0, fixed_abs, tag = 'sflag constant byte address 0x0 - dummy sync flag']
  #allocation36 [shape = 's32[]', space=sflag, size = 0x4, offset = 0, fixed_abs, tag = 'sflag constant byte address 0x0 - dummy sync flag']
  #allocation37 [shape = 's32[]', space=sflag, size = 0x4, offset = 0, fixed_abs, tag = 'sflag constant byte address 0x0 - dummy sync flag']
  #allocation38 [shape = 's32[]', space=sflag, size = 0x4, offset = 0, fixed_abs, tag = 'sflag constant byte address 0x0 - dummy sync flag']
  #allocation39 [shape = 's32[]', space=sflag, size = 0x4, offset = 0, fixed_abs, tag = 'sflag constant byte address 0x0 - dummy sync flag']
  #allocation40 [shape = 's32[]', space=sflag, size = 0x4, offset = 0, fixed_abs, tag = 'sflag constant byte address 0x0 - dummy sync flag']
  #allocation41 [shape = 's32[]', space=sflag, size = 0x4, offset = 0, fixed_abs, tag = 'sflag constant byte address 0x0 - dummy sync flag']
  #allocation42 [shape = 's32[]', space=sflag, size = 0x4, offset = 0, fixed_abs, tag = 'sflag constant byte address 0x0 - dummy sync flag']
  #allocation43 [shape = 's32[]', space=sflag, size = 0x4, offset = 0, fixed_abs, tag = 'sflag constant byte address 0x0 - dummy sync flag']
  #allocation44 [shape = 's32[]', space=sflag, size = 0x4, offset = 0, fixed_abs, tag = 'sflag constant byte address 0x0 - dummy sync flag']
  #allocation45 [shape = 's32[]', space=sflag, size = 0x4, offset = 0, fixed_abs, tag = 'sflag constant byte address 0x0 - dummy sync flag']
  #allocation46 [shape = 's32[]', space=sflag, size = 0x4, offset = 0, fixed_abs, tag = 'sflag constant byte address 0x0 - dummy sync flag']
  #allocation47 [shape = 's32[]', space=sflag, size = 0x4, offset = 0, fixed_abs, tag = 'sflag constant byte address 0x0 - dummy sync flag']
  #allocation48 [shape = 's32[]', space=sflag, size = 0x4, offset = 0, fixed_abs, tag = 'sflag constant byte address 0x0 - dummy sync flag']
  #allocation49 [shape = 's32[]', space=sflag, size = 0x4, offset = 0, fixed_abs, tag = 'sflag constant byte address 0x0 - dummy sync flag']
  #allocation50 [shape = 's32[]', space=sflag, size = 0x4, offset = 0, fixed_abs, tag = 'sflag constant byte address 0x0 - dummy sync flag']
  #allocation51 [shape = 's32[]', space=sflag, size = 0x4, offset = 0, fixed_abs, tag = 'sflag constant byte address 0x0 - dummy sync flag']
  #allocation52 [shape = 's32[]', space=sflag, size = 0x4, offset = 0, fixed_abs, tag = 'sflag constant byte address 0x0 - dummy sync flag']
  #allocation53 [shape = 's32[]', space=sflag, size = 0x4, offset = 0, fixed_abs, tag = 'sflag constant byte address 0x0 - dummy sync flag']
  #allocation54 [shape = 's32[]', space=sflag, size = 0x4, offset = 0, fixed_abs, tag = 'sflag constant byte address 0x0 - dummy sync flag']
  #allocation55 [shape = 's32[]', space=sflag, size = 0x4, offset = 0, fixed_abs, tag = 'sflag constant byte address 0x0 - dummy sync flag']
  #allocation56 [shape = 's32[]', space=sflag, size = 0x4, offset = 0, fixed_abs, tag = 'sflag constant byte address 0x0 - dummy sync flag']
  #allocation57 [shape = 's32[]', space=sflag, size = 0x4, offset = 0, fixed_abs, tag = 'sflag constant byte address 0x0 - dummy sync flag']
  #allocation58 [shape = 's32[]', space=sflag, size = 0x4, offset = 0, fixed_abs, tag = 'sflag constant byte address 0x0 - dummy sync flag']
  #allocation59 [shape = 's32[]', space=sflag, size = 0x4, offset = 0, fixed_abs, tag = 'sflag constant byte address 0x0 - dummy sync flag']
  #allocation60 [shape = 's32[]', space=sflag, size = 0x4, offset = 0, fixed_abs, tag = 'sflag constant byte address 0x0 - dummy sync flag']
  #allocation61 [shape = 's32[]', space=sflag, size = 0x4, offset = 0, fixed_abs, tag = 'sflag constant byte address 0x0 - dummy sync flag']
  #allocation62 [shape = 's32[]', space=sflag, size = 0x4, offset = 0, fixed_abs, tag = 'sflag constant byte address 0x0 - dummy sync flag']
  #allocation63 [shape = 's32[]', space=sflag, size = 0x4, offset = 0, fixed_abs, tag = 'sflag constant byte address 0x0 - dummy sync flag']
  #allocation64 [shape = 's32[]', space=sflag, size = 0x4, offset = 0, fixed_abs, tag = 'sflag constant byte address 0x0 - dummy sync flag']
  #allocation65 [shape = 's32[]', space=sflag, size = 0x4, offset = 0, fixed_abs, tag = 'sflag constant byte address 0x0 - dummy sync flag']
  #allocation66 [shape = 's32[]', space=sflag, size = 0x4, offset = 0, fixed_abs, tag = 'sflag constant byte address 0x0 - dummy sync flag']
  #allocation67 [shape = 's32[]', space=sflag, size = 0x4, offset = 0, fixed_abs, tag = 'sflag constant byte address 0x0 - dummy sync flag']
  #allocation68 [shape = 's32[]', space=sflag, size = 0x4, offset = 0, fixed_abs, tag = 'sflag constant byte address 0x0 - dummy sync flag']
  #allocation69 [shape = 's32[]', space=sflag, size = 0x4, offset = 0, fixed_abs, tag = 'sflag constant byte address 0x0 - dummy sync flag']
  #allocation70 [shape = 's32[]', space=sflag, size = 0x4, offset = 0, fixed_abs, tag = 'sflag constant byte address 0x0 - dummy sync flag']
  #allocation71 [shape = 's32[]', space=sflag, size = 0x4, offset = 0, fixed_abs, tag = 'sflag constant byte address 0x0 - dummy sync flag']
  %s0 = inlined_call_operand.hbm [shape: s32[40], index: 0, kind: input, shape index: {}]
  %s1 = inlined_call_operand.hbm [shape: f32[512,256], index: 1, kind: input, shape index: {}]
  %s2 = inlined_call_operand.hbm [shape: f32[40,256], index: 2, kind: output, shape index: {}]
  %s3 = sld [smem:[#allocation0]]
  $region33: #{tpu_custom_call.1} parent=0
    _
  %s5 = ssub.s32 1, %s3
  %s6 = scalar_select 0, %s5, %s3
  %8 = dma.hbm_to_smem %s0, 16, [#allocation5], [#allocation4]
  %9 = dma.done [#allocation4], 16
  %10 = sfence
  $region1: #{tpu_custom_call.1} parent=0
    #allocation6 [shape = 'u8[65536]{0}', space=vmem, size = 0x10000, scoped, tag = 'output window, operand 0']
    #allocation7 [shape = 's32[2]{0}', space=sflag, size = 0x8, scoped, tag = 'scoped memory for tpu_custom_call.1']
    %11 = vsyncpa [#allocation7], 0
    %s12 = scalar_lea.sflag [#allocation7], 1
    %13 = vsyncpa %s12, 0
    loop: start=0, step=1, limit=3
    $region2: #{tpu_custom_call.1} parent=1 // loop_pre_header
      _
    $region3: #{tpu_custom_call.1} parent=1 // loop_header
      %s15 = sphi 0, %s19
      %p16 = scmp.ge.s32.totalorder %s15, 3
      %s24 = sphi 0, %s26
      %s27 = sphi 0, %s24
      %s37 = sphi 0, %s27
    $region4: #{tpu_custom_call.1} parent=1 // loop_header_branch
      %18 = sbr.rel (%p16) target = $region8
    $region5: #{tpu_custom_call.1} parent=1 // loop_body
      %s20 = ssub.s32 %s15, 1
      %s21 = sadd.s32 %s15, 1
      %s22 = ssub.s32 %s15, %s21
      %p23 = scmp.eq.s32.totalorder %s22, 0
      %s25 = sadd.s32 %s24, 1
      %s26 = scalar_select %p23, %s24, %s25
      %p28 = pneg %p23
      %p29 = scmp.eq.s32.totalorder %s15, 1
      %p30 = por %p28, %p29
      %p31 = scmp.ne.s32.totalorder %s24, %s27
      %p32 = scmp.eq.s32.totalorder %s15, 0
      %p33 = por %p31, %p32
      %p34 = scmp.ne.s32.totalorder %s24, %s27
      %p35 = scmp.eq.s32.totalorder %s20, 1
      %p36 = por %p34, %p35
      %p38 = scmp.ne.s32.totalorder %s27, %s37
      %p39 = scmp.eq.s32.totalorder %s20, 0
      %p40 = por %p38, %p39
      %p41 = scmp.lt.s32.totalorder %s15, 2
      // Predicated region
      $region9: #{tpu_custom_call.1} parent=5 // pred_check
        %p42 = pneg %p41
      $region10: #{tpu_custom_call.1} parent=5 // pred_check_branch
        %44 = sbr.rel (%p42) target = $region12
      $region11: #{tpu_custom_call.1} parent=5 // pred_region
        %p45 = pneg %p33
        %p46 = pneg %p30
        %s47 = sand.u32 %s24, 1
        %s48 = scalar_lea.sflag [#allocation7], %s47
        %s49 = sand.u32 %s24, 1
        %s50 = smul.addr %s49, 64
        %s51 = scalar_lea.vmem [#allocation6], %s50
        %s52 = smul.u32 4, %s15
        %s53 = ssub.s32 5, %s52
        %p54 = scmp.lt.s32.totalorder %s53, 4
        %s55 = scalar_select %p54, %s53, 4
        %s56 = smul.u32 128, %s55
        %s57 = smul.u32 %s56, 2
        %s58 = sand.u32 %s15, 1
        %p59 = scmp.eq.s32.totalorder %s15, 0
        // Predicated region
        $region13: #{tpu_custom_call.1} parent=11 // pred_check
          %p60 = pneg %p59
        $region14: #{tpu_custom_call.1} parent=11 // pred_check_branch
          %62 = sbr.rel (%p60) target = $region16
        $region15: #{tpu_custom_call.1} parent=11 // pred_region
          %s63 = sld [smem:[#allocation5]]
          %s64 = sshrl.u32 %s63, 3
          %s65 = sand.u32 %s63, 7
          %s66 = smul.u32 %s64, 16
          %s67 = sadd.s32 %s65, %s66
          %s68 = smul.addr %s67, 16
          %s69 = scalar_lea.hbm %s1, %s68
          %s71 = sshll.u32 [#allocation2], 4
          %s72 = int_to_ptr.vmem [resolvable:$true] %s71
          %74 = dma.hbm_to_vmem [thread:$0]  %s69, 32, %s72, [#allocation3], 128, 128, 1
          %s75 = sld [smem:[#allocation5 + $0x1]]
          %s76 = sshrl.u32 %s75, 3
          %s77 = sand.u32 %s75, 7
          %s78 = smul.u32 %s76, 16
          %s79 = sadd.s32 %s77, %s78
          %s80 = smul.addr %s79, 16
          %s81 = scalar_lea.hbm %s1, %s80
          %s82 = scalar_lea.vmem [#allocation2], 1
          %s83 = scalar_lea.sflag [#allocation3], 1
          %s85 = sshll.u32 %s82, 4
          %s86 = int_to_ptr.vmem [resolvable:$true] %s85
          %88 = dma.hbm_to_vmem [thread:$0]  %s81, 32, %s86, %s83, 128, 128, 1
          %s89 = sld [smem:[#allocation5 + $0x2]]
          %s90 = sshrl.u32 %s89, 3
          %s91 = sand.u32 %s89, 7
          %s92 = smul.u32 %s90, 16
          %s93 = sadd.s32 %s91, %s92
          %s94 = smul.addr %s93, 16
          %s95 = scalar_lea.hbm %s1, %s94
          %s96 = scalar_lea.vmem [#allocation2], 2
          %s97 = scalar_lea.sflag [#allocation3], 2
          %s99 = sshll.u32 %s96, 4
          %s100 = int_to_ptr.vmem [resolvable:$true] %s99
          %102 = dma.hbm_to_vmem [thread:$0]  %s95, 32, %s100, %s97, 128, 128, 1
          %s103 = sld [smem:[#allocation5 + $0x3]]
          %s104 = sshrl.u32 %s103, 3
          %s105 = sand.u32 %s103, 7
          %s106 = smul.u32 %s104, 16
          %s107 = sadd.s32 %s105, %s106
          %s108 = smul.addr %s107, 16
          %s109 = scalar_lea.hbm %s1, %s108
          %s110 = scalar_lea.vmem [#allocation2], 3
          %s111 = scalar_lea.sflag [#allocation3], 3
          %s113 = sshll.u32 %s110, 4
          %s114 = int_to_ptr.vmem [resolvable:$true] %s113
          %116 = dma.hbm_to_vmem [thread:$0]  %s109, 32, %s114, %s111, 128, 128, 1
          %s117 = sld [smem:[#allocation5 + $0x4]]
          %s118 = sshrl.u32 %s117, 3
          %s119 = sand.u32 %s117, 7
          %s120 = smul.u32 %s118, 16
          %s121 = sadd.s32 %s119, %s120
          %s122 = smul.addr %s121, 16
          %s123 = scalar_lea.hbm %s1, %s122
          %s124 = scalar_lea.vmem [#allocation2], 4
          %s125 = scalar_lea.sflag [#allocation3], 4
          %s127 = sshll.u32 %s124, 4
          %s128 = int_to_ptr.vmem [resolvable:$true] %s127
          %130 = dma.hbm_to_vmem [thread:$0]  %s123, 32, %s128, %s125, 128, 128, 1
          %s131 = sld [smem:[#allocation5 + $0x5]]
          %s132 = sshrl.u32 %s131, 3
          %s133 = sand.u32 %s131, 7
          %s134 = smul.u32 %s132, 16
          %s135 = sadd.s32 %s133, %s134
          %s136 = smul.addr %s135, 16
          %s137 = scalar_lea.hbm %s1, %s136
          %s138 = scalar_lea.vmem [#allocation2], 5
          %s139 = scalar_lea.sflag [#allocation3], 5
          %s141 = sshll.u32 %s138, 4
          %s142 = int_to_ptr.vmem [resolvable:$true] %s141
          %144 = dma.hbm_to_vmem [thread:$0]  %s137, 32, %s142, %s139, 128, 128, 1
          %s145 = sld [smem:[#allocation5 + $0x6]]
          %s146 = sshrl.u32 %s145, 3
          %s147 = sand.u32 %s145, 7
          %s148 = smul.u32 %s146, 16
          %s149 = sadd.s32 %s147, %s148
          %s150 = smul.addr %s149, 16
          %s151 = scalar_lea.hbm %s1, %s150
          %s152 = scalar_lea.vmem [#allocation2], 6
          %s153 = scalar_lea.sflag [#allocation3], 6
          %s155 = sshll.u32 %s152, 4
          %s156 = int_to_ptr.vmem [resolvable:$true] %s155
          %158 = dma.hbm_to_vmem [thread:$0]  %s151, 32, %s156, %s153, 128, 128, 1
          %s159 = sld [smem:[#allocation5 + $0x7]]
          %s160 = sshrl.u32 %s159, 3
          %s161 = sand.u32 %s159, 7
          %s162 = smul.u32 %s160, 16
          %s163 = sadd.s32 %s161, %s162
          %s164 = smul.addr %s163, 16
          %s165 = scalar_lea.hbm %s1, %s164
          %s166 = scalar_lea.vmem [#allocation2], 7
          %s167 = scalar_lea.sflag [#allocation3], 7
          %s169 = sshll.u32 %s166, 4
          %s170 = int_to_ptr.vmem [resolvable:$true] %s169
          %172 = dma.hbm_to_vmem [thread:$0]  %s165, 32, %s170, %s167, 128, 128, 1
          %s173 = sld [smem:[#allocation5 + $0x8]]
          %s174 = sshrl.u32 %s173, 3
          %s175 = sand.u32 %s173, 7
          %s176 = smul.u32 %s174, 16
          %s177 = sadd.s32 %s175, %s176
          %s178 = smul.addr %s177, 16
          %s179 = scalar_lea.hbm %s1, %s178
          %s180 = scalar_lea.vmem [#allocation2], 16
          %s181 = scalar_lea.sflag [#allocation3], 8
          %s183 = sshll.u32 %s180, 4
          %s184 = int_to_ptr.vmem [resolvable:$true] %s183
          %186 = dma.hbm_to_vmem [thread:$0]  %s179, 32, %s184, %s181, 128, 128, 1
          %s187 = sld [smem:[#allocation5 + $0x9]]
          %s188 = sshrl.u32 %s187, 3
          %s189 = sand.u32 %s187, 7
          %s190 = smul.u32 %s188, 16
          %s191 = sadd.s32 %s189, %s190
          %s192 = smul.addr %s191, 16
          %s193 = scalar_lea.hbm %s1, %s192
          %s194 = scalar_lea.vmem [#allocation2], 17
          %s195 = scalar_lea.sflag [#allocation3], 9
          %s197 = sshll.u32 %s194, 4
          %s198 = int_to_ptr.vmem [resolvable:$true] %s197
          %200 = dma.hbm_to_vmem [thread:$0]  %s193, 32, %s198, %s195, 128, 128, 1
          %s201 = sld [smem:[#allocation5 + $0xa]]
          %s202 = sshrl.u32 %s201, 3
          %s203 = sand.u32 %s201, 7
          %s204 = smul.u32 %s202, 16
          %s205 = sadd.s32 %s203, %s204
          %s206 = smul.addr %s205, 16
          %s207 = scalar_lea.hbm %s1, %s206
          %s208 = scalar_lea.vmem [#allocation2], 18
          %s209 = scalar_lea.sflag [#allocation3], 10
          %s211 = sshll.u32 %s208, 4
          %s212 = int_to_ptr.vmem [resolvable:$true] %s211
          %214 = dma.hbm_to_vmem [thread:$0]  %s207, 32, %s212, %s209, 128, 128, 1
          %s215 = sld [smem:[#allocation5 + $0xb]]
          %s216 = sshrl.u32 %s215, 3
          %s217 = sand.u32 %s215, 7
          %s218 = smul.u32 %s216, 16
          %s219 = sadd.s32 %s217, %s218
          %s220 = smul.addr %s219, 16
          %s221 = scalar_lea.hbm %s1, %s220
          %s222 = scalar_lea.vmem [#allocation2], 19
          %s223 = scalar_lea.sflag [#allocation3], 11
          %s225 = sshll.u32 %s222, 4
          %s226 = int_to_ptr.vmem [resolvable:$true] %s225
          %228 = dma.hbm_to_vmem [thread:$0]  %s221, 32, %s226, %s223, 128, 128, 1
          %s229 = sld [smem:[#allocation5 + $0xc]]
          %s230 = sshrl.u32 %s229, 3
          %s231 = sand.u32 %s229, 7
          %s232 = smul.u32 %s230, 16
          %s233 = sadd.s32 %s231, %s232
          %s234 = smul.addr %s233, 16
          %s235 = scalar_lea.hbm %s1, %s234
          %s236 = scalar_lea.vmem [#allocation2], 20
          %s237 = scalar_lea.sflag [#allocation3], 12
          %s239 = sshll.u32 %s236, 4
          %s240 = int_to_ptr.vmem [resolvable:$true] %s239
          %242 = dma.hbm_to_vmem [thread:$0]  %s235, 32, %s240, %s237, 128, 128, 1
          %s243 = sld [smem:[#allocation5 + $0xd]]
          %s244 = sshrl.u32 %s243, 3
          %s245 = sand.u32 %s243, 7
          %s246 = smul.u32 %s244, 16
          %s247 = sadd.s32 %s245, %s246
          %s248 = smul.addr %s247, 16
          %s249 = scalar_lea.hbm %s1, %s248
          %s250 = scalar_lea.vmem [#allocation2], 21
          %s251 = scalar_lea.sflag [#allocation3], 13
          %s253 = sshll.u32 %s250, 4
          %s254 = int_to_ptr.vmem [resolvable:$true] %s253
          %256 = dma.hbm_to_vmem [thread:$0]  %s249, 32, %s254, %s251, 128, 128, 1
          %s257 = sld [smem:[#allocation5 + $0xe]]
          %s258 = sshrl.u32 %s257, 3
          %s259 = sand.u32 %s257, 7
          %s260 = smul.u32 %s258, 16
          %s261 = sadd.s32 %s259, %s260
          %s262 = smul.addr %s261, 16
          %s263 = scalar_lea.hbm %s1, %s262
          %s264 = scalar_lea.vmem [#allocation2], 22
          %s265 = scalar_lea.sflag [#allocation3], 14
          %s267 = sshll.u32 %s264, 4
          %s268 = int_to_ptr.vmem [resolvable:$true] %s267
          %270 = dma.hbm_to_vmem [thread:$0]  %s263, 32, %s268, %s265, 128, 128, 1
          %s271 = sld [smem:[#allocation5 + $0xf]]
          %s272 = sshrl.u32 %s271, 3
          %s273 = sand.u32 %s271, 7
          %s274 = smul.u32 %s272, 16
          %s275 = sadd.s32 %s273, %s274
          %s276 = smul.addr %s275, 16
          %s277 = scalar_lea.hbm %s1, %s276
          %s278 = scalar_lea.vmem [#allocation2], 23
          %s279 = scalar_lea.sflag [#allocation3], 15
          %s281 = sshll.u32 %s278, 4
          %s282 = int_to_ptr.vmem [resolvable:$true] %s281
          %284 = dma.hbm_to_vmem [thread:$0]  %s277, 32, %s282, %s279, 128, 128, 1
          %s285 = sld [smem:[#allocation5 + $0x10]]
          %s286 = sshrl.u32 %s285, 3
          %s287 = sand.u32 %s285, 7
          %s288 = smul.u32 %s286, 16
          %s289 = sadd.s32 %s287, %s288
          %s290 = smul.addr %s289, 16
          %s291 = scalar_lea.hbm %s1, %s290
          %s292 = scalar_lea.vmem [#allocation2], 32
          %s293 = scalar_lea.sflag [#allocation3], 16
          %s295 = sshll.u32 %s292, 4
          %s296 = int_to_ptr.vmem [resolvable:$true] %s295
          %298 = dma.hbm_to_vmem [thread:$0]  %s291, 32, %s296, %s293, 128, 128, 1
          %s299 = sld [smem:[#allocation5 + $0x11]]
          %s300 = sshrl.u32 %s299, 3
          %s301 = sand.u32 %s299, 7
          %s302 = smul.u32 %s300, 16
          %s303 = sadd.s32 %s301, %s302
          %s304 = smul.addr %s303, 16
          %s305 = scalar_lea.hbm %s1, %s304
          %s306 = scalar_lea.vmem [#allocation2], 33
          %s307 = scalar_lea.sflag [#allocation3], 17
          %s309 = sshll.u32 %s306, 4
          %s310 = int_to_ptr.vmem [resolvable:$true] %s309
          %312 = dma.hbm_to_vmem [thread:$0]  %s305, 32, %s310, %s307, 128, 128, 1
          %s313 = sld [smem:[#allocation5 + $0x12]]
          %s314 = sshrl.u32 %s313, 3
          %s315 = sand.u32 %s313, 7
          %s316 = smul.u32 %s314, 16
          %s317 = sadd.s32 %s315, %s316
          %s318 = smul.addr %s317, 16
          %s319 = scalar_lea.hbm %s1, %s318
          %s320 = scalar_lea.vmem [#allocation2], 34
          %s321 = scalar_lea.sflag [#allocation3], 18
          %s323 = sshll.u32 %s320, 4
          %s324 = int_to_ptr.vmem [resolvable:$true] %s323
          %326 = dma.hbm_to_vmem [thread:$0]  %s319, 32, %s324, %s321, 128, 128, 1
          %s327 = sld [smem:[#allocation5 + $0x13]]
          %s328 = sshrl.u32 %s327, 3
          %s329 = sand.u32 %s327, 7
          %s330 = smul.u32 %s328, 16
          %s331 = sadd.s32 %s329, %s330
          %s332 = smul.addr %s331, 16
          %s333 = scalar_lea.hbm %s1, %s332
          %s334 = scalar_lea.vmem [#allocation2], 35
          %s335 = scalar_lea.sflag [#allocation3], 19
          %s337 = sshll.u32 %s334, 4
          %s338 = int_to_ptr.vmem [resolvable:$true] %s337
          %340 = dma.hbm_to_vmem [thread:$0]  %s333, 32, %s338, %s335, 128, 128, 1
          %s341 = sld [smem:[#allocation5 + $0x14]]
          %s342 = sshrl.u32 %s341, 3
          %s343 = sand.u32 %s341, 7
          %s344 = smul.u32 %s342, 16
          %s345 = sadd.s32 %s343, %s344
          %s346 = smul.addr %s345, 16
          %s347 = scalar_lea.hbm %s1, %s346
          %s348 = scalar_lea.vmem [#allocation2], 36
          %s349 = scalar_lea.sflag [#allocation3], 20
          %s351 = sshll.u32 %s348, 4
          %s352 = int_to_ptr.vmem [resolvable:$true] %s351
          %354 = dma.hbm_to_vmem [thread:$0]  %s347, 32, %s352, %s349, 128, 128, 1
          %s355 = sld [smem:[#allocation5 + $0x15]]
          %s356 = sshrl.u32 %s355, 3
          %s357 = sand.u32 %s355, 7
          %s358 = smul.u32 %s356, 16
          %s359 = sadd.s32 %s357, %s358
          %s360 = smul.addr %s359, 16
          %s361 = scalar_lea.hbm %s1, %s360
          %s362 = scalar_lea.vmem [#allocation2], 37
          %s363 = scalar_lea.sflag [#allocation3], 21
          %s365 = sshll.u32 %s362, 4
          %s366 = int_to_ptr.vmem [resolvable:$true] %s365
          %368 = dma.hbm_to_vmem [thread:$0]  %s361, 32, %s366, %s363, 128, 128, 1
          %s369 = sld [smem:[#allocation5 + $0x16]]
          %s370 = sshrl.u32 %s369, 3
          %s371 = sand.u32 %s369, 7
          %s372 = smul.u32 %s370, 16
          %s373 = sadd.s32 %s371, %s372
          %s374 = smul.addr %s373, 16
          %s375 = scalar_lea.hbm %s1, %s374
          %s376 = scalar_lea.vmem [#allocation2], 38
          %s377 = scalar_lea.sflag [#allocation3], 22
          %s379 = sshll.u32 %s376, 4
          %s380 = int_to_ptr.vmem [resolvable:$true] %s379
          %382 = dma.hbm_to_vmem [thread:$0]  %s375, 32, %s380, %s377, 128, 128, 1
          %s383 = sld [smem:[#allocation5 + $0x17]]
          %s384 = sshrl.u32 %s383, 3
          %s385 = sand.u32 %s383, 7
          %s386 = smul.u32 %s384, 16
          %s387 = sadd.s32 %s385, %s386
          %s388 = smul.addr %s387, 16
          %s389 = scalar_lea.hbm %s1, %s388
          %s390 = scalar_lea.vmem [#allocation2], 39
          %s391 = scalar_lea.sflag [#allocation3], 23
          %s393 = sshll.u32 %s390, 4
          %s394 = int_to_ptr.vmem [resolvable:$true] %s393
          %396 = dma.hbm_to_vmem [thread:$0]  %s389, 32, %s394, %s391, 128, 128, 1
          %s397 = sld [smem:[#allocation5 + $0x18]]
          %s398 = sshrl.u32 %s397, 3
          %s399 = sand.u32 %s397, 7
          %s400 = smul.u32 %s398, 16
          %s401 = sadd.s32 %s399, %s400
          %s402 = smul.addr %s401, 16
          %s403 = scalar_lea.hbm %s1, %s402
          %s404 = scalar_lea.vmem [#allocation2], 48
          %s405 = scalar_lea.sflag [#allocation3], 24
          %s407 = sshll.u32 %s404, 4
          %s408 = int_to_ptr.vmem [resolvable:$true] %s407
          %410 = dma.hbm_to_vmem [thread:$0]  %s403, 32, %s408, %s405, 128, 128, 1
          %s411 = sld [smem:[#allocation5 + $0x19]]
          %s412 = sshrl.u32 %s411, 3
          %s413 = sand.u32 %s411, 7
          %s414 = smul.u32 %s412, 16
          %s415 = sadd.s32 %s413, %s414
          %s416 = smul.addr %s415, 16
          %s417 = scalar_lea.hbm %s1, %s416
          %s418 = scalar_lea.vmem [#allocation2], 49
          %s419 = scalar_lea.sflag [#allocation3], 25
          %s421 = sshll.u32 %s418, 4
          %s422 = int_to_ptr.vmem [resolvable:$true] %s421
          %424 = dma.hbm_to_vmem [thread:$0]  %s417, 32, %s422, %s419, 128, 128, 1
          %s425 = sld [smem:[#allocation5 + $0x1a]]
          %s426 = sshrl.u32 %s425, 3
          %s427 = sand.u32 %s425, 7
          %s428 = smul.u32 %s426, 16
          %s429 = sadd.s32 %s427, %s428
          %s430 = smul.addr %s429, 16
          %s431 = scalar_lea.hbm %s1, %s430
          %s432 = scalar_lea.vmem [#allocation2], 50
          %s433 = scalar_lea.sflag [#allocation3], 26
          %s435 = sshll.u32 %s432, 4
          %s436 = int_to_ptr.vmem [resolvable:$true] %s435
          %438 = dma.hbm_to_vmem [thread:$0]  %s431, 32, %s436, %s433, 128, 128, 1
          %s439 = sld [smem:[#allocation5 + $0x1b]]
          %s440 = sshrl.u32 %s439, 3
          %s441 = sand.u32 %s439, 7
          %s442 = smul.u32 %s440, 16
          %s443 = sadd.s32 %s441, %s442
          %s444 = smul.addr %s443, 16
          %s445 = scalar_lea.hbm %s1, %s444
          %s446 = scalar_lea.vmem [#allocation2], 51
          %s447 = scalar_lea.sflag [#allocation3], 27
          %s449 = sshll.u32 %s446, 4
          %s450 = int_to_ptr.vmem [resolvable:$true] %s449
          %452 = dma.hbm_to_vmem [thread:$0]  %s445, 32, %s450, %s447, 128, 128, 1
          %s453 = sld [smem:[#allocation5 + $0x1c]]
          %s454 = sshrl.u32 %s453, 3
          %s455 = sand.u32 %s453, 7
          %s456 = smul.u32 %s454, 16
          %s457 = sadd.s32 %s455, %s456
          %s458 = smul.addr %s457, 16
          %s459 = scalar_lea.hbm %s1, %s458
          %s460 = scalar_lea.vmem [#allocation2], 52
          %s461 = scalar_lea.sflag [#allocation3], 28
          %s463 = sshll.u32 %s460, 4
          %s464 = int_to_ptr.vmem [resolvable:$true] %s463
          %466 = dma.hbm_to_vmem [thread:$0]  %s459, 32, %s464, %s461, 128, 128, 1
          %s467 = sld [smem:[#allocation5 + $0x1d]]
          %s468 = sshrl.u32 %s467, 3
          %s469 = sand.u32 %s467, 7
          %s470 = smul.u32 %s468, 16
          %s471 = sadd.s32 %s469, %s470
          %s472 = smul.addr %s471, 16
          %s473 = scalar_lea.hbm %s1, %s472
          %s474 = scalar_lea.vmem [#allocation2], 53
          %s475 = scalar_lea.sflag [#allocation3], 29
          %s477 = sshll.u32 %s474, 4
          %s478 = int_to_ptr.vmem [resolvable:$true] %s477
          %480 = dma.hbm_to_vmem [thread:$0]  %s473, 32, %s478, %s475, 128, 128, 1
          %s481 = sld [smem:[#allocation5 + $0x1e]]
          %s482 = sshrl.u32 %s481, 3
          %s483 = sand.u32 %s481, 7
          %s484 = smul.u32 %s482, 16
          %s485 = sadd.s32 %s483, %s484
          %s486 = smul.addr %s485, 16
          %s487 = scalar_lea.hbm %s1, %s486
          %s488 = scalar_lea.vmem [#allocation2], 54
          %s489 = scalar_lea.sflag [#allocation3], 30
          %s491 = sshll.u32 %s488, 4
          %s492 = int_to_ptr.vmem [resolvable:$true] %s491
          %494 = dma.hbm_to_vmem [thread:$0]  %s487, 32, %s492, %s489, 128, 128, 1
          %s495 = sld [smem:[#allocation5 + $0x1f]]
          %s496 = sshrl.u32 %s495, 3
          %s497 = sand.u32 %s495, 7
          %s498 = smul.u32 %s496, 16
          %s499 = sadd.s32 %s497, %s498
          %s500 = smul.addr %s499, 16
          %s501 = scalar_lea.hbm %s1, %s500
          %s502 = scalar_lea.vmem [#allocation2], 55
          %s503 = scalar_lea.sflag [#allocation3], 31
          %s505 = sshll.u32 %s502, 4
          %s506 = int_to_ptr.vmem [resolvable:$true] %s505
          %508 = dma.hbm_to_vmem [thread:$0]  %s501, 32, %s506, %s503, 128, 128, 1
        $region16: #{tpu_custom_call.1} parent=11 // pred_fallthru
          _
        %s509 = sadd.s32 %s15, 1
        %p510 = scmp.lt.s32.totalorder %s509, 2
        // Predicated region
        $region17: #{tpu_custom_call.1} parent=11 // pred_check
          %p511 = pneg %p510
        $region18: #{tpu_custom_call.1} parent=11 // pred_check_branch
          %513 = sbr.rel (%p511) target = $region20
        $region19: #{tpu_custom_call.1} parent=11 // pred_region
          %s514 = ssub.s32 1, %s58
          %s515 = smul.u32 %s509, 32
          %p516 = scmp.lt.s32.totalorder %s515, 39
          %s517 = scalar_select %p516, %s515, 39
          %s518 = sld [smem:[#allocation5 + %s517]]
          %s519 = sshrl.u32 %s518, 3
          %s520 = sand.u32 %s518, 7
          %s521 = smul.u32 %s519, 16
          %s522 = sadd.s32 %s520, %s521
          %s523 = smul.addr %s522, 16
          %s524 = scalar_lea.hbm %s1, %s523
          %s525 = smul.u32 %s514, 64
          %s526 = scalar_lea.vmem [#allocation2], %s525
          %s527 = smul.u32 %s514, 32
          %s528 = scalar_lea.sflag [#allocation3], %s527
          %s530 = sshll.u32 %s526, 4
          %s531 = int_to_ptr.vmem [resolvable:$true] %s530
          %533 = dma.hbm_to_vmem [thread:$0]  %s524, 32, %s531, %s528, 128, 128, 1
          %s534 = sadd.s32 %s515, 1
          %p535 = scmp.lt.s32.totalorder %s534, 39
          %s536 = scalar_select %p535, %s534, 39
          %s537 = sld [smem:[#allocation5 + %s536]]
          %s538 = sshrl.u32 %s537, 3
          %s539 = sand.u32 %s537, 7
          %s540 = smul.u32 %s538, 16
          %s541 = sadd.s32 %s539, %s540
          %s542 = smul.addr %s541, 16
          %s543 = scalar_lea.hbm %s1, %s542
          %s544 = sadd.s32 1, %s525
          %s545 = scalar_lea.vmem [#allocation2], %s544
          %s546 = sadd.s32 1, %s527
          %s547 = scalar_lea.sflag [#allocation3], %s546
          %s549 = sshll.u32 %s545, 4
          %s550 = int_to_ptr.vmem [resolvable:$true] %s549
          %552 = dma.hbm_to_vmem [thread:$0]  %s543, 32, %s550, %s547, 128, 128, 1
          %s553 = sadd.s32 %s515, 2
          %p554 = scmp.lt.s32.totalorder %s553, 39
          %s555 = scalar_select %p554, %s553, 39
          %s556 = sld [smem:[#allocation5 + %s555]]
          %s557 = sshrl.u32 %s556, 3
          %s558 = sand.u32 %s556, 7
          %s559 = smul.u32 %s557, 16
          %s560 = sadd.s32 %s558, %s559
          %s561 = smul.addr %s560, 16
          %s562 = scalar_lea.hbm %s1, %s561
          %s563 = sadd.s32 2, %s525
          %s564 = scalar_lea.vmem [#allocation2], %s563
          %s565 = sadd.s32 2, %s527
          %s566 = scalar_lea.sflag [#allocation3], %s565
          %s568 = sshll.u32 %s564, 4
          %s569 = int_to_ptr.vmem [resolvable:$true] %s568
          %571 = dma.hbm_to_vmem [thread:$0]  %s562, 32, %s569, %s566, 128, 128, 1
          %s572 = sadd.s32 %s515, 3
          %p573 = scmp.lt.s32.totalorder %s572, 39
          %s574 = scalar_select %p573, %s572, 39
          %s575 = sld [smem:[#allocation5 + %s574]]
          %s576 = sshrl.u32 %s575, 3
          %s577 = sand.u32 %s575, 7
          %s578 = smul.u32 %s576, 16
          %s579 = sadd.s32 %s577, %s578
          %s580 = smul.addr %s579, 16
          %s581 = scalar_lea.hbm %s1, %s580
          %s582 = sadd.s32 3, %s525
          %s583 = scalar_lea.vmem [#allocation2], %s582
          %s584 = sadd.s32 3, %s527
          %s585 = scalar_lea.sflag [#allocation3], %s584
          %s587 = sshll.u32 %s583, 4
          %s588 = int_to_ptr.vmem [resolvable:$true] %s587
          %590 = dma.hbm_to_vmem [thread:$0]  %s581, 32, %s588, %s585, 128, 128, 1
          %s591 = sadd.s32 %s515, 4
          %p592 = scmp.lt.s32.totalorder %s591, 39
          %s593 = scalar_select %p592, %s591, 39
          %s594 = sld [smem:[#allocation5 + %s593]]
          %s595 = sshrl.u32 %s594, 3
          %s596 = sand.u32 %s594, 7
          %s597 = smul.u32 %s595, 16
          %s598 = sadd.s32 %s596, %s597
          %s599 = smul.addr %s598, 16
          %s600 = scalar_lea.hbm %s1, %s599
          %s601 = sadd.s32 4, %s525
          %s602 = scalar_lea.vmem [#allocation2], %s601
          %s603 = sadd.s32 4, %s527
          %s604 = scalar_lea.sflag [#allocation3], %s603
          %s606 = sshll.u32 %s602, 4
          %s607 = int_to_ptr.vmem [resolvable:$true] %s606
          %609 = dma.hbm_to_vmem [thread:$0]  %s600, 32, %s607, %s604, 128, 128, 1
          %s610 = sadd.s32 %s515, 5
          %p611 = scmp.lt.s32.totalorder %s610, 39
          %s612 = scalar_select %p611, %s610, 39
          %s613 = sld [smem:[#allocation5 + %s612]]
          %s614 = sshrl.u32 %s613, 3
          %s615 = sand.u32 %s613, 7
          %s616 = smul.u32 %s614, 16
          %s617 = sadd.s32 %s615, %s616
          %s618 = smul.addr %s617, 16
          %s619 = scalar_lea.hbm %s1, %s618
          %s620 = sadd.s32 5, %s525
          %s621 = scalar_lea.vmem [#allocation2], %s620
          %s622 = sadd.s32 5, %s527
          %s623 = scalar_lea.sflag [#allocation3], %s622
          %s625 = sshll.u32 %s621, 4
          %s626 = int_to_ptr.vmem [resolvable:$true] %s625
          %628 = dma.hbm_to_vmem [thread:$0]  %s619, 32, %s626, %s623, 128, 128, 1
          %s629 = sadd.s32 %s515, 6
          %p630 = scmp.lt.s32.totalorder %s629, 39
          %s631 = scalar_select %p630, %s629, 39
          %s632 = sld [smem:[#allocation5 + %s631]]
          %s633 = sshrl.u32 %s632, 3
          %s634 = sand.u32 %s632, 7
          %s635 = smul.u32 %s633, 16
          %s636 = sadd.s32 %s634, %s635
          %s637 = smul.addr %s636, 16
          %s638 = scalar_lea.hbm %s1, %s637
          %s639 = sadd.s32 6, %s525
          %s640 = scalar_lea.vmem [#allocation2], %s639
          %s641 = sadd.s32 6, %s527
          %s642 = scalar_lea.sflag [#allocation3], %s641
          %s644 = sshll.u32 %s640, 4
          %s645 = int_to_ptr.vmem [resolvable:$true] %s644
          %647 = dma.hbm_to_vmem [thread:$0]  %s638, 32, %s645, %s642, 128, 128, 1
          %s648 = sadd.s32 %s515, 7
          %p649 = scmp.lt.s32.totalorder %s648, 39
          %s650 = scalar_select %p649, %s648, 39
          %s651 = sld [smem:[#allocation5 + %s650]]
          %s652 = sshrl.u32 %s651, 3
          %s653 = sand.u32 %s651, 7
          %s654 = smul.u32 %s652, 16
          %s655 = sadd.s32 %s653, %s654
          %s656 = smul.addr %s655, 16
          %s657 = scalar_lea.hbm %s1, %s656
          %s658 = sadd.s32 7, %s525
          %s659 = scalar_lea.vmem [#allocation2], %s658
          %s660 = sadd.s32 7, %s527
          %s661 = scalar_lea.sflag [#allocation3], %s660
          %s663 = sshll.u32 %s659, 4
          %s664 = int_to_ptr.vmem [resolvable:$true] %s663
          %666 = dma.hbm_to_vmem [thread:$0]  %s657, 32, %s664, %s661, 128, 128, 1
          %s667 = sadd.s32 %s515, 8
          %p668 = scmp.lt.s32.totalorder %s667, 39
          %s669 = scalar_select %p668, %s667, 39
          %s670 = sld [smem:[#allocation5 + %s669]]
          %s671 = sshrl.u32 %s670, 3
          %s672 = sand.u32 %s670, 7
          %s673 = smul.u32 %s671, 16
          %s674 = sadd.s32 %s672, %s673
          %s675 = smul.addr %s674, 16
          %s676 = scalar_lea.hbm %s1, %s675
          %s677 = sadd.s32 16, %s525
          %s678 = scalar_lea.vmem [#allocation2], %s677
          %s679 = sadd.s32 8, %s527
          %s680 = scalar_lea.sflag [#allocation3], %s679
          %s682 = sshll.u32 %s678, 4
          %s683 = int_to_ptr.vmem [resolvable:$true] %s682
          %685 = dma.hbm_to_vmem [thread:$0]  %s676, 32, %s683, %s680, 128, 128, 1
          %s686 = sadd.s32 %s515, 9
          %p687 = scmp.lt.s32.totalorder %s686, 39
          %s688 = scalar_select %p687, %s686, 39
          %s689 = sld [smem:[#allocation5 + %s688]]
          %s690 = sshrl.u32 %s689, 3
          %s691 = sand.u32 %s689, 7
          %s692 = smul.u32 %s690, 16
          %s693 = sadd.s32 %s691, %s692
          %s694 = smul.addr %s693, 16
          %s695 = scalar_lea.hbm %s1, %s694
          %s696 = sadd.s32 17, %s525
          %s697 = scalar_lea.vmem [#allocation2], %s696
          %s698 = sadd.s32 9, %s527
          %s699 = scalar_lea.sflag [#allocation3], %s698
          %s701 = sshll.u32 %s697, 4
          %s702 = int_to_ptr.vmem [resolvable:$true] %s701
          %704 = dma.hbm_to_vmem [thread:$0]  %s695, 32, %s702, %s699, 128, 128, 1
          %s705 = sadd.s32 %s515, 10
          %p706 = scmp.lt.s32.totalorder %s705, 39
          %s707 = scalar_select %p706, %s705, 39
          %s708 = sld [smem:[#allocation5 + %s707]]
          %s709 = sshrl.u32 %s708, 3
          %s710 = sand.u32 %s708, 7
          %s711 = smul.u32 %s709, 16
          %s712 = sadd.s32 %s710, %s711
          %s713 = smul.addr %s712, 16
          %s714 = scalar_lea.hbm %s1, %s713
          %s715 = sadd.s32 18, %s525
          %s716 = scalar_lea.vmem [#allocation2], %s715
          %s717 = sadd.s32 10, %s527
          %s718 = scalar_lea.sflag [#allocation3], %s717
          %s720 = sshll.u32 %s716, 4
          %s721 = int_to_ptr.vmem [resolvable:$true] %s720
          %723 = dma.hbm_to_vmem [thread:$0]  %s714, 32, %s721, %s718, 128, 128, 1
          %s724 = sadd.s32 %s515, 11
          %p725 = scmp.lt.s32.totalorder %s724, 39
          %s726 = scalar_select %p725, %s724, 39
          %s727 = sld [smem:[#allocation5 + %s726]]
          %s728 = sshrl.u32 %s727, 3
          %s729 = sand.u32 %s727, 7
          %s730 = smul.u32 %s728, 16
          %s731 = sadd.s32 %s729, %s730
          %s732 = smul.addr %s731, 16
          %s733 = scalar_lea.hbm %s1, %s732
          %s734 = sadd.s32 19, %s525
          %s735 = scalar_lea.vmem [#allocation2], %s734
          %s736 = sadd.s32 11, %s527
          %s737 = scalar_lea.sflag [#allocation3], %s736
          %s739 = sshll.u32 %s735, 4
          %s740 = int_to_ptr.vmem [resolvable:$true] %s739
          %742 = dma.hbm_to_vmem [thread:$0]  %s733, 32, %s740, %s737, 128, 128, 1
          %s743 = sadd.s32 %s515, 12
          %p744 = scmp.lt.s32.totalorder %s743, 39
          %s745 = scalar_select %p744, %s743, 39
          %s746 = sld [smem:[#allocation5 + %s745]]
          %s747 = sshrl.u32 %s746, 3
          %s748 = sand.u32 %s746, 7
          %s749 = smul.u32 %s747, 16
          %s750 = sadd.s32 %s748, %s749
          %s751 = smul.addr %s750, 16
          %s752 = scalar_lea.hbm %s1, %s751
          %s753 = sadd.s32 20, %s525
          %s754 = scalar_lea.vmem [#allocation2], %s753
          %s755 = sadd.s32 12, %s527
          %s756 = scalar_lea.sflag [#allocation3], %s755
          %s758 = sshll.u32 %s754, 4
          %s759 = int_to_ptr.vmem [resolvable:$true] %s758
          %761 = dma.hbm_to_vmem [thread:$0]  %s752, 32, %s759, %s756, 128, 128, 1
          %s762 = sadd.s32 %s515, 13
          %p763 = scmp.lt.s32.totalorder %s762, 39
          %s764 = scalar_select %p763, %s762, 39
          %s765 = sld [smem:[#allocation5 + %s764]]
          %s766 = sshrl.u32 %s765, 3
          %s767 = sand.u32 %s765, 7
          %s768 = smul.u32 %s766, 16
          %s769 = sadd.s32 %s767, %s768
          %s770 = smul.addr %s769, 16
          %s771 = scalar_lea.hbm %s1, %s770
          %s772 = sadd.s32 21, %s525
          %s773 = scalar_lea.vmem [#allocation2], %s772
          %s774 = sadd.s32 13, %s527
          %s775 = scalar_lea.sflag [#allocation3], %s774
          %s777 = sshll.u32 %s773, 4
          %s778 = int_to_ptr.vmem [resolvable:$true] %s777
          %780 = dma.hbm_to_vmem [thread:$0]  %s771, 32, %s778, %s775, 128, 128, 1
          %s781 = sadd.s32 %s515, 14
          %p782 = scmp.lt.s32.totalorder %s781, 39
          %s783 = scalar_select %p782, %s781, 39
          %s784 = sld [smem:[#allocation5 + %s783]]
          %s785 = sshrl.u32 %s784, 3
          %s786 = sand.u32 %s784, 7
          %s787 = smul.u32 %s785, 16
          %s788 = sadd.s32 %s786, %s787
          %s789 = smul.addr %s788, 16
          %s790 = scalar_lea.hbm %s1, %s789
          %s791 = sadd.s32 22, %s525
          %s792 = scalar_lea.vmem [#allocation2], %s791
          %s793 = sadd.s32 14, %s527
          %s794 = scalar_lea.sflag [#allocation3], %s793
          %s796 = sshll.u32 %s792, 4
          %s797 = int_to_ptr.vmem [resolvable:$true] %s796
          %799 = dma.hbm_to_vmem [thread:$0]  %s790, 32, %s797, %s794, 128, 128, 1
          %s800 = sadd.s32 %s515, 15
          %p801 = scmp.lt.s32.totalorder %s800, 39
          %s802 = scalar_select %p801, %s800, 39
          %s803 = sld [smem:[#allocation5 + %s802]]
          %s804 = sshrl.u32 %s803, 3
          %s805 = sand.u32 %s803, 7
          %s806 = smul.u32 %s804, 16
          %s807 = sadd.s32 %s805, %s806
          %s808 = smul.addr %s807, 16
          %s809 = scalar_lea.hbm %s1, %s808
          %s810 = sadd.s32 23, %s525
          %s811 = scalar_lea.vmem [#allocation2], %s810
          %s812 = sadd.s32 15, %s527
          %s813 = scalar_lea.sflag [#allocation3], %s812
          %s815 = sshll.u32 %s811, 4
          %s816 = int_to_ptr.vmem [resolvable:$true] %s815
          %818 = dma.hbm_to_vmem [thread:$0]  %s809, 32, %s816, %s813, 128, 128, 1
          %s819 = sadd.s32 %s515, 16
          %p820 = scmp.lt.s32.totalorder %s819, 39
          %s821 = scalar_select %p820, %s819, 39
          %s822 = sld [smem:[#allocation5 + %s821]]
          %s823 = sshrl.u32 %s822, 3
          %s824 = sand.u32 %s822, 7
          %s825 = smul.u32 %s823, 16
          %s826 = sadd.s32 %s824, %s825
          %s827 = smul.addr %s826, 16
          %s828 = scalar_lea.hbm %s1, %s827
          %s829 = sadd.s32 32, %s525
          %s830 = scalar_lea.vmem [#allocation2], %s829
          %s831 = sadd.s32 16, %s527
          %s832 = scalar_lea.sflag [#allocation3], %s831
          %s834 = sshll.u32 %s830, 4
          %s835 = int_to_ptr.vmem [resolvable:$true] %s834
          %837 = dma.hbm_to_vmem [thread:$0]  %s828, 32, %s835, %s832, 128, 128, 1
          %s838 = sadd.s32 %s515, 17
          %p839 = scmp.lt.s32.totalorder %s838, 39
          %s840 = scalar_select %p839, %s838, 39
          %s841 = sld [smem:[#allocation5 + %s840]]
          %s842 = sshrl.u32 %s841, 3
          %s843 = sand.u32 %s841, 7
          %s844 = smul.u32 %s842, 16
          %s845 = sadd.s32 %s843, %s844
          %s846 = smul.addr %s845, 16
          %s847 = scalar_lea.hbm %s1, %s846
          %s848 = sadd.s32 33, %s525
          %s849 = scalar_lea.vmem [#allocation2], %s848
          %s850 = sadd.s32 17, %s527
          %s851 = scalar_lea.sflag [#allocation3], %s850
          %s853 = sshll.u32 %s849, 4
          %s854 = int_to_ptr.vmem [resolvable:$true] %s853
          %856 = dma.hbm_to_vmem [thread:$0]  %s847, 32, %s854, %s851, 128, 128, 1
          %s857 = sadd.s32 %s515, 18
          %p858 = scmp.lt.s32.totalorder %s857, 39
          %s859 = scalar_select %p858, %s857, 39
          %s860 = sld [smem:[#allocation5 + %s859]]
          %s861 = sshrl.u32 %s860, 3
          %s862 = sand.u32 %s860, 7
          %s863 = smul.u32 %s861, 16
          %s864 = sadd.s32 %s862, %s863
          %s865 = smul.addr %s864, 16
          %s866 = scalar_lea.hbm %s1, %s865
          %s867 = sadd.s32 34, %s525
          %s868 = scalar_lea.vmem [#allocation2], %s867
          %s869 = sadd.s32 18, %s527
          %s870 = scalar_lea.sflag [#allocation3], %s869
          %s872 = sshll.u32 %s868, 4
          %s873 = int_to_ptr.vmem [resolvable:$true] %s872
          %875 = dma.hbm_to_vmem [thread:$0]  %s866, 32, %s873, %s870, 128, 128, 1
          %s876 = sadd.s32 %s515, 19
          %p877 = scmp.lt.s32.totalorder %s876, 39
          %s878 = scalar_select %p877, %s876, 39
          %s879 = sld [smem:[#allocation5 + %s878]]
          %s880 = sshrl.u32 %s879, 3
          %s881 = sand.u32 %s879, 7
          %s882 = smul.u32 %s880, 16
          %s883 = sadd.s32 %s881, %s882
          %s884 = smul.addr %s883, 16
          %s885 = scalar_lea.hbm %s1, %s884
          %s886 = sadd.s32 35, %s525
          %s887 = scalar_lea.vmem [#allocation2], %s886
          %s888 = sadd.s32 19, %s527
          %s889 = scalar_lea.sflag [#allocation3], %s888
          %s891 = sshll.u32 %s887, 4
          %s892 = int_to_ptr.vmem [resolvable:$true] %s891
          %894 = dma.hbm_to_vmem [thread:$0]  %s885, 32, %s892, %s889, 128, 128, 1
          %s895 = sadd.s32 %s515, 20
          %p896 = scmp.lt.s32.totalorder %s895, 39
          %s897 = scalar_select %p896, %s895, 39
          %s898 = sld [smem:[#allocation5 + %s897]]
          %s899 = sshrl.u32 %s898, 3
          %s900 = sand.u32 %s898, 7
          %s901 = smul.u32 %s899, 16
          %s902 = sadd.s32 %s900, %s901
          %s903 = smul.addr %s902, 16
          %s904 = scalar_lea.hbm %s1, %s903
          %s905 = sadd.s32 36, %s525
          %s906 = scalar_lea.vmem [#allocation2], %s905
          %s907 = sadd.s32 20, %s527
          %s908 = scalar_lea.sflag [#allocation3], %s907
          %s910 = sshll.u32 %s906, 4
          %s911 = int_to_ptr.vmem [resolvable:$true] %s910
          %913 = dma.hbm_to_vmem [thread:$0]  %s904, 32, %s911, %s908, 128, 128, 1
          %s914 = sadd.s32 %s515, 21
          %p915 = scmp.lt.s32.totalorder %s914, 39
          %s916 = scalar_select %p915, %s914, 39
          %s917 = sld [smem:[#allocation5 + %s916]]
          %s918 = sshrl.u32 %s917, 3
          %s919 = sand.u32 %s917, 7
          %s920 = smul.u32 %s918, 16
          %s921 = sadd.s32 %s919, %s920
          %s922 = smul.addr %s921, 16
          %s923 = scalar_lea.hbm %s1, %s922
          %s924 = sadd.s32 37, %s525
          %s925 = scalar_lea.vmem [#allocation2], %s924
          %s926 = sadd.s32 21, %s527
          %s927 = scalar_lea.sflag [#allocation3], %s926
          %s929 = sshll.u32 %s925, 4
          %s930 = int_to_ptr.vmem [resolvable:$true] %s929
          %932 = dma.hbm_to_vmem [thread:$0]  %s923, 32, %s930, %s927, 128, 128, 1
          %s933 = sadd.s32 %s515, 22
          %p934 = scmp.lt.s32.totalorder %s933, 39
          %s935 = scalar_select %p934, %s933, 39
          %s936 = sld [smem:[#allocation5 + %s935]]
          %s937 = sshrl.u32 %s936, 3
          %s938 = sand.u32 %s936, 7
          %s939 = smul.u32 %s937, 16
          %s940 = sadd.s32 %s938, %s939
          %s941 = smul.addr %s940, 16
          %s942 = scalar_lea.hbm %s1, %s941
          %s943 = sadd.s32 38, %s525
          %s944 = scalar_lea.vmem [#allocation2], %s943
          %s945 = sadd.s32 22, %s527
          %s946 = scalar_lea.sflag [#allocation3], %s945
          %s948 = sshll.u32 %s944, 4
          %s949 = int_to_ptr.vmem [resolvable:$true] %s948
          %951 = dma.hbm_to_vmem [thread:$0]  %s942, 32, %s949, %s946, 128, 128, 1
          %s952 = sadd.s32 %s515, 23
          %p953 = scmp.lt.s32.totalorder %s952, 39
          %s954 = scalar_select %p953, %s952, 39
          %s955 = sld [smem:[#allocation5 + %s954]]
          %s956 = sshrl.u32 %s955, 3
          %s957 = sand.u32 %s955, 7
          %s958 = smul.u32 %s956, 16
          %s959 = sadd.s32 %s957, %s958
          %s960 = smul.addr %s959, 16
          %s961 = scalar_lea.hbm %s1, %s960
          %s962 = sadd.s32 39, %s525
          %s963 = scalar_lea.vmem [#allocation2], %s962
          %s964 = sadd.s32 23, %s527
          %s965 = scalar_lea.sflag [#allocation3], %s964
          %s967 = sshll.u32 %s963, 4
          %s968 = int_to_ptr.vmem [resolvable:$true] %s967
          %970 = dma.hbm_to_vmem [thread:$0]  %s961, 32, %s968, %s965, 128, 128, 1
          %s971 = sadd.s32 %s515, 24
          %p972 = scmp.lt.s32.totalorder %s971, 39
          %s973 = scalar_select %p972, %s971, 39
          %s974 = sld [smem:[#allocation5 + %s973]]
          %s975 = sshrl.u32 %s974, 3
          %s976 = sand.u32 %s974, 7
          %s977 = smul.u32 %s975, 16
          %s978 = sadd.s32 %s976, %s977
          %s979 = smul.addr %s978, 16
          %s980 = scalar_lea.hbm %s1, %s979
          %s981 = sadd.s32 48, %s525
          %s982 = scalar_lea.vmem [#allocation2], %s981
          %s983 = sadd.s32 24, %s527
          %s984 = scalar_lea.sflag [#allocation3], %s983
          %s986 = sshll.u32 %s982, 4
          %s987 = int_to_ptr.vmem [resolvable:$true] %s986
          %989 = dma.hbm_to_vmem [thread:$0]  %s980, 32, %s987, %s984, 128, 128, 1
          %s990 = sadd.s32 %s515, 25
          %p991 = scmp.lt.s32.totalorder %s990, 39
          %s992 = scalar_select %p991, %s990, 39
          %s993 = sld [smem:[#allocation5 + %s992]]
          %s994 = sshrl.u32 %s993, 3
          %s995 = sand.u32 %s993, 7
          %s996 = smul.u32 %s994, 16
          %s997 = sadd.s32 %s995, %s996
          %s998 = smul.addr %s997, 16
          %s999 = scalar_lea.hbm %s1, %s998
          %s1000 = sadd.s32 49, %s525
          %s1001 = scalar_lea.vmem [#allocation2], %s1000
          %s1002 = sadd.s32 25, %s527
          %s1003 = scalar_lea.sflag [#allocation3], %s1002
          %s1005 = sshll.u32 %s1001, 4
          %s1006 = int_to_ptr.vmem [resolvable:$true] %s1005
          %1008 = dma.hbm_to_vmem [thread:$0]  %s999, 32, %s1006, %s1003, 128, 128, 1
          %s1009 = sadd.s32 %s515, 26
          %p1010 = scmp.lt.s32.totalorder %s1009, 39
          %s1011 = scalar_select %p1010, %s1009, 39
          %s1012 = sld [smem:[#allocation5 + %s1011]]
          %s1013 = sshrl.u32 %s1012, 3
          %s1014 = sand.u32 %s1012, 7
          %s1015 = smul.u32 %s1013, 16
          %s1016 = sadd.s32 %s1014, %s1015
          %s1017 = smul.addr %s1016, 16
          %s1018 = scalar_lea.hbm %s1, %s1017
          %s1019 = sadd.s32 50, %s525
          %s1020 = scalar_lea.vmem [#allocation2], %s1019
          %s1021 = sadd.s32 26, %s527
          %s1022 = scalar_lea.sflag [#allocation3], %s1021
          %s1024 = sshll.u32 %s1020, 4
          %s1025 = int_to_ptr.vmem [resolvable:$true] %s1024
          %1027 = dma.hbm_to_vmem [thread:$0]  %s1018, 32, %s1025, %s1022, 128, 128, 1
          %s1028 = sadd.s32 %s515, 27
          %p1029 = scmp.lt.s32.totalorder %s1028, 39
          %s1030 = scalar_select %p1029, %s1028, 39
          %s1031 = sld [smem:[#allocation5 + %s1030]]
          %s1032 = sshrl.u32 %s1031, 3
          %s1033 = sand.u32 %s1031, 7
          %s1034 = smul.u32 %s1032, 16
          %s1035 = sadd.s32 %s1033, %s1034
          %s1036 = smul.addr %s1035, 16
          %s1037 = scalar_lea.hbm %s1, %s1036
          %s1038 = sadd.s32 51, %s525
          %s1039 = scalar_lea.vmem [#allocation2], %s1038
          %s1040 = sadd.s32 27, %s527
          %s1041 = scalar_lea.sflag [#allocation3], %s1040
          %s1043 = sshll.u32 %s1039, 4
          %s1044 = int_to_ptr.vmem [resolvable:$true] %s1043
          %1046 = dma.hbm_to_vmem [thread:$0]  %s1037, 32, %s1044, %s1041, 128, 128, 1
          %s1047 = sadd.s32 %s515, 28
          %p1048 = scmp.lt.s32.totalorder %s1047, 39
          %s1049 = scalar_select %p1048, %s1047, 39
          %s1050 = sld [smem:[#allocation5 + %s1049]]
          %s1051 = sshrl.u32 %s1050, 3
          %s1052 = sand.u32 %s1050, 7
          %s1053 = smul.u32 %s1051, 16
          %s1054 = sadd.s32 %s1052, %s1053
          %s1055 = smul.addr %s1054, 16
          %s1056 = scalar_lea.hbm %s1, %s1055
          %s1057 = sadd.s32 52, %s525
          %s1058 = scalar_lea.vmem [#allocation2], %s1057
          %s1059 = sadd.s32 28, %s527
          %s1060 = scalar_lea.sflag [#allocation3], %s1059
          %s1062 = sshll.u32 %s1058, 4
          %s1063 = int_to_ptr.vmem [resolvable:$true] %s1062
          %1065 = dma.hbm_to_vmem [thread:$0]  %s1056, 32, %s1063, %s1060, 128, 128, 1
          %s1066 = sadd.s32 %s515, 29
          %p1067 = scmp.lt.s32.totalorder %s1066, 39
          %s1068 = scalar_select %p1067, %s1066, 39
          %s1069 = sld [smem:[#allocation5 + %s1068]]
          %s1070 = sshrl.u32 %s1069, 3
          %s1071 = sand.u32 %s1069, 7
          %s1072 = smul.u32 %s1070, 16
          %s1073 = sadd.s32 %s1071, %s1072
          %s1074 = smul.addr %s1073, 16
          %s1075 = scalar_lea.hbm %s1, %s1074
          %s1076 = sadd.s32 53, %s525
          %s1077 = scalar_lea.vmem [#allocation2], %s1076
          %s1078 = sadd.s32 29, %s527
          %s1079 = scalar_lea.sflag [#allocation3], %s1078
          %s1081 = sshll.u32 %s1077, 4
          %s1082 = int_to_ptr.vmem [resolvable:$true] %s1081
          %1084 = dma.hbm_to_vmem [thread:$0]  %s1075, 32, %s1082, %s1079, 128, 128, 1
          %s1085 = sadd.s32 %s515, 30
          %p1086 = scmp.lt.s32.totalorder %s1085, 39
          %s1087 = scalar_select %p1086, %s1085, 39
          %s1088 = sld [smem:[#allocation5 + %s1087]]
          %s1089 = sshrl.u32 %s1088, 3
          %s1090 = sand.u32 %s1088, 7
          %s1091 = smul.u32 %s1089, 16
          %s1092 = sadd.s32 %s1090, %s1091
          %s1093 = smul.addr %s1092, 16
          %s1094 = scalar_lea.hbm %s1, %s1093
          %s1095 = sadd.s32 54, %s525
          %s1096 = scalar_lea.vmem [#allocation2], %s1095
          %s1097 = sadd.s32 30, %s527
          %s1098 = scalar_lea.sflag [#allocation3], %s1097
          %s1100 = sshll.u32 %s1096, 4
          %s1101 = int_to_ptr.vmem [resolvable:$true] %s1100
          %1103 = dma.hbm_to_vmem [thread:$0]  %s1094, 32, %s1101, %s1098, 128, 128, 1
          %s1104 = sadd.s32 %s515, 31
          %p1105 = scmp.lt.s32.totalorder %s1104, 39
          %s1106 = scalar_select %p1105, %s1104, 39
          %s1107 = sld [smem:[#allocation5 + %s1106]]
          %s1108 = sshrl.u32 %s1107, 3
          %s1109 = sand.u32 %s1107, 7
          %s1110 = smul.u32 %s1108, 16
          %s1111 = sadd.s32 %s1109, %s1110
          %s1112 = smul.addr %s1111, 16
          %s1113 = scalar_lea.hbm %s1, %s1112
          %s1114 = sadd.s32 55, %s525
          %s1115 = scalar_lea.vmem [#allocation2], %s1114
          %s1116 = sadd.s32 31, %s527
          %s1117 = scalar_lea.sflag [#allocation3], %s1116
          %s1119 = sshll.u32 %s1115, 4
          %s1120 = int_to_ptr.vmem [resolvable:$true] %s1119
          %1122 = dma.hbm_to_vmem [thread:$0]  %s1113, 32, %s1120, %s1117, 128, 128, 1
        $region20: #{tpu_custom_call.1} parent=11 // pred_fallthru
          _
        %s1123 = smul.u32 %s15, 32
        %p1124 = scmp.lt.s32.totalorder %s1123, 39
        %s1125 = scalar_select %p1124, %s1123, 39
        %s1126 = sld [smem:[#allocation5 + %s1125]]
        %s1127 = sadd.s32 %s1123, 1
        %p1128 = scmp.lt.s32.totalorder %s1127, 39
        %s1129 = scalar_select %p1128, %s1127, 39
        %s1130 = sld [smem:[#allocation5 + %s1129]]
        %s1131 = sadd.s32 %s1123, 2
        %p1132 = scmp.lt.s32.totalorder %s1131, 39
        %s1133 = scalar_select %p1132, %s1131, 39
        %s1134 = sld [smem:[#allocation5 + %s1133]]
        %s1135 = sadd.s32 %s1123, 3
        %p1136 = scmp.lt.s32.totalorder %s1135, 39
        %s1137 = scalar_select %p1136, %s1135, 39
        %s1138 = sld [smem:[#allocation5 + %s1137]]
        %s1139 = sadd.s32 %s1123, 4
        %p1140 = scmp.lt.s32.totalorder %s1139, 39
        %s1141 = scalar_select %p1140, %s1139, 39
        %s1142 = sld [smem:[#allocation5 + %s1141]]
        %s1143 = sadd.s32 %s1123, 5
        %p1144 = scmp.lt.s32.totalorder %s1143, 39
        %s1145 = scalar_select %p1144, %s1143, 39
        %s1146 = sld [smem:[#allocation5 + %s1145]]
        %s1147 = sadd.s32 %s1123, 6
        %p1148 = scmp.lt.s32.totalorder %s1147, 39
        %s1149 = scalar_select %p1148, %s1147, 39
        %s1150 = sld [smem:[#allocation5 + %s1149]]
        %s1151 = sadd.s32 %s1123, 7
        %p1152 = scmp.lt.s32.totalorder %s1151, 39
        %s1153 = scalar_select %p1152, %s1151, 39
        %s1154 = sld [smem:[#allocation5 + %s1153]]
        %s1155 = sadd.s32 %s1123, 8
        %p1156 = scmp.lt.s32.totalorder %s1155, 39
        %s1157 = scalar_select %p1156, %s1155, 39
        %s1158 = sld [smem:[#allocation5 + %s1157]]
        %s1159 = sadd.s32 %s1123, 9
        %p1160 = scmp.lt.s32.totalorder %s1159, 39
        %s1161 = scalar_select %p1160, %s1159, 39
        %s1162 = sld [smem:[#allocation5 + %s1161]]
        %s1163 = sadd.s32 %s1123, 10
        %p1164 = scmp.lt.s32.totalorder %s1163, 39
        %s1165 = scalar_select %p1164, %s1163, 39
        %s1166 = sld [smem:[#allocation5 + %s1165]]
        %s1167 = sadd.s32 %s1123, 11
        %p1168 = scmp.lt.s32.totalorder %s1167, 39
        %s1169 = scalar_select %p1168, %s1167, 39
        %s1170 = sld [smem:[#allocation5 + %s1169]]
        %s1171 = sadd.s32 %s1123, 12
        %p1172 = scmp.lt.s32.totalorder %s1171, 39
        %s1173 = scalar_select %p1172, %s1171, 39
        %s1174 = sld [smem:[#allocation5 + %s1173]]
        %s1175 = sadd.s32 %s1123, 13
        %p1176 = scmp.lt.s32.totalorder %s1175, 39
        %s1177 = scalar_select %p1176, %s1175, 39
        %s1178 = sld [smem:[#allocation5 + %s1177]]
        %s1179 = sadd.s32 %s1123, 14
        %p1180 = scmp.lt.s32.totalorder %s1179, 39
        %s1181 = scalar_select %p1180, %s1179, 39
        %s1182 = sld [smem:[#allocation5 + %s1181]]
        %s1183 = sadd.s32 %s1123, 15
        %p1184 = scmp.lt.s32.totalorder %s1183, 39
        %s1185 = scalar_select %p1184, %s1183, 39
        %s1186 = sld [smem:[#allocation5 + %s1185]]
        %s1187 = sadd.s32 %s1123, 16
        %p1188 = scmp.lt.s32.totalorder %s1187, 39
        %s1189 = scalar_select %p1188, %s1187, 39
        %s1190 = sld [smem:[#allocation5 + %s1189]]
        %s1191 = sadd.s32 %s1123, 17
        %p1192 = scmp.lt.s32.totalorder %s1191, 39
        %s1193 = scalar_select %p1192, %s1191, 39
        %s1194 = sld [smem:[#allocation5 + %s1193]]
        %s1195 = sadd.s32 %s1123, 18
        %p1196 = scmp.lt.s32.totalorder %s1195, 39
        %s1197 = scalar_select %p1196, %s1195, 39
        %s1198 = sld [smem:[#allocation5 + %s1197]]
        %s1199 = sadd.s32 %s1123, 19
        %p1200 = scmp.lt.s32.totalorder %s1199, 39
        %s1201 = scalar_select %p1200, %s1199, 39
        %s1202 = sld [smem:[#allocation5 + %s1201]]
        %s1203 = sadd.s32 %s1123, 20
        %p1204 = scmp.lt.s32.totalorder %s1203, 39
        %s1205 = scalar_select %p1204, %s1203, 39
        %s1206 = sld [smem:[#allocation5 + %s1205]]
        %s1207 = sadd.s32 %s1123, 21
        %p1208 = scmp.lt.s32.totalorder %s1207, 39
        %s1209 = scalar_select %p1208, %s1207, 39
        %s1210 = sld [smem:[#allocation5 + %s1209]]
        %s1211 = sadd.s32 %s1123, 22
        %p1212 = scmp.lt.s32.totalorder %s1211, 39
        %s1213 = scalar_select %p1212, %s1211, 39
        %s1214 = sld [smem:[#allocation5 + %s1213]]
        %s1215 = sadd.s32 %s1123, 23
        %p1216 = scmp.lt.s32.totalorder %s1215, 39
        %s1217 = scalar_select %p1216, %s1215, 39
        %s1218 = sld [smem:[#allocation5 + %s1217]]
        %s1219 = sadd.s32 %s1123, 24
        %p1220 = scmp.lt.s32.totalorder %s1219, 39
        %s1221 = scalar_select %p1220, %s1219, 39
        %s1222 = sld [smem:[#allocation5 + %s1221]]
        %s1223 = sadd.s32 %s1123, 25
        %p1224 = scmp.lt.s32.totalorder %s1223, 39
        %s1225 = scalar_select %p1224, %s1223, 39
        %s1226 = sld [smem:[#allocation5 + %s1225]]
        %s1227 = sadd.s32 %s1123, 26
        %p1228 = scmp.lt.s32.totalorder %s1227, 39
        %s1229 = scalar_select %p1228, %s1227, 39
        %s1230 = sld [smem:[#allocation5 + %s1229]]
        %s1231 = sadd.s32 %s1123, 27
        %p1232 = scmp.lt.s32.totalorder %s1231, 39
        %s1233 = scalar_select %p1232, %s1231, 39
        %s1234 = sld [smem:[#allocation5 + %s1233]]
        %s1235 = sadd.s32 %s1123, 28
        %p1236 = scmp.lt.s32.totalorder %s1235, 39
        %s1237 = scalar_select %p1236, %s1235, 39
        %s1238 = sld [smem:[#allocation5 + %s1237]]
        %s1239 = sadd.s32 %s1123, 29
        %p1240 = scmp.lt.s32.totalorder %s1239, 39
        %s1241 = scalar_select %p1240, %s1239, 39
        %s1242 = sld [smem:[#allocation5 + %s1241]]
        %s1243 = sadd.s32 %s1123, 30
        %p1244 = scmp.lt.s32.totalorder %s1243, 39
        %s1245 = scalar_select %p1244, %s1243, 39
        %s1246 = sld [smem:[#allocation5 + %s1245]]
        %s1247 = sadd.s32 %s1123, 31
        %p1248 = scmp.lt.s32.totalorder %s1247, 39
        %s1249 = scalar_select %p1248, %s1247, 39
        %s1250 = sld [smem:[#allocation5 + %s1249]]
        %s1251 = smul.u32 %s58, 32
        %s1252 = scalar_lea.sflag [#allocation3], %s1251
        %s1253 = smul.u32 1, 2
        %s1254 = sshll.u32 %s1253, 4
        %1255 = dma.done %s1252, %s1254
        %s1256 = sadd.s32 1, %s1251
        %s1257 = scalar_lea.sflag [#allocation3], %s1256
        %s1258 = sshll.u32 %s1253, 4
        %1259 = dma.done %s1257, %s1258
        %s1260 = sadd.s32 2, %s1251
        %s1261 = scalar_lea.sflag [#allocation3], %s1260
        %s1262 = sshll.u32 %s1253, 4
        %1263 = dma.done %s1261, %s1262
        %s1264 = sadd.s32 3, %s1251
        %s1265 = scalar_lea.sflag [#allocation3], %s1264
        %s1266 = sshll.u32 %s1253, 4
        %1267 = dma.done %s1265, %s1266
        %s1268 = sadd.s32 4, %s1251
        %s1269 = scalar_lea.sflag [#allocation3], %s1268
        %s1270 = sshll.u32 %s1253, 4
        %1271 = dma.done %s1269, %s1270
        %s1272 = sadd.s32 5, %s1251
        %s1273 = scalar_lea.sflag [#allocation3], %s1272
        %s1274 = sshll.u32 %s1253, 4
        %1275 = dma.done %s1273, %s1274
        %s1276 = sadd.s32 6, %s1251
        %s1277 = scalar_lea.sflag [#allocation3], %s1276
        %s1278 = sshll.u32 %s1253, 4
        %1279 = dma.done %s1277, %s1278
        %s1280 = sadd.s32 7, %s1251
        %s1281 = scalar_lea.sflag [#allocation3], %s1280
        %s1282 = sshll.u32 %s1253, 4
        %1283 = dma.done %s1281, %s1282
        %s1284 = sadd.s32 8, %s1251
        %s1285 = scalar_lea.sflag [#allocation3], %s1284
        %s1286 = sshll.u32 %s1253, 4
        %1287 = dma.done %s1285, %s1286
        %s1288 = sadd.s32 9, %s1251
        %s1289 = scalar_lea.sflag [#allocation3], %s1288
        %s1290 = sshll.u32 %s1253, 4
        %1291 = dma.done %s1289, %s1290
        %s1292 = sadd.s32 10, %s1251
        %s1293 = scalar_lea.sflag [#allocation3], %s1292
        %s1294 = sshll.u32 %s1253, 4
        %1295 = dma.done %s1293, %s1294
        %s1296 = sadd.s32 11, %s1251
        %s1297 = scalar_lea.sflag [#allocation3], %s1296
        %s1298 = sshll.u32 %s1253, 4
        %1299 = dma.done %s1297, %s1298
        %s1300 = sadd.s32 12, %s1251
        %s1301 = scalar_lea.sflag [#allocation3], %s1300
        %s1302 = sshll.u32 %s1253, 4
        %1303 = dma.done %s1301, %s1302
        %s1304 = sadd.s32 13, %s1251
        %s1305 = scalar_lea.sflag [#allocation3], %s1304
        %s1306 = sshll.u32 %s1253, 4
        %1307 = dma.done %s1305, %s1306
        %s1308 = sadd.s32 14, %s1251
        %s1309 = scalar_lea.sflag [#allocation3], %s1308
        %s1310 = sshll.u32 %s1253, 4
        %1311 = dma.done %s1309, %s1310
        %s1312 = sadd.s32 15, %s1251
        %s1313 = scalar_lea.sflag [#allocation3], %s1312
        %s1314 = sshll.u32 %s1253, 4
        %1315 = dma.done %s1313, %s1314
        %s1316 = sadd.s32 16, %s1251
        %s1317 = scalar_lea.sflag [#allocation3], %s1316
        %s1318 = sshll.u32 %s1253, 4
        %1319 = dma.done %s1317, %s1318
        %s1320 = sadd.s32 17, %s1251
        %s1321 = scalar_lea.sflag [#allocation3], %s1320
        %s1322 = sshll.u32 %s1253, 4
        %1323 = dma.done %s1321, %s1322
        %s1324 = sadd.s32 18, %s1251
        %s1325 = scalar_lea.sflag [#allocation3], %s1324
        %s1326 = sshll.u32 %s1253, 4
        %1327 = dma.done %s1325, %s1326
        %s1328 = sadd.s32 19, %s1251
        %s1329 = scalar_lea.sflag [#allocation3], %s1328
        %s1330 = sshll.u32 %s1253, 4
        %1331 = dma.done %s1329, %s1330
        %s1332 = sadd.s32 20, %s1251
        %s1333 = scalar_lea.sflag [#allocation3], %s1332
        %s1334 = sshll.u32 %s1253, 4
        %1335 = dma.done %s1333, %s1334
        %s1336 = sadd.s32 21, %s1251
        %s1337 = scalar_lea.sflag [#allocation3], %s1336
        %s1338 = sshll.u32 %s1253, 4
        %1339 = dma.done %s1337, %s1338
        %s1340 = sadd.s32 22, %s1251
        %s1341 = scalar_lea.sflag [#allocation3], %s1340
        %s1342 = sshll.u32 %s1253, 4
        %1343 = dma.done %s1341, %s1342
        %s1344 = sadd.s32 23, %s1251
        %s1345 = scalar_lea.sflag [#allocation3], %s1344
        %s1346 = sshll.u32 %s1253, 4
        %1347 = dma.done %s1345, %s1346
        %s1348 = sadd.s32 24, %s1251
        %s1349 = scalar_lea.sflag [#allocation3], %s1348
        %s1350 = sshll.u32 %s1253, 4
        %1351 = dma.done %s1349, %s1350
        %s1352 = sadd.s32 25, %s1251
        %s1353 = scalar_lea.sflag [#allocation3], %s1352
        %s1354 = sshll.u32 %s1253, 4
        %1355 = dma.done %s1353, %s1354
        %s1356 = sadd.s32 26, %s1251
        %s1357 = scalar_lea.sflag [#allocation3], %s1356
        %s1358 = sshll.u32 %s1253, 4
        %1359 = dma.done %s1357, %s1358
        %s1360 = sadd.s32 27, %s1251
        %s1361 = scalar_lea.sflag [#allocation3], %s1360
        %s1362 = sshll.u32 %s1253, 4
        %1363 = dma.done %s1361, %s1362
        %s1364 = sadd.s32 28, %s1251
        %s1365 = scalar_lea.sflag [#allocation3], %s1364
        %s1366 = sshll.u32 %s1253, 4
        %1367 = dma.done %s1365, %s1366
        %s1368 = sadd.s32 29, %s1251
        %s1369 = scalar_lea.sflag [#allocation3], %s1368
        %s1370 = sshll.u32 %s1253, 4
        %1371 = dma.done %s1369, %s1370
        %s1372 = sadd.s32 30, %s1251
        %s1373 = scalar_lea.sflag [#allocation3], %s1372
        %s1374 = sshll.u32 %s1253, 4
        %1375 = dma.done %s1373, %s1374
        %s1376 = sadd.s32 31, %s1251
        %s1377 = scalar_lea.sflag [#allocation3], %s1376
        %s1378 = sshll.u32 %s1253, 4
        %1379 = dma.done %s1377, %s1378
        %s1380 = smul.u32 %s58, 8
        %s1381 = smul.addr %s1380, 8
        %s1382 = scalar_lea.vmem [#allocation2], %s1381
        %v1383 = vld [vmem:[%s1382] sm:$0xff]
        %v1384 = vld [vmem:[%s1382 + $0x8] sm:$0xff]
        %v1385 = vld [vmem:[%s1382 + $0x10] sm:$0xff]
        %v1386 = vld [vmem:[%s1382 + $0x18] sm:$0xff]
        %v1387 = vld [vmem:[%s1382 + $0x20] sm:$0xff]
        %v1388 = vld [vmem:[%s1382 + $0x28] sm:$0xff]
        %v1389 = vld [vmem:[%s1382 + $0x30] sm:$0xff]
        %v1390 = vld [vmem:[%s1382 + $0x38] sm:$0xff]
        %1391 = vst [vmem:[%s51] sm:$0xff] %v1383
        %1392 = vst [vmem:[%s51 + $0x8] sm:$0xff] %v1384
        %1393 = vst [vmem:[%s51 + $0x10] sm:$0xff] %v1385
        %1394 = vst [vmem:[%s51 + $0x18] sm:$0xff] %v1386
        %1395 = vst [vmem:[%s51 + $0x20] sm:$0xff] %v1387
        %1396 = vst [vmem:[%s51 + $0x28] sm:$0xff] %v1388
        %1397 = vst [vmem:[%s51 + $0x30] sm:$0xff] %v1389
        %1398 = vst [vmem:[%s51 + $0x38] sm:$0xff] %v1390
        %s1399 = sand.u32 %s24, 1
        %s1400 = scalar_lea.sflag [#allocation7], %s1399
        %s1401 = sand.u32 %s24, 1
        %s1402 = smul.addr %s1401, 64
        %s1403 = scalar_lea.vmem [#allocation6], %s1402
        // Predicated region
        $region21: #{tpu_custom_call.1} parent=11 // pred_check
          %p1404 = pneg %p30
        $region22: #{tpu_custom_call.1} parent=11 // pred_check_branch
          %1406 = sbr.rel (%p1404) target = $region24
        $region23: #{tpu_custom_call.1} parent=11 // pred_region
          %s1407 = smul.u32 4, %s15
          %s1408 = ssub.s32 5, %s1407
          %p1409 = scmp.lt.s32.totalorder %s1408, 4
          %s1410 = scalar_select %p1409, %s1408, 4
          %s1411 = smul.u32 128, %s1410
          %s1412 = smul.u32 %s1411, 2
          %s1414 = ssub.s32 1024, %s1412
          %1415 = vsyncadd %s1400, %s1414
          %p1416 = scmp.ne.s32.totalorder 0, %s1412
          %s1417 = smul.addr %s1407, 2
          %s1418 = smul.addr %s1417, 128
          %s1419 = scalar_lea.hbm %s2, %s1418
          %s1420 = smul.u32 16, %s1410
          %s1421 = sshll.u32 %s1403, 4
          %s1422 = int_to_ptr.vmem [resolvable:$true] %s1421
          %s1423 = sshll.u32 %s1420, 4
          %1427 = dma.vmem_to_hbm [thread:$0]  (%p1416), %s1422, %s1423, %s1419, %s1400, 256, 256, 16
        $region24: #{tpu_custom_call.1} parent=11 // pred_fallthru
          _
      $region12: #{tpu_custom_call.1} parent=5 // pred_fallthru
        _
      %p1428 = scmp.le.s32.totalorder 1, %s15
      // Predicated region
      $region25: #{tpu_custom_call.1} parent=5 // pred_check
        %p1429 = pneg %p1428
      $region26: #{tpu_custom_call.1} parent=5 // pred_check_branch
        %1431 = sbr.rel (%p1429) target = $region28
      $region27: #{tpu_custom_call.1} parent=5 // pred_region
        %s1432 = ssub.s32 %s15, 1
        // Predicated region
        $region29: #{tpu_custom_call.1} parent=27 // pred_check
          %p1433 = pneg %p36
        $region30: #{tpu_custom_call.1} parent=27 // pred_check_branch
          %1435 = sbr.rel (%p1433) target = $region32
        $region31: #{tpu_custom_call.1} parent=27 // pred_region
          %s1436 = sand.u32 %s27, 1
          %s1437 = scalar_lea.sflag [#allocation7], %s1436
          %s1438 = sand.u32 %s27, 1
          %s1439 = smul.addr %s1438, 64
          %s1440 = scalar_lea.vmem [#allocation6], %s1439
          %1441 = dma.done %s1437, 1024
        $region32: #{tpu_custom_call.1} parent=27 // pred_fallthru
          _
      $region28: #{tpu_custom_call.1} parent=5 // pred_fallthru
        _
    $region6: #{tpu_custom_call.1} parent=1 // loop_footer
      %s19 = sadd.s32 1, %s15
    $region7: #{tpu_custom_call.1} parent=1 // loop_footer_branch
      %14 = sbr.rel target = $region3
    $region8: #{tpu_custom_call.1} parent=1 // loop_exit
      _
    %1442 = vsyncpa [#allocation7], 1
    %s1443 = scalar_lea.sflag [#allocation7], 1
    %1444 = vsyncpa %s1443, 1
  %1445 = vsyncmov [#allocation3]
  %s1446 = vpop.sfrf %1445
  %p1447 = scmp.eq.s32.totalorder %s1446, 0
  %p1448 = pneg %p1447
  %1450 = shalt.err (%p1448)
  %s1451 = scalar_lea.sflag [#allocation3], 1
  %1452 = vsyncmov %s1451
  %s1453 = vpop.sfrf %1452
  %p1454 = scmp.eq.s32.totalorder %s1453, 0
  %p1455 = pneg %p1454
  %1457 = shalt.err (%p1455)
  %s1458 = scalar_lea.sflag [#allocation3], 2
  %1459 = vsyncmov %s1458
  %s1460 = vpop.sfrf %1459
  %p1461 = scmp.eq.s32.totalorder %s1460, 0
  %p1462 = pneg %p1461
  %1464 = shalt.err (%p1462)
  %s1465 = scalar_lea.sflag [#allocation3], 3
  %1466 = vsyncmov %s1465
  %s1467 = vpop.sfrf %1466
  %p1468 = scmp.eq.s32.totalorder %s1467, 0
  %p1469 = pneg %p1468
  %1471 = shalt.err (%p1469)
  %s1472 = scalar_lea.sflag [#allocation3], 4
  %1473 = vsyncmov %s1472
  %s1474 = vpop.sfrf %1473
  %p1475 = scmp.eq.s32.totalorder %s1474, 0
  %p1476 = pneg %p1475
  %1478 = shalt.err (%p1476)
  %s1479 = scalar_lea.sflag [#allocation3], 5
  %1480 = vsyncmov %s1479
  %s1481 = vpop.sfrf %1480
  %p1482 = scmp.eq.s32.totalorder %s1481, 0
  %p1483 = pneg %p1482
  %1485 = shalt.err (%p1483)
  %s1486 = scalar_lea.sflag [#allocation3], 6
  %1487 = vsyncmov %s1486
  %s1488 = vpop.sfrf %1487
  %p1489 = scmp.eq.s32.totalorder %s1488, 0
  %p1490 = pneg %p1489
  %1492 = shalt.err (%p1490)
  %s1493 = scalar_lea.sflag [#allocation3], 7
  %1494 = vsyncmov %s1493
  %s1495 = vpop.sfrf %1494
  %p1496 = scmp.eq.s32.totalorder %s1495, 0
  %p1497 = pneg %p1496
  %1499 = shalt.err (%p1497)
  %s1500 = scalar_lea.sflag [#allocation3], 8
  %1501 = vsyncmov %s1500
  %s1502 = vpop.sfrf %1501
  %p1503 = scmp.eq.s32.totalorder %s1502, 0
  %p1504 = pneg %p1503
  %1506 = shalt.err (%p1504)
  %s1507 = scalar_lea.sflag [#allocation3], 9
  %1508 = vsyncmov %s1507
  %s1509 = vpop.sfrf %1508
  %p1510 = scmp.eq.s32.totalorder %s1509, 0
  %p1511 = pneg %p1510
  %1513 = shalt.err (%p1511)
  %s1514 = scalar_lea.sflag [#allocation3], 10
  %1515 = vsyncmov %s1514
  %s1516 = vpop.sfrf %1515
  %p1517 = scmp.eq.s32.totalorder %s1516, 0
  %p1518 = pneg %p1517
  %1520 = shalt.err (%p1518)
  %s1521 = scalar_lea.sflag [#allocation3], 11
  %1522 = vsyncmov %s1521
  %s1523 = vpop.sfrf %1522
  %p1524 = scmp.eq.s32.totalorder %s1523, 0
  %p1525 = pneg %p1524
  %1527 = shalt.err (%p1525)
  %s1528 = scalar_lea.sflag [#allocation3], 12
  %1529 = vsyncmov %s1528
  %s1530 = vpop.sfrf %1529
  %p1531 = scmp.eq.s32.totalorder %s1530, 0
  %p1532 = pneg %p1531
  %1534 = shalt.err (%p1532)
  %s1535 = scalar_lea.sflag [#allocation3], 13
  %1536 = vsyncmov %s1535
  %s1537 = vpop.sfrf %1536
  %p1538 = scmp.eq.s32.totalorder %s1537, 0
  %p1539 = pneg %p1538
  %1541 = shalt.err (%p1539)
  %s1542 = scalar_lea.sflag [#allocation3], 14
  %1543 = vsyncmov %s1542
  %s1544 = vpop.sfrf %1543
  %p1545 = scmp.eq.s32.totalorder %s1544, 0
  %p1546 = pneg %p1545
  %1548 = shalt.err (%p1546)
  %s1549 = scalar_lea.sflag [#allocation3], 15
  %1550 = vsyncmov %s1549
  %s1551 = vpop.sfrf %1550
  %p1552 = scmp.eq.s32.totalorder %s1551, 0
  %p1553 = pneg %p1552
  %1555 = shalt.err (%p1553)
  %s1556 = scalar_lea.sflag [#allocation3], 16
  %1557 = vsyncmov %s1556
  %s1558 = vpop.sfrf %1557
  %p1559 = scmp.eq.s32.totalorder %s1558, 0
  %p1560 = pneg %p1559
  %1562 = shalt.err (%p1560)
  %s1563 = scalar_lea.sflag [#allocation3], 17
  %1564 = vsyncmov %s1563
  %s1565 = vpop.sfrf %1564
  %p1566 = scmp.eq.s32.totalorder %s1565, 0
  %p1567 = pneg %p1566
  %1569 = shalt.err (%p1567)
  %s1570 = scalar_lea.sflag [#allocation3], 18
  %1571 = vsyncmov %s1570
  %s1572 = vpop.sfrf %1571
  %p1573 = scmp.eq.s32.totalorder %s1572, 0
  %p1574 = pneg %p1573
  %1576 = shalt.err (%p1574)
  %s1577 = scalar_lea.sflag [#allocation3], 19
  %1578 = vsyncmov %s1577
  %s1579 = vpop.sfrf %1578
  %p1580 = scmp.eq.s32.totalorder %s1579, 0
  %p1581 = pneg %p1580
  %1583 = shalt.err (%p1581)
  %s1584 = scalar_lea.sflag [#allocation3], 20
  %1585 = vsyncmov %s1584
  %s1586 = vpop.sfrf %1585
  %p1587 = scmp.eq.s32.totalorder %s1586, 0
  %p1588 = pneg %p1587
  %1590 = shalt.err (%p1588)
  %s1591 = scalar_lea.sflag [#allocation3], 21
  %1592 = vsyncmov %s1591
  %s1593 = vpop.sfrf %1592
  %p1594 = scmp.eq.s32.totalorder %s1593, 0
  %p1595 = pneg %p1594
  %1597 = shalt.err (%p1595)
  %s1598 = scalar_lea.sflag [#allocation3], 22
  %1599 = vsyncmov %s1598
  %s1600 = vpop.sfrf %1599
  %p1601 = scmp.eq.s32.totalorder %s1600, 0
  %p1602 = pneg %p1601
  %1604 = shalt.err (%p1602)
  %s1605 = scalar_lea.sflag [#allocation3], 23
  %1606 = vsyncmov %s1605
  %s1607 = vpop.sfrf %1606
  %p1608 = scmp.eq.s32.totalorder %s1607, 0
  %p1609 = pneg %p1608
  %1611 = shalt.err (%p1609)
  %s1612 = scalar_lea.sflag [#allocation3], 24
  %1613 = vsyncmov %s1612
  %s1614 = vpop.sfrf %1613
  %p1615 = scmp.eq.s32.totalorder %s1614, 0
  %p1616 = pneg %p1615
  %1618 = shalt.err (%p1616)
  %s1619 = scalar_lea.sflag [#allocation3], 25
  %1620 = vsyncmov %s1619
  %s1621 = vpop.sfrf %1620
  %p1622 = scmp.eq.s32.totalorder %s1621, 0
  %p1623 = pneg %p1622
  %1625 = shalt.err (%p1623)
  %s1626 = scalar_lea.sflag [#allocation3], 26
  %1627 = vsyncmov %s1626
  %s1628 = vpop.sfrf %1627
  %p1629 = scmp.eq.s32.totalorder %s1628, 0
  %p1630 = pneg %p1629
  %1632 = shalt.err (%p1630)
  %s1633 = scalar_lea.sflag [#allocation3], 27
  %1634 = vsyncmov %s1633
  %s1635 = vpop.sfrf %1634
  %p1636 = scmp.eq.s32.totalorder %s1635, 0
  %p1637 = pneg %p1636
  %1639 = shalt.err (%p1637)
  %s1640 = scalar_lea.sflag [#allocation3], 28
  %1641 = vsyncmov %s1640
  %s1642 = vpop.sfrf %1641
  %p1643 = scmp.eq.s32.totalorder %s1642, 0
  %p1644 = pneg %p1643
  %1646 = shalt.err (%p1644)
  %s1647 = scalar_lea.sflag [#allocation3], 29
  %1648 = vsyncmov %s1647
  %s1649 = vpop.sfrf %1648
  %p1650 = scmp.eq.s32.totalorder %s1649, 0
  %p1651 = pneg %p1650
  %1653 = shalt.err (%p1651)
  %s1654 = scalar_lea.sflag [#allocation3], 30
  %1655 = vsyncmov %s1654
  %s1656 = vpop.sfrf %1655
  %p1657 = scmp.eq.s32.totalorder %s1656, 0
  %p1658 = pneg %p1657
  %1660 = shalt.err (%p1658)
  %s1661 = scalar_lea.sflag [#allocation3], 31
  %1662 = vsyncmov %s1661
  %s1663 = vpop.sfrf %1662
  %p1664 = scmp.eq.s32.totalorder %s1663, 0
  %p1665 = pneg %p1664
  %1667 = shalt.err (%p1665)
  %s1668 = scalar_lea.sflag [#allocation3], 32
  %1669 = vsyncmov %s1668
  %s1670 = vpop.sfrf %1669
  %p1671 = scmp.eq.s32.totalorder %s1670, 0
  %p1672 = pneg %p1671
  %1674 = shalt.err (%p1672)
  %s1675 = scalar_lea.sflag [#allocation3], 33
  %1676 = vsyncmov %s1675
  %s1677 = vpop.sfrf %1676
  %p1678 = scmp.eq.s32.totalorder %s1677, 0
  %p1679 = pneg %p1678
  %1681 = shalt.err (%p1679)
  %s1682 = scalar_lea.sflag [#allocation3], 34
  %1683 = vsyncmov %s1682
  %s1684 = vpop.sfrf %1683
  %p1685 = scmp.eq.s32.totalorder %s1684, 0
  %p1686 = pneg %p1685
  %1688 = shalt.err (%p1686)
  %s1689 = scalar_lea.sflag [#allocation3], 35
  %1690 = vsyncmov %s1689
  %s1691 = vpop.sfrf %1690
  %p1692 = scmp.eq.s32.totalorder %s1691, 0
  %p1693 = pneg %p1692
  %1695 = shalt.err (%p1693)
  %s1696 = scalar_lea.sflag [#allocation3], 36
  %1697 = vsyncmov %s1696
  %s1698 = vpop.sfrf %1697
  %p1699 = scmp.eq.s32.totalorder %s1698, 0
  %p1700 = pneg %p1699
  %1702 = shalt.err (%p1700)
  %s1703 = scalar_lea.sflag [#allocation3], 37
  %1704 = vsyncmov %s1703
  %s1705 = vpop.sfrf %1704
  %p1706 = scmp.eq.s32.totalorder %s1705, 0
  %p1707 = pneg %p1706
  %1709 = shalt.err (%p1707)
  %s1710 = scalar_lea.sflag [#allocation3], 38
  %1711 = vsyncmov %s1710
  %s1712 = vpop.sfrf %1711
  %p1713 = scmp.eq.s32.totalorder %s1712, 0
  %p1714 = pneg %p1713
  %1716 = shalt.err (%p1714)
  %s1717 = scalar_lea.sflag [#allocation3], 39
  %1718 = vsyncmov %s1717
  %s1719 = vpop.sfrf %1718
  %p1720 = scmp.eq.s32.totalorder %s1719, 0
  %p1721 = pneg %p1720
  %1723 = shalt.err (%p1721)
  %s1724 = scalar_lea.sflag [#allocation3], 40
  %1725 = vsyncmov %s1724
  %s1726 = vpop.sfrf %1725
  %p1727 = scmp.eq.s32.totalorder %s1726, 0
  %p1728 = pneg %p1727
  %1730 = shalt.err (%p1728)
  %s1731 = scalar_lea.sflag [#allocation3], 41
  %1732 = vsyncmov %s1731
  %s1733 = vpop.sfrf %1732
  %p1734 = scmp.eq.s32.totalorder %s1733, 0
  %p1735 = pneg %p1734
  %1737 = shalt.err (%p1735)
  %s1738 = scalar_lea.sflag [#allocation3], 42
  %1739 = vsyncmov %s1738
  %s1740 = vpop.sfrf %1739
  %p1741 = scmp.eq.s32.totalorder %s1740, 0
  %p1742 = pneg %p1741
  %1744 = shalt.err (%p1742)
  %s1745 = scalar_lea.sflag [#allocation3], 43
  %1746 = vsyncmov %s1745
  %s1747 = vpop.sfrf %1746
  %p1748 = scmp.eq.s32.totalorder %s1747, 0
  %p1749 = pneg %p1748
  %1751 = shalt.err (%p1749)
  %s1752 = scalar_lea.sflag [#allocation3], 44
  %1753 = vsyncmov %s1752
  %s1754 = vpop.sfrf %1753
  %p1755 = scmp.eq.s32.totalorder %s1754, 0
  %p1756 = pneg %p1755
  %1758 = shalt.err (%p1756)
  %s1759 = scalar_lea.sflag [#allocation3], 45
  %1760 = vsyncmov %s1759
  %s1761 = vpop.sfrf %1760
  %p1762 = scmp.eq.s32.totalorder %s1761, 0
  %p1763 = pneg %p1762
  %1765 = shalt.err (%p1763)
  %s1766 = scalar_lea.sflag [#allocation3], 46
  %1767 = vsyncmov %s1766
  %s1768 = vpop.sfrf %1767
  %p1769 = scmp.eq.s32.totalorder %s1768, 0
  %p1770 = pneg %p1769
  %1772 = shalt.err (%p1770)
  %s1773 = scalar_lea.sflag [#allocation3], 47
  %1774 = vsyncmov %s1773
  %s1775 = vpop.sfrf %1774
  %p1776 = scmp.eq.s32.totalorder %s1775, 0
  %p1777 = pneg %p1776
  %1779 = shalt.err (%p1777)
  %s1780 = scalar_lea.sflag [#allocation3], 48
  %1781 = vsyncmov %s1780
  %s1782 = vpop.sfrf %1781
  %p1783 = scmp.eq.s32.totalorder %s1782, 0
  %p1784 = pneg %p1783
  %1786 = shalt.err (%p1784)
  %s1787 = scalar_lea.sflag [#allocation3], 49
  %1788 = vsyncmov %s1787
  %s1789 = vpop.sfrf %1788
  %p1790 = scmp.eq.s32.totalorder %s1789, 0
  %p1791 = pneg %p1790
  %1793 = shalt.err (%p1791)
  %s1794 = scalar_lea.sflag [#allocation3], 50
  %1795 = vsyncmov %s1794
  %s1796 = vpop.sfrf %1795
  %p1797 = scmp.eq.s32.totalorder %s1796, 0
  %p1798 = pneg %p1797
  %1800 = shalt.err (%p1798)
  %s1801 = scalar_lea.sflag [#allocation3], 51
  %1802 = vsyncmov %s1801
  %s1803 = vpop.sfrf %1802
  %p1804 = scmp.eq.s32.totalorder %s1803, 0
  %p1805 = pneg %p1804
  %1807 = shalt.err (%p1805)
  %s1808 = scalar_lea.sflag [#allocation3], 52
  %1809 = vsyncmov %s1808
  %s1810 = vpop.sfrf %1809
  %p1811 = scmp.eq.s32.totalorder %s1810, 0
  %p1812 = pneg %p1811
  %1814 = shalt.err (%p1812)
  %s1815 = scalar_lea.sflag [#allocation3], 53
  %1816 = vsyncmov %s1815
  %s1817 = vpop.sfrf %1816
  %p1818 = scmp.eq.s32.totalorder %s1817, 0
  %p1819 = pneg %p1818
  %1821 = shalt.err (%p1819)
  %s1822 = scalar_lea.sflag [#allocation3], 54
  %1823 = vsyncmov %s1822
  %s1824 = vpop.sfrf %1823
  %p1825 = scmp.eq.s32.totalorder %s1824, 0
  %p1826 = pneg %p1825
  %1828 = shalt.err (%p1826)
  %s1829 = scalar_lea.sflag [#allocation3], 55
  %1830 = vsyncmov %s1829
  %s1831 = vpop.sfrf %1830
  %p1832 = scmp.eq.s32.totalorder %s1831, 0
  %p1833 = pneg %p1832
  %1835 = shalt.err (%p1833)
  %s1836 = scalar_lea.sflag [#allocation3], 56
  %1837 = vsyncmov %s1836
  %s1838 = vpop.sfrf %1837
  %p1839 = scmp.eq.s32.totalorder %s1838, 0
  %p1840 = pneg %p1839
  %1842 = shalt.err (%p1840)
  %s1843 = scalar_lea.sflag [#allocation3], 57
  %1844 = vsyncmov %s1843
  %s1845 = vpop.sfrf %1844
  %p1846 = scmp.eq.s32.totalorder %s1845, 0
  %p1847 = pneg %p1846
  %1849 = shalt.err (%p1847)
  %s1850 = scalar_lea.sflag [#allocation3], 58
  %1851 = vsyncmov %s1850
  %s1852 = vpop.sfrf %1851
  %p1853 = scmp.eq.s32.totalorder %s1852, 0
  %p1854 = pneg %p1853
  %1856 = shalt.err (%p1854)
  %s1857 = scalar_lea.sflag [#allocation3], 59
  %1858 = vsyncmov %s1857
  %s1859 = vpop.sfrf %1858
  %p1860 = scmp.eq.s32.totalorder %s1859, 0
  %p1861 = pneg %p1860
  %1863 = shalt.err (%p1861)
  %s1864 = scalar_lea.sflag [#allocation3], 60
  %1865 = vsyncmov %s1864
  %s1866 = vpop.sfrf %1865
  %p1867 = scmp.eq.s32.totalorder %s1866, 0
  %p1868 = pneg %p1867
  %1870 = shalt.err (%p1868)
  %s1871 = scalar_lea.sflag [#allocation3], 61
  %1872 = vsyncmov %s1871
  %s1873 = vpop.sfrf %1872
  %p1874 = scmp.eq.s32.totalorder %s1873, 0
  %p1875 = pneg %p1874
  %1877 = shalt.err (%p1875)
  %s1878 = scalar_lea.sflag [#allocation3], 62
  %1879 = vsyncmov %s1878
  %s1880 = vpop.sfrf %1879
  %p1881 = scmp.eq.s32.totalorder %s1880, 0
  %p1882 = pneg %p1881
  %1884 = shalt.err (%p1882)
  %s1885 = scalar_lea.sflag [#allocation3], 63
  %1886 = vsyncmov %s1885
  %s1887 = vpop.sfrf %1886
  %p1888 = scmp.eq.s32.totalorder %s1887, 0
  %p1889 = pneg %p1888
  %1891 = shalt.err (%p1889)

</llo_original>
